<compile_context>
chip_gen: v7x
topology: tpu7x:2x2x1
jax: 0.10.0
libtpu: 0.0.40
codegen_flags: <defaults>
</compile_context>

<pallas_src>
import jax
import jax.numpy as jnp
from jax import lax
from jax.experimental import pallas as pl
from jax.experimental.pallas import tpu as pltpu

EPS = 1e-5
MAX_BLOCK_ROWS = 64                     # row-tile height cap (sweep per generation)
VMEM_LIMIT_BYTES = 48 * 1024 * 1024     # <= v7x 64 MiB; v5e/v6e may go higher
MXU_DTYPE = jnp.bfloat16                # MXU operand dtype (f32 accumulation)
STORE_DTYPE = jnp.bfloat16              # intermediate y1/y2 HBM storage dtype


def _pick_block_rows(H, W, cap=MAX_BLOCK_ROWS):
    """Largest BH <= cap with BH | H and BH*W a multiple of 128 (lane-dense
    blocks for the channel-major output).  Falls back to BH = H (block minors
    then equal the full dims, which is always legal).
    # TODO(synk): ragged H with no valid divisor would need a masked last tile.
    """
    best = H
    for bh in range(1, min(cap, H) + 1):
        if H % bh == 0 and (bh * W) % 128 == 0:
            best = bh
    return best


def _make_conv_kernel(BH, W, Cin, fuse_bn_relu, channel_major_out,
                      mxu_dtype, store_dtype):
    """conv3x3(pad=1) on one row tile of a pixel-major (pixels, Cin) feature map.

    Refs: main tile (1, BH*W, Cin), halo row above (1, W, Cin), halo row below
    (1, W, Cin), weights (3, 3*Cin, Cout) [or (3, Cout, 3*Cin) if channel-major
    output], optional BN scale/shift (1, Cin) applied to the *input* (pass 2
    fuses BN1+ReLU here), then the conv-output tile and the per-tile BN
    partial-sum block.
    """
    P = BH * W  # pixels per tile

    def kernel(*refs):
        if fuse_bn_relu:
            m_ref, t_ref, b_ref, w_ref, sc_ref, sh_ref, o_ref, st_ref = refs
        else:
            m_ref, t_ref, b_ref, w_ref, o_ref, st_ref = refs
        i = pl.program_id(1)
        nH = pl.num_programs(1)

        if fuse_bn_relu:
            sc, sh = sc_ref[...], sh_ref[...]          # (1, Cin) f32
            act = lambda v: jnp.maximum(
                v.astype(jnp.float32) * sc + sh, 0.0).astype(mxu_dtype)
        else:
            act = lambda v: v.astype(mxu_dtype)

        # Activate first, then zero-mask the halo rows at the image borders
        # (the conv pads the *activated* map with zeros).
        main = act(m_ref[0])                                     # (P, Cin)
        top = act(t_ref[0]) * (i > 0).astype(mxu_dtype)          # (W, Cin)
        bot = act(b_ref[0]) * (i < nH - 1).astype(mxu_dtype)     # (W, Cin)
        zpix = jnp.zeros((1, Cin), mxu_dtype)

        # One flat padded pixel buffer: rows [-1 .. BH] of the tile plus a spare
        # zero pixel at each end so every tap below is a static, in-bounds,
        # sublane-shift slice (no lane-crossing relayouts).
        pad = jnp.concatenate([zpix, top, main, bot, zpix], axis=0)  # ((BH+2)*W+2, Cin)

        # Masks that kill the width wrap-around of the dx = -1 / +1 taps.
        col = lax.broadcasted_iota(jnp.int32, (P, Cin), 0) % W
        not_first = (col != 0).astype(mxu_dtype)
        not_last = (col != W - 1).astype(mxu_dtype)

        def tap(dy_idx, dx):        # value of pixel (r + dy, c + dx) per output pixel
            start = dy_idx * W + dx + 1
            v = pad[start:start + P]
            if dx == -1:
                v = v * not_first
            elif dx == 1:
                v = v * not_last
            return v

        acc = None
        for d in range(3):          # one MXU dot per kernel row, K = 3*Cin
            cols = jnp.concatenate([tap(d, -1), tap(d, 0), tap(d, 1)], axis=1)
            if channel_major_out:
                # (Cout, 3*Cin) x (P, 3*Cin)^T -> (Cout, P): result is already
                # NCHW-major, no explicit transpose materialized.
                y = lax.dot_general(w_ref[d], cols, (((1,), (1,)), ((), ())),
                                    preferred_element_type=jnp.float32)
            else:
                y = jnp.dot(cols, w_ref[d],
                            preferred_element_type=jnp.float32)      # (P, Cout)
            acc = y if acc is None else acc + y

        o_ref[...] = acc.reshape(o_ref.shape).astype(store_dtype)

        # Per-(image, row-tile) BN partial sums from the f32 result (reduced in
        # the wrapper), so both grid axes stay 'parallel'.
        if channel_major_out:                                        # acc: (Cout, P)
            st_ref[0, 0, :, 0:1] = jnp.sum(acc, axis=1, keepdims=True)
            st_ref[0, 0, :, 1:2] = jnp.sum(acc * acc, axis=1, keepdims=True)
        else:                                                        # acc: (P, Cout)
            st_ref[0, 0, 0:1, :] = jnp.sum(acc, axis=0, keepdims=True)
            st_ref[0, 0, 1:2, :] = jnp.sum(acc * acc, axis=0, keepdims=True)

    return kernel


def _conv_bn_stats_pass(src, w_blk, sc=None, sh=None, *, N, H, W, Cin, Cout, BH,
                        channel_major_out):
    """One tiled conv3x3 pass over a pixel-major (N, H*W, Cin) feature map."""
    nH = H // BH
    P = BH * W
    fused = sc is not None
    kernel = _make_conv_kernel(BH, W, Cin, fused, channel_major_out,
                               MXU_DTYPE, STORE_DTYPE)

    full = lambda shape: pl.BlockSpec(shape, lambda n, i: (0,) * len(shape))
    in_specs = [
        pl.BlockSpec((1, P, Cin), lambda n, i: (n, i, 0)),                      # main tile
        pl.BlockSpec((1, W, Cin),                                               # 1-row halo above
                     lambda n, i: (n, jnp.maximum(i * BH - 1, 0), 0)),
        pl.BlockSpec((1, W, Cin),                                               # 1-row halo below
                     lambda n, i: (n, jnp.minimum((i + 1) * BH, H - 1), 0)),
        full(w_blk.shape),
    ]
    args = [src, src, src, w_blk]
    if fused:
        in_specs += [full(sc.shape), full(sh.shape)]
        args += [sc, sh]

    if channel_major_out:
        y_spec = pl.BlockSpec((1, Cout, P), lambda n, i: (n, 0, i))
        y_shape = jax.ShapeDtypeStruct((N, Cout, H * W), STORE_DTYPE)
        st_spec = pl.BlockSpec((1, 1, Cout, 2), lambda n, i: (n, i, 0, 0))
        st_shape = jax.ShapeDtypeStruct((N, nH, Cout, 2), jnp.float32)
    else:
        y_spec = pl.BlockSpec((1, P, Cout), lambda n, i: (n, i, 0))
        y_shape = jax.ShapeDtypeStruct((N, H * W, Cout), STORE_DTYPE)
        st_spec = pl.BlockSpec((1, 1, 2, Cout), lambda n, i: (n, i, 0, 0))
        st_shape = jax.ShapeDtypeStruct((N, nH, 2, Cout), jnp.float32)

    y, stats = pl.pallas_call(
        kernel,
        grid=(N, nH),
        in_specs=in_specs,
        out_specs=[y_spec, st_spec],
        out_shape=[y_shape, st_shape],
        compiler_params=pltpu.CompilerParams(
            dimension_semantics=("parallel", "parallel"),
            vmem_limit_bytes=VMEM_LIMIT_BYTES),
    )(*args)
    return y, stats


def _bn_affine(sums, gamma, beta, count):
    """Fold training-mode BN into a per-channel affine: y*scale + shift."""
    mean = sums[0] / count                       # (C,)
    var = sums[1] / count - mean * mean          # biased variance
    scale = gamma * lax.rsqrt(var + EPS)         # (1, C)
    shift = beta - mean * scale                  # (1, C)
    return scale.astype(jnp.float32), shift.astype(jnp.float32)


def _bn_relu_nchw_kernel(y_ref, sc_ref, sh_ref, o_ref):
    # y_ref: (1, Cout, BH*W) bf16, sc/sh: (Cout, 1) f32 broadcast along lanes.
    o_ref[...] = jnp.maximum(
        y_ref[...].astype(jnp.float32) * sc_ref[...] + sh_ref[...], 0.0)


@jax.jit
def double_conv(x_nchw, params):
    """x_nchw: (N, Cin, H, W) float32, exactly like the PyTorch module input."""
    w1, b1, g1, bt1, w2, b2, g2, bt2 = params
    del b1, b2   # conv biases are cancelled exactly by training-mode BN mean subtraction
    N, Cin, H, W = x_nchw.shape
    Cout = w1.shape[-1]
    BH = _pick_block_rows(H, W)
    nH = H // BH
    count = N * H * W

    # Input layout: NCHW -> pixel-major (N, H*W, Cin).  This transpose (of the
    # smallest tensor) is the only XLA-side data movement left; bf16 halves the
    # pass-1 input DMA.
    x_pix = jnp.transpose(x_nchw, (0, 2, 3, 1)).reshape(N, H * W, Cin).astype(MXU_DTYPE)

    # Weights: (9, Cin, Cout) tap-major -> per-dy (3*Cin, Cout) blocks.  The
    # second conv's weights are pre-transposed so its MXU output comes out
    # channel-major (already NCHW-ordered pixels).
    w1_blk = w1.reshape(3, 3 * Cin, Cout).astype(MXU_DTYPE)
    w2_blk = jnp.transpose(w2.reshape(3, 3 * Cout, Cout), (0, 2, 1)).astype(MXU_DTYPE)

    # pass 1: conv1 + per-tile BN1 partial sums
    y1, st1 = _conv_bn_stats_pass(x_pix, w1_blk, N=N, H=H, W=W, Cin=Cin,
                                  Cout=Cout, BH=BH, channel_major_out=False)
    sc1, sh1 = _bn_affine(jnp.sum(st1, axis=(0, 1)), g1, bt1, count)

    # pass 2: (BN1 + ReLU fused on load) -> conv2 (channel-major) + BN2 partials
    y2, st2 = _conv_bn_stats_pass(y1, w2_blk, sc1, sh1, N=N, H=H, W=W, Cin=Cout,
                                  Cout=Cout, BH=BH, channel_major_out=True)
    sc2, sh2 = _bn_affine(jnp.sum(st2, axis=(0, 1)).T, g2, bt2, count)

    # pass 3: BN2 + ReLU, elementwise on lane-dense (1, Cout, BH*W) tiles that
    # are already NCHW-ordered -> no XLA transpose afterwards.
    out = pl.pallas_call(
        _bn_relu_nchw_kernel,
        grid=(N, nH),
        in_specs=[
            pl.BlockSpec((1, Cout, BH * W), lambda n, i: (n, 0, i)),
            pl.BlockSpec((Cout, 1), lambda n, i: (0, 0)),
            pl.BlockSpec((Cout, 1), lambda n, i: (0, 0)),
        ],
        out_specs=pl.BlockSpec((1, Cout, BH * W), lambda n, i: (n, 0, i)),
        out_shape=jax.ShapeDtypeStruct((N, Cout, H * W), jnp.float32),
        compiler_params=pltpu.CompilerParams(
            dimension_semantics=("parallel", "parallel"),
            vmem_limit_bytes=VMEM_LIMIT_BYTES),
    )(y2, sc2.reshape(Cout, 1), sh2.reshape(Cout, 1))

    return out.reshape(N, Cout, H, W)   # free reshape: memory is already NCHW-ordered


def reference(x_nchw, params):
    """Pure-JAX reference (conv3x3 pad=1 + bias -> training-mode BN -> ReLU, x2)."""
    w1, b1, g1, bt1, w2, b2, g2, bt2 = params

    def block(x, w, b, g, bt):
        cin, cout = w.shape[1], w.shape[2]
        w_hwio = w.reshape(3, 3, cin, cout)
        y = lax.conv_general_dilated(
            x, w_hwio, window_strides=(1, 1), padding=((1, 1), (1, 1)),
            dimension_numbers=("NHWC", "HWIO", "NHWC"),
            precision=lax.Precision.HIGHEST) + b.reshape(1, 1, 1, cout)
        mean = jnp.mean(y, axis=(0, 1, 2), keepdims=True)
        var = jnp.mean((y - mean) ** 2, axis=(0, 1, 2), keepdims=True)
        yn = (y - mean) * lax.rsqrt(var + EPS)
        return jnp.maximum(yn * g.reshape(1, 1, 1, cout) + bt.reshape(1, 1, 1, cout), 0.0)

    x = jnp.transpose(x_nchw, (0, 2, 3, 1))
    y = block(block(x, w1, b1, g1, bt1), w2, b2, g2, bt2)
    return jnp.transpose(y, (0, 3, 1, 2))


if __name__ == "__main__":
    N, Cin, Cout, H, W = 2, 4, 8, 16, 16

    key = jax.random.PRNGKey(0)
    ks = jax.random.split(key, 9)
    x = jax.random.normal(ks[0], (N, Cin, H, W), jnp.float32)

    # Deterministic synthetic parameters (shapes implied by DoubleConv(Cin, Cout)).
    w1 = 0.2 * jax.random.normal(ks[1], (9, Cin, Cout), jnp.float32)    # Conv2d(Cin,Cout,3)
    b1 = 0.1 * jax.random.normal(ks[2], (1, Cout), jnp.float32)
    g1 = 1.0 + 0.1 * jax.random.normal(ks[3], (1, Cout), jnp.float32)   # BN gamma
    bt1 = 0.1 * jax.random.normal(ks[4], (1, Cout), jnp.float32)        # BN beta
    w2 = 0.2 * jax.random.normal(ks[5], (9, Cout, Cout), jnp.float32)   # Conv2d(Cout,Cout,3)
    b2 = 0.1 * jax.random.normal(ks[6], (1, Cout), jnp.float32)
    g2 = 1.0 + 0.1 * jax.random.normal(ks[7], (1, Cout), jnp.float32)
    bt2 = 0.1 * jax.random.normal(ks[8], (1, Cout), jnp.float32)
    params = (w1, b1, g1, bt1, w2, b2, g2, bt2)

    out = jax.block_until_ready(double_conv(x, params))
    ref = jax.block_until_ready(reference(x, params))

    assert out.shape == (N, Cout, H, W), out.shape
    max_err = float(jnp.max(jnp.abs(out - ref)))
    mean_err = float(jnp.mean(jnp.abs(out - ref)))
    # bf16 MXU operands + bf16 intermediate storage (per review) vs. an f32
    # HIGHEST-precision reference -> tolerance retuned for two chained bf16 convs
    # of O(1)-normalized outputs.
    assert max_err < 5e-2 and mean_err < 1e-2, (max_err, mean_err)

    print("KERNEL_OK")
</pallas_src>

<mosaic_0001>
module attributes {stable_mosaic.version = 11 : i64} {
  func.func @kernel(%arg0: i32, %arg1: i32, %arg2: memref<1x256x4xbf16, #tpu.memory_space<vmem>>, %arg3: memref<1x16x4xbf16, #tpu.memory_space<vmem>>, %arg4: memref<1x16x4xbf16, #tpu.memory_space<vmem>>, %arg5: memref<3x12x8xbf16, #tpu.memory_space<vmem>>, %arg6: memref<1x256x8xbf16, #tpu.memory_space<vmem>>, %arg7: memref<1x1x2x8xf32, #tpu.memory_space<vmem>>) attributes {dimension_semantics = [#tpu.dimension_semantics<parallel>, #tpu.dimension_semantics<parallel>], iteration_bounds = array<i64: 2, 1>, scalar_prefetch = 0 : i64, scratch_operands = 0 : i64, tpu.core_type = #tpu.core_type<tc>, window_params = [{transform_indices = @transform_0, window_bounds = array<i64: 1, 256, 4>}, {transform_indices = @transform_1, window_bounds = array<i64: 1, 16, 4>}, {transform_indices = @transform_2, window_bounds = array<i64: 1, 16, 4>}, {pipeline_mode = #tpu.pipeline_mode<synchronous>, transform_indices = @transform_3, window_bounds = array<i64: 3, 12, 8>}, {transform_indices = @transform_4, window_bounds = array<i64: 1, 256, 8>}, {transform_indices = @transform_5, window_bounds = array<i64: 1, 1, 2, 8>}]} {
    %c0 = arith.constant 0 : index
    %c0_0 = arith.constant 0 : index
    %c0_1 = arith.constant 0 : index
    %0 = vector.load %arg2[%c0, %c0_0, %c0_1] : memref<1x256x4xbf16, #tpu.memory_space<vmem>>, vector<1x256x4xbf16>
    %1 = vector.shape_cast %0 : vector<1x256x4xbf16> to vector<256x4xbf16>
    %c0_2 = arith.constant 0 : index
    %c0_3 = arith.constant 0 : index
    %c0_4 = arith.constant 0 : index
    %2 = vector.load %arg3[%c0_2, %c0_3, %c0_4] : memref<1x16x4xbf16, #tpu.memory_space<vmem>>, vector<1x16x4xbf16>
    %3 = vector.shape_cast %2 : vector<1x16x4xbf16> to vector<16x4xbf16>
    %c0_i32 = arith.constant 0 : i32
    %4 = arith.cmpi sgt, %arg1, %c0_i32 : i32
    %5 = arith.extui %4 : i1 to i32
    %6 = arith.sitofp %5 : i32 to f32
    %7 = arith.truncf %6 : f32 to bf16
    %8 = vector.broadcast %7 : bf16 to vector<16x4xbf16>
    %9 = arith.mulf %3, %8 : vector<16x4xbf16>
    %c0_5 = arith.constant 0 : index
    %c0_6 = arith.constant 0 : index
    %c0_7 = arith.constant 0 : index
    %10 = vector.load %arg4[%c0_5, %c0_6, %c0_7] : memref<1x16x4xbf16, #tpu.memory_space<vmem>>, vector<1x16x4xbf16>
    %11 = vector.shape_cast %10 : vector<1x16x4xbf16> to vector<16x4xbf16>
    %c0_i32_8 = arith.constant 0 : i32
    %12 = arith.cmpi slt, %arg1, %c0_i32_8 : i32
    %13 = arith.extui %12 : i1 to i32
    %14 = arith.sitofp %13 : i32 to f32
    %15 = arith.truncf %14 : f32 to bf16
    %16 = vector.broadcast %15 : bf16 to vector<16x4xbf16>
    %17 = arith.mulf %11, %16 : vector<16x4xbf16>
    %cst = arith.constant 0.000000e+00 : bf16
    %18 = vector.broadcast %cst : bf16 to vector<1x4xbf16>
    %19 = tpu.concatenate %18, %9, %1, %17, %18 in 0 : vector<1x4xbf16>, vector<16x4xbf16>, vector<256x4xbf16>, vector<16x4xbf16>, vector<1x4xbf16> -> vector<290x4xbf16>
    %20 = tpu.iota {dimensions = array<i32: 0>} : vector<256x4xi32>
    %c16_i32 = arith.constant 16 : i32
    %c0_i32_9 = arith.constant 0 : i32
    %21 = arith.cmpi eq, %c16_i32, %c0_i32_9 : i32
    %c1_i32 = arith.constant 1 : i32
    %22 = arith.select %21, %c1_i32, %c16_i32 : i32
    %23 = vector.broadcast %22 : i32 to vector<256x4xi32>
    %24 = arith.remsi %20, %23 : vector<256x4xi32>
    %c0_i32_10 = arith.constant 0 : i32
    %25 = vector.broadcast %c0_i32_10 : i32 to vector<256x4xi32>
    %26 = arith.cmpi ne, %24, %25 : vector<256x4xi32>
    %c0_i32_11 = arith.constant 0 : i32
    %27 = vector.broadcast %c0_i32_11 : i32 to vector<256x4xi32>
    %28 = arith.cmpi slt, %24, %27 : vector<256x4xi32>
    %c0_i32_12 = arith.constant 0 : i32
    %29 = arith.cmpi slt, %22, %c0_i32_12 : i32
    %30 = vector.broadcast %29 : i1 to vector<256x4xi1>
    %31 = vector.broadcast %30 : vector<256x4xi1> to vector<256x4xi1>
    %32 = arith.xori %28, %31 : vector<256x4xi1>
    %33 = arith.andi %32, %26 : vector<256x4xi1>
    %34 = vector.broadcast %22 : i32 to vector<256x4xi32>
    %35 = arith.addi %24, %34 : vector<256x4xi32>
    %36 = arith.select %33, %35, %24 : vector<256x4xi1>, vector<256x4xi32>
    %c0_i32_13 = arith.constant 0 : i32
    %37 = vector.broadcast %c0_i32_13 : i32 to vector<256x4xi32>
    %38 = arith.cmpi ne, %36, %37 : vector<256x4xi32>
    %39 = arith.extui %38 : vector<256x4xi1> to vector<256x4xi32>
    %40 = arith.sitofp %39 : vector<256x4xi32> to vector<256x4xf32>
    %41 = arith.truncf %40 : vector<256x4xf32> to vector<256x4xbf16>
    %c15_i32 = arith.constant 15 : i32
    %42 = vector.broadcast %c15_i32 : i32 to vector<256x4xi32>
    %43 = arith.cmpi ne, %36, %42 : vector<256x4xi32>
    %44 = arith.extui %43 : vector<256x4xi1> to vector<256x4xi32>
    %45 = arith.sitofp %44 : vector<256x4xi32> to vector<256x4xf32>
    %46 = arith.truncf %45 : vector<256x4xf32> to vector<256x4xbf16>
    %47 = vector.extract_strided_slice %19 {offsets = [0, 0], sizes = [256, 4], strides = [1, 1]} : vector<290x4xbf16> to vector<256x4xbf16>
    %48 = arith.mulf %47, %41 : vector<256x4xbf16>
    %49 = vector.extract_strided_slice %19 {offsets = [1, 0], sizes = [256, 4], strides = [1, 1]} : vector<290x4xbf16> to vector<256x4xbf16>
    %50 = vector.extract_strided_slice %19 {offsets = [2, 0], sizes = [256, 4], strides = [1, 1]} : vector<290x4xbf16> to vector<256x4xbf16>
    %51 = arith.mulf %50, %46 : vector<256x4xbf16>
    %52 = tpu.concatenate %48, %49, %51 in 1 : vector<256x4xbf16>, vector<256x4xbf16>, vector<256x4xbf16> -> vector<256x12xbf16>
    %c0_14 = arith.constant 0 : index
    %c0_15 = arith.constant 0 : index
    %c0_16 = arith.constant 0 : index
    %53 = vector.load %arg5[%c0_14, %c0_15, %c0_16] : memref<3x12x8xbf16, #tpu.memory_space<vmem>>, vector<1x12x8xbf16>
    %54 = vector.shape_cast %53 : vector<1x12x8xbf16> to vector<12x8xbf16>
    %cst_17 = arith.constant dense<0.000000e+00> : vector<256x8xf32>
    %55 = tpu.matmul %52, %54, %cst_17 {dimension_numbers = #tpu.dot_dimension_numbers<[1], [0], [0], [1], [0, 0, 1, 1], [], []>} : vector<256x12xbf16>, vector<12x8xbf16>, vector<256x8xf32> -> vector<256x8xf32>
    %56 = vector.extract_strided_slice %19 {offsets = [16, 0], sizes = [256, 4], strides = [1, 1]} : vector<290x4xbf16> to vector<256x4xbf16>
    %57 = arith.mulf %56, %41 : vector<256x4xbf16>
    %58 = vector.extract_strided_slice %19 {offsets = [17, 0], sizes = [256, 4], strides = [1, 1]} : vector<290x4xbf16> to vector<256x4xbf16>
    %59 = vector.extract_strided_slice %19 {offsets = [18, 0], sizes = [256, 4], strides = [1, 1]} : vector<290x4xbf16> to vector<256x4xbf16>
    %60 = arith.mulf %59, %46 : vector<256x4xbf16>
    %61 = tpu.concatenate %57, %58, %60 in 1 : vector<256x4xbf16>, vector<256x4xbf16>, vector<256x4xbf16> -> vector<256x12xbf16>
    %c1 = arith.constant 1 : index
    %c0_18 = arith.constant 0 : index
    %c0_19 = arith.constant 0 : index
    %62 = vector.load %arg5[%c1, %c0_18, %c0_19] : memref<3x12x8xbf16, #tpu.memory_space<vmem>>, vector<1x12x8xbf16>
    %63 = vector.shape_cast %62 : vector<1x12x8xbf16> to vector<12x8xbf16>
    %cst_20 = arith.constant dense<0.000000e+00> : vector<256x8xf32>
    %64 = tpu.matmul %61, %63, %cst_20 {dimension_numbers = #tpu.dot_dimension_numbers<[1], [0], [0], [1], [0, 0, 1, 1], [], []>} : vector<256x12xbf16>, vector<12x8xbf16>, vector<256x8xf32> -> vector<256x8xf32>
    %65 = arith.addf %55, %64 : vector<256x8xf32>
    %66 = vector.extract_strided_slice %19 {offsets = [32, 0], sizes = [256, 4], strides = [1, 1]} : vector<290x4xbf16> to vector<256x4xbf16>
    %67 = arith.mulf %66, %41 : vector<256x4xbf16>
    %68 = vector.extract_strided_slice %19 {offsets = [33, 0], sizes = [256, 4], strides = [1, 1]} : vector<290x4xbf16> to vector<256x4xbf16>
    %69 = vector.extract_strided_slice %19 {offsets = [34, 0], sizes = [256, 4], strides = [1, 1]} : vector<290x4xbf16> to vector<256x4xbf16>
    %70 = arith.mulf %69, %46 : vector<256x4xbf16>
    %71 = tpu.concatenate %67, %68, %70 in 1 : vector<256x4xbf16>, vector<256x4xbf16>, vector<256x4xbf16> -> vector<256x12xbf16>
    %c2 = arith.constant 2 : index
    %c0_21 = arith.constant 0 : index
    %c0_22 = arith.constant 0 : index
    %72 = vector.load %arg5[%c2, %c0_21, %c0_22] : memref<3x12x8xbf16, #tpu.memory_space<vmem>>, vector<1x12x8xbf16>
    %73 = vector.shape_cast %72 : vector<1x12x8xbf16> to vector<12x8xbf16>
    %cst_23 = arith.constant dense<0.000000e+00> : vector<256x8xf32>
    %74 = tpu.matmul %71, %73, %cst_23 {dimension_numbers = #tpu.dot_dimension_numbers<[1], [0], [0], [1], [0, 0, 1, 1], [], []>} : vector<256x12xbf16>, vector<12x8xbf16>, vector<256x8xf32> -> vector<256x8xf32>
    %75 = arith.addf %65, %74 : vector<256x8xf32>
    %76 = vector.shape_cast %75 : vector<256x8xf32> to vector<1x256x8xf32>
    %77 = arith.truncf %76 : vector<1x256x8xf32> to vector<1x256x8xbf16>
    %c0_24 = arith.constant 0 : index
    %c0_25 = arith.constant 0 : index
    %c0_26 = arith.constant 0 : index
    %78 = vector.load %arg6[%c0_24, %c0_25, %c0_26] : memref<1x256x8xbf16, #tpu.memory_space<vmem>>, vector<1x256x8xbf16>
    tpu.vector_store %arg6[%c0_24, %c0_25, %c0_26], %77 {strides = array<i32>} : memref<1x256x8xbf16, #tpu.memory_space<vmem>>, vector<1x256x8xbf16>,
    %cst_27 = arith.constant dense<0.000000e+00> : vector<8xf32>
    %79 = vector.multi_reduction <add>, %75, %cst_27 [0] : vector<256x8xf32> to vector<8xf32>
    %80 = vector.shape_cast %79 : vector<8xf32> to vector<1x8xf32>
    %c0_28 = arith.constant 0 : index
    %c0_29 = arith.constant 0 : index
    %c0_30 = arith.constant 0 : index
    %c0_31 = arith.constant 0 : index
    %81 = vector.load %arg7[%c0_28, %c0_29, %c0_30, %c0_31] : memref<1x1x2x8xf32, #tpu.memory_space<vmem>>, vector<1x1x1x8xf32>
    %82 = vector.shape_cast %81 : vector<1x1x1x8xf32> to vector<1x8xf32>
    %83 = vector.shape_cast %80 : vector<1x8xf32> to vector<1x1x1x8xf32>
    tpu.vector_store %arg7[%c0_28, %c0_29, %c0_30, %c0_31], %83 {strides = array<i32>} : memref<1x1x2x8xf32, #tpu.memory_space<vmem>>, vector<1x1x1x8xf32>,
    %84 = arith.mulf %75, %75 : vector<256x8xf32>
    %cst_32 = arith.constant dense<0.000000e+00> : vector<8xf32>
    %85 = vector.multi_reduction <add>, %84, %cst_32 [0] : vector<256x8xf32> to vector<8xf32>
    %86 = vector.shape_cast %85 : vector<8xf32> to vector<1x8xf32>
    %c0_33 = arith.constant 0 : index
    %c0_34 = arith.constant 0 : index
    %c1_35 = arith.constant 1 : index
    %c0_36 = arith.constant 0 : index
    %87 = vector.load %arg7[%c0_33, %c0_34, %c1_35, %c0_36] : memref<1x1x2x8xf32, #tpu.memory_space<vmem>>, vector<1x1x1x8xf32>
    %88 = vector.shape_cast %87 : vector<1x1x1x8xf32> to vector<1x8xf32>
    %89 = vector.shape_cast %86 : vector<1x8xf32> to vector<1x1x1x8xf32>
    tpu.vector_store %arg7[%c0_33, %c0_34, %c1_35, %c0_36], %89 {strides = array<i32>} : memref<1x1x2x8xf32, #tpu.memory_space<vmem>>, vector<1x1x1x8xf32>,
    return
  }
  func.func @transform_0(%arg0: i32, %arg1: i32) -> (i32, i32, i32) {
    %c0_i32 = arith.constant 0 : i32
    %c0_i32_0 = arith.constant 0 : i32
    return %arg0, %arg1, %c0_i32 : i32, i32, i32
  }
  func.func @transform_1(%arg0: i32, %arg1: i32) -> (i32, i32, i32) {
    %c16_i32 = arith.constant 16 : i32
    %0 = arith.muli %arg1, %c16_i32 : i32
    %c1_i32 = arith.constant 1 : i32
    %1 = arith.subi %0, %c1_i32 : i32
    %c0_i32 = arith.constant 0 : i32
    %2 = arith.maxsi %1, %c0_i32 : i32
    %c0_i32_0 = arith.constant 0 : i32
    %c0_i32_1 = arith.constant 0 : i32
    return %arg0, %2, %c0_i32_0 : i32, i32, i32
  }
  func.func @transform_2(%arg0: i32, %arg1: i32) -> (i32, i32, i32) {
    %c1_i32 = arith.constant 1 : i32
    %0 = arith.addi %arg1, %c1_i32 : i32
    %c16_i32 = arith.constant 16 : i32
    %1 = arith.muli %0, %c16_i32 : i32
    %c15_i32 = arith.constant 15 : i32
    %2 = arith.minsi %1, %c15_i32 : i32
    %c0_i32 = arith.constant 0 : i32
    %c0_i32_0 = arith.constant 0 : i32
    return %arg0, %2, %c0_i32 : i32, i32, i32
  }
  func.func @transform_3(%arg0: i32, %arg1: i32) -> (i32, i32, i32) {
    %c0_i32 = arith.constant 0 : i32
    %c0_i32_0 = arith.constant 0 : i32
    %c0_i32_1 = arith.constant 0 : i32
    %c0_i32_2 = arith.constant 0 : i32
    return %c0_i32, %c0_i32_0, %c0_i32_1 : i32, i32, i32
  }
  func.func @transform_4(%arg0: i32, %arg1: i32) -> (i32, i32, i32) {
    %c0_i32 = arith.constant 0 : i32
    %c0_i32_0 = arith.constant 0 : i32
    return %arg0, %arg1, %c0_i32 : i32, i32, i32
  }
  func.func @transform_5(%arg0: i32, %arg1: i32) -> (i32, i32, i32, i32) {
    %c0_i32 = arith.constant 0 : i32
    %c0_i32_0 = arith.constant 0 : i32
    %c0_i32_1 = arith.constant 0 : i32
    return %arg0, %arg1, %c0_i32, %c0_i32_0 : i32, i32, i32, i32
  }
}

module attributes {stable_mosaic.version = 11 : i64} {
  func.func @kernel(%arg0: i32, %arg1: i32, %arg2: memref<1x256x8xbf16, #tpu.memory_space<vmem>>, %arg3: memref<1x16x8xbf16, #tpu.memory_space<vmem>>, %arg4: memref<1x16x8xbf16, #tpu.memory_space<vmem>>, %arg5: memref<3x8x24xbf16, #tpu.memory_space<vmem>>, %arg6: memref<1x8xf32, #tpu.memory_space<vmem>>, %arg7: memref<1x8xf32, #tpu.memory_space<vmem>>, %arg8: memref<1x8x256xbf16, #tpu.memory_space<vmem>>, %arg9: memref<1x1x8x2xf32, #tpu.memory_space<vmem>>) attributes {dimension_semantics = [#tpu.dimension_semantics<parallel>, #tpu.dimension_semantics<parallel>], iteration_bounds = array<i64: 2, 1>, scalar_prefetch = 0 : i64, scratch_operands = 0 : i64, tpu.core_type = #tpu.core_type<tc>, window_params = [{transform_indices = @transform_0, window_bounds = array<i64: 1, 256, 8>}, {transform_indices = @transform_1, window_bounds = array<i64: 1, 16, 8>}, {transform_indices = @transform_2, window_bounds = array<i64: 1, 16, 8>}, {pipeline_mode = #tpu.pipeline_mode<synchronous>, transform_indices = @transform_3, window_bounds = array<i64: 3, 8, 24>}, {pipeline_mode = #tpu.pipeline_mode<synchronous>, transform_indices = @transform_4, window_bounds = array<i64: 1, 8>}, {pipeline_mode = #tpu.pipeline_mode<synchronous>, transform_indices = @transform_5, window_bounds = array<i64: 1, 8>}, {transform_indices = @transform_6, window_bounds = array<i64: 1, 8, 256>}, {transform_indices = @transform_7, window_bounds = array<i64: 1, 1, 8, 2>}]} {
    %c0 = arith.constant 0 : index
    %c0_0 = arith.constant 0 : index
    %0 = vector.load %arg6[%c0, %c0_0] : memref<1x8xf32, #tpu.memory_space<vmem>>, vector<1x8xf32>
    %c0_1 = arith.constant 0 : index
    %c0_2 = arith.constant 0 : index
    %1 = vector.load %arg7[%c0_1, %c0_2] : memref<1x8xf32, #tpu.memory_space<vmem>>, vector<1x8xf32>
    %c0_3 = arith.constant 0 : index
    %c0_4 = arith.constant 0 : index
    %c0_5 = arith.constant 0 : index
    %2 = vector.load %arg2[%c0_3, %c0_4, %c0_5] : memref<1x256x8xbf16, #tpu.memory_space<vmem>>, vector<1x256x8xbf16>
    %3 = vector.shape_cast %2 : vector<1x256x8xbf16> to vector<256x8xbf16>
    %4 = arith.extf %3 : vector<256x8xbf16> to vector<256x8xf32>
    %5 = vector.broadcast %0 : vector<1x8xf32> to vector<256x8xf32>
    %6 = arith.mulf %4, %5 : vector<256x8xf32>
    %7 = vector.broadcast %1 : vector<1x8xf32> to vector<256x8xf32>
    %8 = arith.addf %6, %7 : vector<256x8xf32>
    %cst = arith.constant 0.000000e+00 : f32
    %9 = vector.broadcast %cst : f32 to vector<256x8xf32>
    %10 = arith.maximumf %8, %9 : vector<256x8xf32>
    %11 = arith.truncf %10 : vector<256x8xf32> to vector<256x8xbf16>
    %c0_6 = arith.constant 0 : index
    %c0_7 = arith.constant 0 : index
    %c0_8 = arith.constant 0 : index
    %12 = vector.load %arg3[%c0_6, %c0_7, %c0_8] : memref<1x16x8xbf16, #tpu.memory_space<vmem>>, vector<1x16x8xbf16>
    %13 = vector.shape_cast %12 : vector<1x16x8xbf16> to vector<16x8xbf16>
    %14 = arith.extf %13 : vector<16x8xbf16> to vector<16x8xf32>
    %15 = vector.broadcast %0 : vector<1x8xf32> to vector<16x8xf32>
    %16 = arith.mulf %14, %15 : vector<16x8xf32>
    %17 = vector.broadcast %1 : vector<1x8xf32> to vector<16x8xf32>
    %18 = arith.addf %16, %17 : vector<16x8xf32>
    %cst_9 = arith.constant 0.000000e+00 : f32
    %19 = vector.broadcast %cst_9 : f32 to vector<16x8xf32>
    %20 = arith.maximumf %18, %19 : vector<16x8xf32>
    %21 = arith.truncf %20 : vector<16x8xf32> to vector<16x8xbf16>
    %c0_i32 = arith.constant 0 : i32
    %22 = arith.cmpi sgt, %arg1, %c0_i32 : i32
    %23 = arith.extui %22 : i1 to i32
    %24 = arith.sitofp %23 : i32 to f32
    %25 = arith.truncf %24 : f32 to bf16
    %26 = vector.broadcast %25 : bf16 to vector<16x8xbf16>
    %27 = arith.mulf %21, %26 : vector<16x8xbf16>
    %c0_10 = arith.constant 0 : index
    %c0_11 = arith.constant 0 : index
    %c0_12 = arith.constant 0 : index
    %28 = vector.load %arg4[%c0_10, %c0_11, %c0_12] : memref<1x16x8xbf16, #tpu.memory_space<vmem>>, vector<1x16x8xbf16>
    %29 = vector.shape_cast %28 : vector<1x16x8xbf16> to vector<16x8xbf16>
    %30 = arith.extf %29 : vector<16x8xbf16> to vector<16x8xf32>
    %31 = vector.broadcast %0 : vector<1x8xf32> to vector<16x8xf32>
    %32 = arith.mulf %30, %31 : vector<16x8xf32>
    %33 = vector.broadcast %1 : vector<1x8xf32> to vector<16x8xf32>
    %34 = arith.addf %32, %33 : vector<16x8xf32>
    %cst_13 = arith.constant 0.000000e+00 : f32
    %35 = vector.broadcast %cst_13 : f32 to vector<16x8xf32>
    %36 = arith.maximumf %34, %35 : vector<16x8xf32>
    %37 = arith.truncf %36 : vector<16x8xf32> to vector<16x8xbf16>
    %c0_i32_14 = arith.constant 0 : i32
    %38 = arith.cmpi slt, %arg1, %c0_i32_14 : i32
    %39 = arith.extui %38 : i1 to i32
    %40 = arith.sitofp %39 : i32 to f32
    %41 = arith.truncf %40 : f32 to bf16
    %42 = vector.broadcast %41 : bf16 to vector<16x8xbf16>
    %43 = arith.mulf %37, %42 : vector<16x8xbf16>
    %cst_15 = arith.constant 0.000000e+00 : bf16
    %44 = vector.broadcast %cst_15 : bf16 to vector<1x8xbf16>
    %45 = tpu.concatenate %44, %27, %11, %43, %44 in 0 : vector<1x8xbf16>, vector<16x8xbf16>, vector<256x8xbf16>, vector<16x8xbf16>, vector<1x8xbf16> -> vector<290x8xbf16>
    %46 = tpu.iota {dimensions = array<i32: 0>} : vector<256x8xi32>
    %c16_i32 = arith.constant 16 : i32
    %c0_i32_16 = arith.constant 0 : i32
    %47 = arith.cmpi eq, %c16_i32, %c0_i32_16 : i32
    %c1_i32 = arith.constant 1 : i32
    %48 = arith.select %47, %c1_i32, %c16_i32 : i32
    %49 = vector.broadcast %48 : i32 to vector<256x8xi32>
    %50 = arith.remsi %46, %49 : vector<256x8xi32>
    %c0_i32_17 = arith.constant 0 : i32
    %51 = vector.broadcast %c0_i32_17 : i32 to vector<256x8xi32>
    %52 = arith.cmpi ne, %50, %51 : vector<256x8xi32>
    %c0_i32_18 = arith.constant 0 : i32
    %53 = vector.broadcast %c0_i32_18 : i32 to vector<256x8xi32>
    %54 = arith.cmpi slt, %50, %53 : vector<256x8xi32>
    %c0_i32_19 = arith.constant 0 : i32
    %55 = arith.cmpi slt, %48, %c0_i32_19 : i32
    %56 = vector.broadcast %55 : i1 to vector<256x8xi1>
    %57 = vector.broadcast %56 : vector<256x8xi1> to vector<256x8xi1>
    %58 = arith.xori %54, %57 : vector<256x8xi1>
    %59 = arith.andi %58, %52 : vector<256x8xi1>
    %60 = vector.broadcast %48 : i32 to vector<256x8xi32>
    %61 = arith.addi %50, %60 : vector<256x8xi32>
    %62 = arith.select %59, %61, %50 : vector<256x8xi1>, vector<256x8xi32>
    %c0_i32_20 = arith.constant 0 : i32
    %63 = vector.broadcast %c0_i32_20 : i32 to vector<256x8xi32>
    %64 = arith.cmpi ne, %62, %63 : vector<256x8xi32>
    %65 = arith.extui %64 : vector<256x8xi1> to vector<256x8xi32>
    %66 = arith.sitofp %65 : vector<256x8xi32> to vector<256x8xf32>
    %67 = arith.truncf %66 : vector<256x8xf32> to vector<256x8xbf16>
    %c15_i32 = arith.constant 15 : i32
    %68 = vector.broadcast %c15_i32 : i32 to vector<256x8xi32>
    %69 = arith.cmpi ne, %62, %68 : vector<256x8xi32>
    %70 = arith.extui %69 : vector<256x8xi1> to vector<256x8xi32>
    %71 = arith.sitofp %70 : vector<256x8xi32> to vector<256x8xf32>
    %72 = arith.truncf %71 : vector<256x8xf32> to vector<256x8xbf16>
    %73 = vector.extract_strided_slice %45 {offsets = [0, 0], sizes = [256, 8], strides = [1, 1]} : vector<290x8xbf16> to vector<256x8xbf16>
    %74 = arith.mulf %73, %67 : vector<256x8xbf16>
    %75 = vector.extract_strided_slice %45 {offsets = [1, 0], sizes = [256, 8], strides = [1, 1]} : vector<290x8xbf16> to vector<256x8xbf16>
    %76 = vector.extract_strided_slice %45 {offsets = [2, 0], sizes = [256, 8], strides = [1, 1]} : vector<290x8xbf16> to vector<256x8xbf16>
    %77 = arith.mulf %76, %72 : vector<256x8xbf16>
    %78 = tpu.concatenate %74, %75, %77 in 1 : vector<256x8xbf16>, vector<256x8xbf16>, vector<256x8xbf16> -> vector<256x24xbf16>
    %c0_21 = arith.constant 0 : index
    %c0_22 = arith.constant 0 : index
    %c0_23 = arith.constant 0 : index
    %79 = vector.load %arg5[%c0_21, %c0_22, %c0_23] : memref<3x8x24xbf16, #tpu.memory_space<vmem>>, vector<1x8x24xbf16>
    %80 = vector.shape_cast %79 : vector<1x8x24xbf16> to vector<8x24xbf16>
    %cst_24 = arith.constant dense<0.000000e+00> : vector<8x256xf32>
    %81 = tpu.matmul %80, %78, %cst_24 {dimension_numbers = #tpu.dot_dimension_numbers<[1], [1], [0], [0], [0, 0, 1, 0], [], []>} : vector<8x24xbf16>, vector<256x24xbf16>, vector<8x256xf32> -> vector<8x256xf32>
    %82 = vector.extract_strided_slice %45 {offsets = [16, 0], sizes = [256, 8], strides = [1, 1]} : vector<290x8xbf16> to vector<256x8xbf16>
    %83 = arith.mulf %82, %67 : vector<256x8xbf16>
    %84 = vector.extract_strided_slice %45 {offsets = [17, 0], sizes = [256, 8], strides = [1, 1]} : vector<290x8xbf16> to vector<256x8xbf16>
    %85 = vector.extract_strided_slice %45 {offsets = [18, 0], sizes = [256, 8], strides = [1, 1]} : vector<290x8xbf16> to vector<256x8xbf16>
    %86 = arith.mulf %85, %72 : vector<256x8xbf16>
    %87 = tpu.concatenate %83, %84, %86 in 1 : vector<256x8xbf16>, vector<256x8xbf16>, vector<256x8xbf16> -> vector<256x24xbf16>
    %c1 = arith.constant 1 : index
    %c0_25 = arith.constant 0 : index
    %c0_26 = arith.constant 0 : index
    %88 = vector.load %arg5[%c1, %c0_25, %c0_26] : memref<3x8x24xbf16, #tpu.memory_space<vmem>>, vector<1x8x24xbf16>
    %89 = vector.shape_cast %88 : vector<1x8x24xbf16> to vector<8x24xbf16>
    %cst_27 = arith.constant dense<0.000000e+00> : vector<8x256xf32>
    %90 = tpu.matmul %89, %87, %cst_27 {dimension_numbers = #tpu.dot_dimension_numbers<[1], [1], [0], [0], [0, 0, 1, 0], [], []>} : vector<8x24xbf16>, vector<256x24xbf16>, vector<8x256xf32> -> vector<8x256xf32>
    %91 = arith.addf %81, %90 : vector<8x256xf32>
    %92 = vector.extract_strided_slice %45 {offsets = [32, 0], sizes = [256, 8], strides = [1, 1]} : vector<290x8xbf16> to vector<256x8xbf16>
    %93 = arith.mulf %92, %67 : vector<256x8xbf16>
    %94 = vector.extract_strided_slice %45 {offsets = [33, 0], sizes = [256, 8], strides = [1, 1]} : vector<290x8xbf16> to vector<256x8xbf16>
    %95 = vector.extract_strided_slice %45 {offsets = [34, 0], sizes = [256, 8], strides = [1, 1]} : vector<290x8xbf16> to vector<256x8xbf16>
    %96 = arith.mulf %95, %72 : vector<256x8xbf16>
    %97 = tpu.concatenate %93, %94, %96 in 1 : vector<256x8xbf16>, vector<256x8xbf16>, vector<256x8xbf16> -> vector<256x24xbf16>
    %c2 = arith.constant 2 : index
    %c0_28 = arith.constant 0 : index
    %c0_29 = arith.constant 0 : index
    %98 = vector.load %arg5[%c2, %c0_28, %c0_29] : memref<3x8x24xbf16, #tpu.memory_space<vmem>>, vector<1x8x24xbf16>
    %99 = vector.shape_cast %98 : vector<1x8x24xbf16> to vector<8x24xbf16>
    %cst_30 = arith.constant dense<0.000000e+00> : vector<8x256xf32>
    %100 = tpu.matmul %99, %97, %cst_30 {dimension_numbers = #tpu.dot_dimension_numbers<[1], [1], [0], [0], [0, 0, 1, 0], [], []>} : vector<8x24xbf16>, vector<256x24xbf16>, vector<8x256xf32> -> vector<8x256xf32>
    %101 = arith.addf %91, %100 : vector<8x256xf32>
    %102 = vector.shape_cast %101 : vector<8x256xf32> to vector<1x8x256xf32>
    %103 = arith.truncf %102 : vector<1x8x256xf32> to vector<1x8x256xbf16>
    %c0_31 = arith.constant 0 : index
    %c0_32 = arith.constant 0 : index
    %c0_33 = arith.constant 0 : index
    %104 = vector.load %arg8[%c0_31, %c0_32, %c0_33] : memref<1x8x256xbf16, #tpu.memory_space<vmem>>, vector<1x8x256xbf16>
    tpu.vector_store %arg8[%c0_31, %c0_32, %c0_33], %103 {strides = array<i32>} : memref<1x8x256xbf16, #tpu.memory_space<vmem>>, vector<1x8x256xbf16>,
    %cst_34 = arith.constant dense<0.000000e+00> : vector<8xf32>
    %105 = vector.multi_reduction <add>, %101, %cst_34 [1] : vector<8x256xf32> to vector<8xf32>
    %106 = vector.shape_cast %105 : vector<8xf32> to vector<8x1xf32>
    %c0_35 = arith.constant 0 : index
    %c0_36 = arith.constant 0 : index
    %c0_37 = arith.constant 0 : index
    %c0_38 = arith.constant 0 : index
    %107 = vector.load %arg9[%c0_35, %c0_36, %c0_37, %c0_38] : memref<1x1x8x2xf32, #tpu.memory_space<vmem>>, vector<1x1x8x1xf32>
    %108 = vector.shape_cast %107 : vector<1x1x8x1xf32> to vector<8x1xf32>
    %109 = vector.shape_cast %106 : vector<8x1xf32> to vector<1x1x8x1xf32>
    tpu.vector_store %arg9[%c0_35, %c0_36, %c0_37, %c0_38], %109 {strides = array<i32>} : memref<1x1x8x2xf32, #tpu.memory_space<vmem>>, vector<1x1x8x1xf32>,
    %110 = arith.mulf %101, %101 : vector<8x256xf32>
    %cst_39 = arith.constant dense<0.000000e+00> : vector<8xf32>
    %111 = vector.multi_reduction <add>, %110, %cst_39 [1] : vector<8x256xf32> to vector<8xf32>
    %112 = vector.shape_cast %111 : vector<8xf32> to vector<8x1xf32>
    %c0_40 = arith.constant 0 : index
    %c0_41 = arith.constant 0 : index
    %c0_42 = arith.constant 0 : index
    %c1_43 = arith.constant 1 : index
    %113 = vector.load %arg9[%c0_40, %c0_41, %c0_42, %c1_43] : memref<1x1x8x2xf32, #tpu.memory_space<vmem>>, vector<1x1x8x1xf32>
    %114 = vector.shape_cast %113 : vector<1x1x8x1xf32> to vector<8x1xf32>
    %115 = vector.shape_cast %112 : vector<8x1xf32> to vector<1x1x8x1xf32>
    tpu.vector_store %arg9[%c0_40, %c0_41, %c0_42, %c1_43], %115 {strides = array<i32>} : memref<1x1x8x2xf32, #tpu.memory_space<vmem>>, vector<1x1x8x1xf32>,
    return
  }
  func.func @transform_0(%arg0: i32, %arg1: i32) -> (i32, i32, i32) {
    %c0_i32 = arith.constant 0 : i32
    %c0_i32_0 = arith.constant 0 : i32
    return %arg0, %arg1, %c0_i32 : i32, i32, i32
  }
  func.func @transform_1(%arg0: i32, %arg1: i32) -> (i32, i32, i32) {
    %c16_i32 = arith.constant 16 : i32
    %0 = arith.muli %arg1, %c16_i32 : i32
    %c1_i32 = arith.constant 1 : i32
    %1 = arith.subi %0, %c1_i32 : i32
    %c0_i32 = arith.constant 0 : i32
    %2 = arith.maxsi %1, %c0_i32 : i32
    %c0_i32_0 = arith.constant 0 : i32
    %c0_i32_1 = arith.constant 0 : i32
    return %arg0, %2, %c0_i32_0 : i32, i32, i32
  }
  func.func @transform_2(%arg0: i32, %arg1: i32) -> (i32, i32, i32) {
    %c1_i32 = arith.constant 1 : i32
    %0 = arith.addi %arg1, %c1_i32 : i32
    %c16_i32 = arith.constant 16 : i32
    %1 = arith.muli %0, %c16_i32 : i32
    %c15_i32 = arith.constant 15 : i32
    %2 = arith.minsi %1, %c15_i32 : i32
    %c0_i32 = arith.constant 0 : i32
    %c0_i32_0 = arith.constant 0 : i32
    return %arg0, %2, %c0_i32 : i32, i32, i32
  }
  func.func @transform_3(%arg0: i32, %arg1: i32) -> (i32, i32, i32) {
    %c0_i32 = arith.constant 0 : i32
    %c0_i32_0 = arith.constant 0 : i32
    %c0_i32_1 = arith.constant 0 : i32
    %c0_i32_2 = arith.constant 0 : i32
    return %c0_i32, %c0_i32_0, %c0_i32_1 : i32, i32, i32
  }
  func.func @transform_4(%arg0: i32, %arg1: i32) -> (i32, i32) {
    %c0_i32 = arith.constant 0 : i32
    %c0_i32_0 = arith.constant 0 : i32
    %c0_i32_1 = arith.constant 0 : i32
    return %c0_i32, %c0_i32_0 : i32, i32
  }
  func.func @transform_5(%arg0: i32, %arg1: i32) -> (i32, i32) {
    %c0_i32 = arith.constant 0 : i32
    %c0_i32_0 = arith.constant 0 : i32
    %c0_i32_1 = arith.constant 0 : i32
    return %c0_i32, %c0_i32_0 : i32, i32
  }
  func.func @transform_6(%arg0: i32, %arg1: i32) -> (i32, i32, i32) {
    %c0_i32 = arith.constant 0 : i32
    %c0_i32_0 = arith.constant 0 : i32
    return %arg0, %c0_i32, %arg1 : i32, i32, i32
  }
  func.func @transform_7(%arg0: i32, %arg1: i32) -> (i32, i32, i32, i32) {
    %c0_i32 = arith.constant 0 : i32
    %c0_i32_0 = arith.constant 0 : i32
    %c0_i32_1 = arith.constant 0 : i32
    return %arg0, %arg1, %c0_i32, %c0_i32_0 : i32, i32, i32, i32
  }
}

module attributes {stable_mosaic.version = 11 : i64} {
  func.func @_bn_relu_nchw_kernel(%arg0: i32, %arg1: i32, %arg2: memref<1x8x256xbf16, #tpu.memory_space<vmem>>, %arg3: memref<8x1xf32, #tpu.memory_space<vmem>>, %arg4: memref<8x1xf32, #tpu.memory_space<vmem>>, %arg5: memref<1x8x256xf32, #tpu.memory_space<vmem>>) attributes {dimension_semantics = [#tpu.dimension_semantics<parallel>, #tpu.dimension_semantics<parallel>], iteration_bounds = array<i64: 2, 1>, scalar_prefetch = 0 : i64, scratch_operands = 0 : i64, tpu.core_type = #tpu.core_type<tc>, window_params = [{transform_indices = @transform_0, window_bounds = array<i64: 1, 8, 256>}, {pipeline_mode = #tpu.pipeline_mode<synchronous>, transform_indices = @transform_1, window_bounds = array<i64: 8, 1>}, {pipeline_mode = #tpu.pipeline_mode<synchronous>, transform_indices = @transform_2, window_bounds = array<i64: 8, 1>}, {transform_indices = @transform_3, window_bounds = array<i64: 1, 8, 256>}]} {
    %c0 = arith.constant 0 : index
    %c0_0 = arith.constant 0 : index
    %c0_1 = arith.constant 0 : index
    %0 = vector.load %arg2[%c0, %c0_0, %c0_1] : memref<1x8x256xbf16, #tpu.memory_space<vmem>>, vector<1x8x256xbf16>
    %1 = arith.extf %0 : vector<1x8x256xbf16> to vector<1x8x256xf32>
    %c0_2 = arith.constant 0 : index
    %c0_3 = arith.constant 0 : index
    %2 = vector.load %arg3[%c0_2, %c0_3] : memref<8x1xf32, #tpu.memory_space<vmem>>, vector<8x1xf32>
    %3 = vector.shape_cast %2 : vector<8x1xf32> to vector<1x8x1xf32>
    %4 = vector.broadcast %3 : vector<1x8x1xf32> to vector<1x8x256xf32>
    %5 = arith.mulf %1, %4 : vector<1x8x256xf32>
    %c0_4 = arith.constant 0 : index
    %c0_5 = arith.constant 0 : index
    %6 = vector.load %arg4[%c0_4, %c0_5] : memref<8x1xf32, #tpu.memory_space<vmem>>, vector<8x1xf32>
    %7 = vector.shape_cast %6 : vector<8x1xf32> to vector<1x8x1xf32>
    %8 = vector.broadcast %7 : vector<1x8x1xf32> to vector<1x8x256xf32>
    %9 = arith.addf %5, %8 : vector<1x8x256xf32>
    %cst = arith.constant 0.000000e+00 : f32
    %10 = vector.broadcast %cst : f32 to vector<1x8x256xf32>
    %11 = arith.maximumf %9, %10 : vector<1x8x256xf32>
    %c0_6 = arith.constant 0 : index
    %c0_7 = arith.constant 0 : index
    %c0_8 = arith.constant 0 : index
    %12 = vector.load %arg5[%c0_6, %c0_7, %c0_8] : memref<1x8x256xf32, #tpu.memory_space<vmem>>, vector<1x8x256xf32>
    tpu.vector_store %arg5[%c0_6, %c0_7, %c0_8], %11 {strides = array<i32>} : memref<1x8x256xf32, #tpu.memory_space<vmem>>, vector<1x8x256xf32>,
    return
  }
  func.func @transform_0(%arg0: i32, %arg1: i32) -> (i32, i32, i32) {
    %c0_i32 = arith.constant 0 : i32
    %c0_i32_0 = arith.constant 0 : i32
    return %arg0, %c0_i32, %arg1 : i32, i32, i32
  }
  func.func @transform_1(%arg0: i32, %arg1: i32) -> (i32, i32) {
    %c0_i32 = arith.constant 0 : i32
    %c0_i32_0 = arith.constant 0 : i32
    %c0_i32_1 = arith.constant 0 : i32
    return %c0_i32, %c0_i32_0 : i32, i32
  }
  func.func @transform_2(%arg0: i32, %arg1: i32) -> (i32, i32) {
    %c0_i32 = arith.constant 0 : i32
    %c0_i32_0 = arith.constant 0 : i32
    %c0_i32_1 = arith.constant 0 : i32
    return %c0_i32, %c0_i32_0 : i32, i32
  }
  func.func @transform_3(%arg0: i32, %arg1: i32) -> (i32, i32, i32) {
    %c0_i32 = arith.constant 0 : i32
    %c0_i32_0 = arith.constant 0 : i32
    return %arg0, %c0_i32, %arg1 : i32, i32, i32
  }
}

</mosaic_0001>

<llo_original>
// kernel: double_conv.5
$region0: #{double_conv.5}
  #allocation0 [shape = 'u32[]', space=smem, size = 0x4, offset = 0x4, fixed_abs, tag = 'smem constant byte address 0x4 - core index']
  #allocation1 [shape = 'u32[144,128]{1,0:T(1,128)}', space=vmem, size = 0x12000, scoped, tag = 'internal scratch']
  %s0 = inlined_call_operand.vmem [shape: bf16[2,8,256], index: 0, kind: input, shape index: {}]
  %s1 = inlined_call_operand.vmem [shape: f32[8,1], index: 1, kind: input, shape index: {}]
  %s2 = inlined_call_operand.vmem [shape: f32[8,1], index: 2, kind: input, shape index: {}]
  %s3 = inlined_call_operand.vmem [shape: f32[2,8,256], index: 3, kind: output, shape index: {}]
  %s4 = sld [smem:[#allocation0]]
  $region45: #{double_conv.5} parent=0
    _
  %s6 = ssub.s32 1, %s4
  %s7 = scalar_select 0, %s6, %s4
  loop: start=0, step=1, limit=4
  $region2: #{double_conv.5} parent=0 // loop_pre_header
    _
  $region3: #{double_conv.5} parent=0 // loop_header
    %s9 = sphi 0, %s13
    %p10 = scmp.ge.s32.totalorder %s9, 4
    %s16 = sphi 0, %s28
    %s17 = sphi 0, %s24
    %s18 = sphi 0, %s16
    %s19 = sphi 0, %s17
    %s20 = sphi 0, %s18
    %s21 = sphi 0, %s19
    %s33 = sphi 0, %s35
    %s36 = sphi 0, %s33
    %s37 = sphi 0, %s36
    %s53 = sphi 0, %s37
    %s57 = sphi 0, %s57
    %s59 = sphi 0, %s57
    %s60 = sphi 0, %s59
    %s74 = sphi 0, %s60
    %s78 = sphi 0, %s78
    %s80 = sphi 0, %s78
    %s81 = sphi 0, %s80
    %s95 = sphi 0, %s81
    %s103 = sphi 0, %s105
    %s106 = sphi 0, %s103
    %s107 = sphi 0, %s106
    %s123 = sphi 0, %s107
  $region4: #{double_conv.5} parent=0 // loop_header_branch
    %12 = sbr.rel (%p10) target = $region8
  $region5: #{double_conv.5} parent=0 // loop_body
    %s14 = ssub.s32 %s9, 1
    %s15 = ssub.s32 %s9, 2
    %s22 = sadd.s32 1, %s17
    %p23 = scmp.ge.s32.totalorder %s22, 1
    %s24 = scalar_select %p23, 0, %s22
    %s25 = sadd.s32 1, %s16
    %s26 = scalar_select %p23, %s25, %s16
    %p27 = scmp.ge.s32.totalorder %s26, 2
    %s28 = scalar_select %p27, 0, %s26
    %s29 = ssub.s32 %s16, %s28
    %s30 = ssub.s32 %s17, %s24
    %s31 = sor.u32 %s29, %s30
    %p32 = scmp.eq.s32.totalorder %s31, 0
    %s34 = sadd.s32 %s33, 1
    %s35 = scalar_select %p32, %s33, %s34
    %p38 = pneg %p32
    %p39 = scmp.eq.s32.totalorder %s9, 1
    %p40 = por %p38, %p39
    %p41 = scmp.ne.s32.totalorder %s33, %s36
    %p42 = scmp.eq.s32.totalorder %s9, 0
    %p43 = por %p41, %p42
    %p44 = scmp.ne.s32.totalorder %s33, %s36
    %p45 = scmp.eq.s32.totalorder %s14, 1
    %p46 = por %p44, %p45
    %p47 = scmp.ne.s32.totalorder %s36, %s37
    %p48 = scmp.eq.s32.totalorder %s14, 0
    %p49 = por %p47, %p48
    %p50 = scmp.ne.s32.totalorder %s36, %s37
    %p51 = scmp.eq.s32.totalorder %s15, 1
    %p52 = por %p50, %p51
    %p54 = scmp.ne.s32.totalorder %s37, %s53
    %p55 = scmp.eq.s32.totalorder %s15, 0
    %p56 = por %p54, %p55
    %s58 = sadd.s32 %s57, 1
    %p61 = scmp.eq.s32.totalorder %s9, 1
    %p62 = scmp.ne.s32.totalorder %s57, %s59
    %p63 = scmp.eq.s32.totalorder %s9, 0
    %p64 = por %p62, %p63
    %p65 = scmp.ne.s32.totalorder %s57, %s59
    %p66 = scmp.eq.s32.totalorder %s14, 1
    %p67 = por %p65, %p66
    %p68 = scmp.ne.s32.totalorder %s59, %s60
    %p69 = scmp.eq.s32.totalorder %s14, 0
    %p70 = por %p68, %p69
    %p71 = scmp.ne.s32.totalorder %s59, %s60
    %p72 = scmp.eq.s32.totalorder %s15, 1
    %p73 = por %p71, %p72
    %p75 = scmp.ne.s32.totalorder %s60, %s74
    %p76 = scmp.eq.s32.totalorder %s15, 0
    %p77 = por %p75, %p76
    %s79 = sadd.s32 %s78, 1
    %p82 = scmp.eq.s32.totalorder %s9, 1
    %p83 = scmp.ne.s32.totalorder %s78, %s80
    %p84 = scmp.eq.s32.totalorder %s9, 0
    %p85 = por %p83, %p84
    %p86 = scmp.ne.s32.totalorder %s78, %s80
    %p87 = scmp.eq.s32.totalorder %s14, 1
    %p88 = por %p86, %p87
    %p89 = scmp.ne.s32.totalorder %s80, %s81
    %p90 = scmp.eq.s32.totalorder %s14, 0
    %p91 = por %p89, %p90
    %p92 = scmp.ne.s32.totalorder %s80, %s81
    %p93 = scmp.eq.s32.totalorder %s15, 1
    %p94 = por %p92, %p93
    %p96 = scmp.ne.s32.totalorder %s81, %s95
    %p97 = scmp.eq.s32.totalorder %s15, 0
    %p98 = por %p96, %p97
    %s99 = ssub.s32 %s16, %s28
    %s100 = ssub.s32 %s17, %s24
    %s101 = sor.u32 %s99, %s100
    %p102 = scmp.eq.s32.totalorder %s101, 0
    %s104 = sadd.s32 %s103, 1
    %s105 = scalar_select %p102, %s103, %s104
    %p108 = pneg %p102
    %p109 = scmp.eq.s32.totalorder %s9, 1
    %p110 = por %p108, %p109
    %p111 = scmp.ne.s32.totalorder %s103, %s106
    %p112 = scmp.eq.s32.totalorder %s9, 0
    %p113 = por %p111, %p112
    %p114 = scmp.ne.s32.totalorder %s103, %s106
    %p115 = scmp.eq.s32.totalorder %s14, 1
    %p116 = por %p114, %p115
    %p117 = scmp.ne.s32.totalorder %s106, %s107
    %p118 = scmp.eq.s32.totalorder %s14, 0
    %p119 = por %p117, %p118
    %p120 = scmp.ne.s32.totalorder %s106, %s107
    %p121 = scmp.eq.s32.totalorder %s15, 1
    %p122 = por %p120, %p121
    %p124 = scmp.ne.s32.totalorder %s107, %s123
    %p125 = scmp.eq.s32.totalorder %s15, 0
    %p126 = por %p124, %p125
    %p127 = scmp.le.s32.totalorder 1, %s9
    %p128 = scmp.lt.s32.totalorder %s9, 3
    %p129 = pnand %p127, %p128
    %p130 = pneg %p129
    // Predicated region
    $region9: #{double_conv.5} parent=5 // pred_check
      _
    $region10: #{double_conv.5} parent=5 // pred_check_branch
      %132 = sbr.rel (%p129) target = $region12
    $region11: #{double_conv.5} parent=5 // pred_region
      %s133 = ssub.s32 %s9, 1
      // Predicated region
      $region13: #{double_conv.5} parent=11 // pred_check
        %p134 = pneg %p70
      $region14: #{double_conv.5} parent=11 // pred_check_branch
        %136 = sbr.rel (%p134) target = $region16
      $region15: #{double_conv.5} parent=11 // pred_region
        _
      $region16: #{double_conv.5} parent=11 // pred_fallthru
        _
      // Predicated region
      $region17: #{double_conv.5} parent=11 // pred_check
        %p137 = pneg %p91
      $region18: #{double_conv.5} parent=11 // pred_check_branch
        %139 = sbr.rel (%p137) target = $region20
      $region19: #{double_conv.5} parent=11 // pred_region
        _
      $region20: #{double_conv.5} parent=11 // pred_fallthru
        _
    $region12: #{double_conv.5} parent=5 // pred_fallthru
      _
    %p140 = scmp.lt.s32.totalorder %s9, 2
    // Predicated region
    $region21: #{double_conv.5} parent=5 // pred_check
      %p141 = pneg %p140
    $region22: #{double_conv.5} parent=5 // pred_check_branch
      %143 = sbr.rel (%p141) target = $region24
    $region23: #{double_conv.5} parent=5 // pred_region
      // Predicated region
      $region25: #{double_conv.5} parent=23 // pred_check
        %p144 = pneg %p43
      $region26: #{double_conv.5} parent=23 // pred_check_branch
        %146 = sbr.rel (%p144) target = $region28
      $region27: #{double_conv.5} parent=23 // pred_region
        %s147 = smul.u32 2, %s17
        %p148 = scmp.lt.s32.totalorder %s16, 1
        %s149 = scalar_select %p148, %s16, 1
        %p150 = scmp.lt.s32.totalorder %s147, 1
        %s151 = scalar_select %p150, %s147, 1
        %s152 = smul.addr %s149, 2
        %s153 = sadd.s32 %s151, %s152
        %s154 = smul.addr %s153, 4
        %s155 = scalar_lea.vmem %s0, %s154
        %s156 = smul.u32 2, %s17
      $region28: #{double_conv.5} parent=23 // pred_fallthru
        _
    $region24: #{double_conv.5} parent=5 // pred_fallthru
      _
    %p157 = scmp.le.s32.totalorder 1, %s9
    %p158 = scmp.lt.s32.totalorder %s9, 3
    %p159 = pnand %p157, %p158
    %p160 = pneg %p159
    // Predicated region
    $region29: #{double_conv.5} parent=5 // pred_check
      _
    $region30: #{double_conv.5} parent=5 // pred_check_branch
      %162 = sbr.rel (%p159) target = $region32
    $region31: #{double_conv.5} parent=5 // pred_region
      %s163 = ssub.s32 %s9, 1
      %s164 = smul.u32 2, %s19
      %p165 = scmp.lt.s32.totalorder %s18, 1
      %s166 = scalar_select %p165, %s18, 1
      %p167 = scmp.lt.s32.totalorder %s164, 1
      %s168 = scalar_select %p167, %s164, 1
      %s169 = smul.addr %s166, 2
      %s170 = sadd.s32 %s168, %s169
      %s171 = smul.addr %s170, 4
      %s172 = scalar_lea.vmem %s0, %s171
      %p173 = pneg %p49
      %p174 = pneg %p46
      %p175 = pneg %p70
      %p176 = pneg %p67
      %p177 = pneg %p91
      %p178 = pneg %p88
      %p179 = pneg %p119
      %p180 = pneg %p116
      %s181 = smul.u32 2, %s19
      %p182 = scmp.lt.s32.totalorder %s18, 1
      %s183 = scalar_select %p182, %s18, 1
      %p184 = scmp.lt.s32.totalorder %s181, 1
      %s185 = scalar_select %p184, %s181, 1
      %s186 = smul.addr %s183, 2
      %s187 = sadd.s32 %s185, %s186
      %s188 = smul.addr %s187, 8
      %s189 = scalar_lea.vmem %s3, %s188
      %s190 = smul.u32 2, %s19
      %p191 = scmp.lt.s32.totalorder %s18, 1
      %s192 = scalar_select %p191, %s18, 1
      %p193 = scmp.lt.s32.totalorder %s190, 1
      %s194 = scalar_select %p193, %s190, 1
      %s195 = smul.addr %s192, 2
      %s196 = sadd.s32 %s194, %s195
      %s197 = smul.addr %s196, 4
      %s198 = scalar_lea.vmem %s0, %s197
      %s199 = smul.u32 2, %s19
      %s200 = smul.u32 2, %s19
      %p201 = scmp.lt.s32.totalorder %s18, 1
      %s202 = scalar_select %p201, %s18, 1
      %p203 = scmp.lt.s32.totalorder %s200, 1
      %s204 = scalar_select %p203, %s200, 1
      %s205 = smul.addr %s202, 2
      %s206 = sadd.s32 %s204, %s205
      %s207 = smul.addr %s206, 8
      %s208 = scalar_lea.vmem %s3, %s207
      %s209 = smul.u32 2, %s19
      %v210 = vld [vmem:[%s198] sm:$0xff]
      %v211 = vunpack.c.l.bf16 %v210
      %v212 = vunpack.c.h.bf16 %v210
      %v213 = vld [vmem:[%s1] sm:$0xff]
      %215 = vset.pattern.permute.xlu0 0
      %216 = vperm.xlu0 %215, %v213
      %v217 = vpop.permute.xlu0 %216
      %v219 = vmul.f32 %v211, %v217
      %v220 = vmul.f32 %v212, %v217
      %v221 = vld [vmem:[%s2] sm:$0xff]
      %223 = vset.pattern.permute.xlu0 0
      %224 = vperm.xlu0 %223, %v221
      %v225 = vpop.permute.xlu0 %224
      %v227 = vadd.f32 %v219, %v225
      %v228 = vadd.f32 %v220, %v225
      %v229 = vmax.f32 %v227, 0.0
      %v230 = vmax.f32 %v228, 0.0
      %231 = vst [vmem:[%s208] sm:$0xff] %v229
      %232 = vst [vmem:[%s208 + $0x8] sm:$0xff] %v230
      %s233 = smul.u32 2, %s19
      %p234 = scmp.lt.s32.totalorder %s18, 1
      %s235 = scalar_select %p234, %s18, 1
      %p236 = scmp.lt.s32.totalorder %s233, 1
      %s237 = scalar_select %p236, %s233, 1
      %s238 = smul.addr %s235, 2
      %s239 = sadd.s32 %s237, %s238
      %s240 = smul.addr %s239, 8
      %s241 = scalar_lea.vmem %s3, %s240
      // Predicated region
      $region33: #{double_conv.5} parent=31 // pred_check
        %p242 = pneg %p116
      $region34: #{double_conv.5} parent=31 // pred_check_branch
        %244 = sbr.rel (%p242) target = $region36
      $region35: #{double_conv.5} parent=31 // pred_region
        %s245 = smul.u32 2, %s19
      $region36: #{double_conv.5} parent=31 // pred_fallthru
        _
    $region32: #{double_conv.5} parent=5 // pred_fallthru
      _
    %p246 = scmp.le.s32.totalorder 2, %s9
    // Predicated region
    $region37: #{double_conv.5} parent=5 // pred_check
      %p247 = pneg %p246
    $region38: #{double_conv.5} parent=5 // pred_check_branch
      %249 = sbr.rel (%p247) target = $region40
    $region39: #{double_conv.5} parent=5 // pred_region
      %s250 = ssub.s32 %s9, 2
      // Predicated region
      $region41: #{double_conv.5} parent=39 // pred_check
        %p251 = pneg %p122
      $region42: #{double_conv.5} parent=39 // pred_check_branch
        %253 = sbr.rel (%p251) target = $region44
      $region43: #{double_conv.5} parent=39 // pred_region
        %s254 = smul.u32 2, %s21
        %p255 = scmp.lt.s32.totalorder %s20, 1
        %s256 = scalar_select %p255, %s20, 1
        %p257 = scmp.lt.s32.totalorder %s254, 1
        %s258 = scalar_select %p257, %s254, 1
        %s259 = smul.addr %s256, 2
        %s260 = sadd.s32 %s258, %s259
        %s261 = smul.addr %s260, 8
        %s262 = scalar_lea.vmem %s3, %s261
      $region44: #{double_conv.5} parent=39 // pred_fallthru
        _
    $region40: #{double_conv.5} parent=5 // pred_fallthru
      _
  $region6: #{double_conv.5} parent=0 // loop_footer
    %s13 = sadd.s32 1, %s9
  $region7: #{double_conv.5} parent=0 // loop_footer_branch
    %8 = sbr.rel target = $region3
  $region8: #{double_conv.5} parent=0 // loop_exit
    _

// kernel: double_conv.4
$region0: #{double_conv.4}
  #allocation0 [shape = 'u32[]', space=smem, size = 0x4, offset = 0x4, fixed_abs, tag = 'smem constant byte address 0x4 - core index']
  #allocation1 [shape = 'u32[144,128]{1,0:T(1,128)}', space=vmem, size = 0x12000, scoped, tag = 'internal scratch']
  %s0 = inlined_call_operand.vmem [shape: bf16[2,256,8], index: 0, kind: input, shape index: {}, may-alias: {0,1,2}]
  %s1 = inlined_call_operand.vmem [shape: bf16[2,256,8], index: 1, kind: input, shape index: {}, may-alias: {0,1,2}]
  %s2 = inlined_call_operand.vmem [shape: bf16[2,256,8], index: 2, kind: input, shape index: {}, may-alias: {0,1,2}]
  %s3 = inlined_call_operand.vmem [shape: bf16[3,8,24], index: 3, kind: input, shape index: {}]
  %s4 = inlined_call_operand.vmem [shape: f32[1,8], index: 4, kind: input, shape index: {}]
  %s5 = inlined_call_operand.vmem [shape: f32[1,8], index: 5, kind: input, shape index: {}]
  %s6 = inlined_call_operand.vmem [shape: bf16[2,8,256], index: 6, kind: output, shape index: {0}]
  %s7 = inlined_call_operand.vmem [shape: f32[2,1,8,2], index: 7, kind: output, shape index: {1}]
  %8 = xla_tuple %s6, %s7
  %s9 = sld [smem:[#allocation0]]
  $region65: #{double_conv.4} parent=0
    _
  %s11 = ssub.s32 1, %s9
  %s12 = scalar_select 0, %s11, %s9
  loop: start=0, step=1, limit=4
  $region2: #{double_conv.4} parent=0 // loop_pre_header
    _
  $region3: #{double_conv.4} parent=0 // loop_header
    %s14 = sphi 0, %s18
    %p15 = scmp.ge.s32.totalorder %s14, 4
    %s21 = sphi 0, %s33
    %s22 = sphi 0, %s29
    %s23 = sphi 0, %s21
    %s24 = sphi 0, %s22
    %s25 = sphi 0, %s23
    %s26 = sphi 0, %s24
    %s38 = sphi 0, %s40
    %s41 = sphi 0, %s38
    %s42 = sphi 0, %s41
    %s58 = sphi 0, %s42
    %s74 = sphi 0, %s76
    %s77 = sphi 0, %s74
    %s78 = sphi 0, %s77
    %s94 = sphi 0, %s78
    %s110 = sphi 0, %s112
    %s113 = sphi 0, %s110
    %s114 = sphi 0, %s113
    %s130 = sphi 0, %s114
    %s134 = sphi 0, %s134
    %s136 = sphi 0, %s134
    %s137 = sphi 0, %s136
    %s151 = sphi 0, %s137
    %s155 = sphi 0, %s155
    %s157 = sphi 0, %s155
    %s158 = sphi 0, %s157
    %s172 = sphi 0, %s158
    %s176 = sphi 0, %s176
    %s178 = sphi 0, %s176
    %s179 = sphi 0, %s178
    %s193 = sphi 0, %s179
    %s201 = sphi 0, %s203
    %s204 = sphi 0, %s201
    %s205 = sphi 0, %s204
    %s221 = sphi 0, %s205
    %s229 = sphi 0, %s231
    %s232 = sphi 0, %s229
    %s233 = sphi 0, %s232
    %s249 = sphi 0, %s233
  $region4: #{double_conv.4} parent=0 // loop_header_branch
    %17 = sbr.rel (%p15) target = $region8
  $region5: #{double_conv.4} parent=0 // loop_body
    %s19 = ssub.s32 %s14, 1
    %s20 = ssub.s32 %s14, 2
    %s27 = sadd.s32 1, %s22
    %p28 = scmp.ge.s32.totalorder %s27, 1
    %s29 = scalar_select %p28, 0, %s27
    %s30 = sadd.s32 1, %s21
    %s31 = scalar_select %p28, %s30, %s21
    %p32 = scmp.ge.s32.totalorder %s31, 2
    %s33 = scalar_select %p32, 0, %s31
    %s34 = ssub.s32 %s21, %s33
    %s35 = ssub.s32 %s22, %s29
    %s36 = sor.u32 %s34, %s35
    %p37 = scmp.eq.s32.totalorder %s36, 0
    %s39 = sadd.s32 %s38, 1
    %s40 = scalar_select %p37, %s38, %s39
    %p43 = pneg %p37
    %p44 = scmp.eq.s32.totalorder %s14, 1
    %p45 = por %p43, %p44
    %p46 = scmp.ne.s32.totalorder %s38, %s41
    %p47 = scmp.eq.s32.totalorder %s14, 0
    %p48 = por %p46, %p47
    %p49 = scmp.ne.s32.totalorder %s38, %s41
    %p50 = scmp.eq.s32.totalorder %s19, 1
    %p51 = por %p49, %p50
    %p52 = scmp.ne.s32.totalorder %s41, %s42
    %p53 = scmp.eq.s32.totalorder %s19, 0
    %p54 = por %p52, %p53
    %p55 = scmp.ne.s32.totalorder %s41, %s42
    %p56 = scmp.eq.s32.totalorder %s20, 1
    %p57 = por %p55, %p56
    %p59 = scmp.ne.s32.totalorder %s42, %s58
    %p60 = scmp.eq.s32.totalorder %s20, 0
    %p61 = por %p59, %p60
    %s62 = smul.u32 %s22, 16
    %s63 = ssub.s32 %s62, 1
    %p64 = scmp.gt.s32.totalorder %s63, 0
    %s65 = scalar_select %p64, %s63, 0
    %s66 = smul.u32 %s29, 16
    %s67 = ssub.s32 %s66, 1
    %p68 = scmp.gt.s32.totalorder %s67, 0
    %s69 = scalar_select %p68, %s67, 0
    %s70 = ssub.s32 %s21, %s33
    %s71 = ssub.s32 %s65, %s69
    %s72 = sor.u32 %s70, %s71
    %p73 = scmp.eq.s32.totalorder %s72, 0
    %s75 = sadd.s32 %s74, 1
    %s76 = scalar_select %p73, %s74, %s75
    %p79 = pneg %p73
    %p80 = scmp.eq.s32.totalorder %s14, 1
    %p81 = por %p79, %p80
    %p82 = scmp.ne.s32.totalorder %s74, %s77
    %p83 = scmp.eq.s32.totalorder %s14, 0
    %p84 = por %p82, %p83
    %p85 = scmp.ne.s32.totalorder %s74, %s77
    %p86 = scmp.eq.s32.totalorder %s19, 1
    %p87 = por %p85, %p86
    %p88 = scmp.ne.s32.totalorder %s77, %s78
    %p89 = scmp.eq.s32.totalorder %s19, 0
    %p90 = por %p88, %p89
    %p91 = scmp.ne.s32.totalorder %s77, %s78
    %p92 = scmp.eq.s32.totalorder %s20, 1
    %p93 = por %p91, %p92
    %p95 = scmp.ne.s32.totalorder %s78, %s94
    %p96 = scmp.eq.s32.totalorder %s20, 0
    %p97 = por %p95, %p96
    %s98 = sadd.s32 %s22, 1
    %s99 = smul.u32 %s98, 16
    %p100 = scmp.lt.s32.totalorder %s99, 15
    %s101 = scalar_select %p100, %s99, 15
    %s102 = sadd.s32 %s29, 1
    %s103 = smul.u32 %s102, 16
    %p104 = scmp.lt.s32.totalorder %s103, 15
    %s105 = scalar_select %p104, %s103, 15
    %s106 = ssub.s32 %s21, %s33
    %s107 = ssub.s32 %s101, %s105
    %s108 = sor.u32 %s106, %s107
    %p109 = scmp.eq.s32.totalorder %s108, 0
    %s111 = sadd.s32 %s110, 1
    %s112 = scalar_select %p109, %s110, %s111
    %p115 = pneg %p109
    %p116 = scmp.eq.s32.totalorder %s14, 1
    %p117 = por %p115, %p116
    %p118 = scmp.ne.s32.totalorder %s110, %s113
    %p119 = scmp.eq.s32.totalorder %s14, 0
    %p120 = por %p118, %p119
    %p121 = scmp.ne.s32.totalorder %s110, %s113
    %p122 = scmp.eq.s32.totalorder %s19, 1
    %p123 = por %p121, %p122
    %p124 = scmp.ne.s32.totalorder %s113, %s114
    %p125 = scmp.eq.s32.totalorder %s19, 0
    %p126 = por %p124, %p125
    %p127 = scmp.ne.s32.totalorder %s113, %s114
    %p128 = scmp.eq.s32.totalorder %s20, 1
    %p129 = por %p127, %p128
    %p131 = scmp.ne.s32.totalorder %s114, %s130
    %p132 = scmp.eq.s32.totalorder %s20, 0
    %p133 = por %p131, %p132
    %s135 = sadd.s32 %s134, 1
    %p138 = scmp.eq.s32.totalorder %s14, 1
    %p139 = scmp.ne.s32.totalorder %s134, %s136
    %p140 = scmp.eq.s32.totalorder %s14, 0
    %p141 = por %p139, %p140
    %p142 = scmp.ne.s32.totalorder %s134, %s136
    %p143 = scmp.eq.s32.totalorder %s19, 1
    %p144 = por %p142, %p143
    %p145 = scmp.ne.s32.totalorder %s136, %s137
    %p146 = scmp.eq.s32.totalorder %s19, 0
    %p147 = por %p145, %p146
    %p148 = scmp.ne.s32.totalorder %s136, %s137
    %p149 = scmp.eq.s32.totalorder %s20, 1
    %p150 = por %p148, %p149
    %p152 = scmp.ne.s32.totalorder %s137, %s151
    %p153 = scmp.eq.s32.totalorder %s20, 0
    %p154 = por %p152, %p153
    %s156 = sadd.s32 %s155, 1
    %p159 = scmp.eq.s32.totalorder %s14, 1
    %p160 = scmp.ne.s32.totalorder %s155, %s157
    %p161 = scmp.eq.s32.totalorder %s14, 0
    %p162 = por %p160, %p161
    %p163 = scmp.ne.s32.totalorder %s155, %s157
    %p164 = scmp.eq.s32.totalorder %s19, 1
    %p165 = por %p163, %p164
    %p166 = scmp.ne.s32.totalorder %s157, %s158
    %p167 = scmp.eq.s32.totalorder %s19, 0
    %p168 = por %p166, %p167
    %p169 = scmp.ne.s32.totalorder %s157, %s158
    %p170 = scmp.eq.s32.totalorder %s20, 1
    %p171 = por %p169, %p170
    %p173 = scmp.ne.s32.totalorder %s158, %s172
    %p174 = scmp.eq.s32.totalorder %s20, 0
    %p175 = por %p173, %p174
    %s177 = sadd.s32 %s176, 1
    %p180 = scmp.eq.s32.totalorder %s14, 1
    %p181 = scmp.ne.s32.totalorder %s176, %s178
    %p182 = scmp.eq.s32.totalorder %s14, 0
    %p183 = por %p181, %p182
    %p184 = scmp.ne.s32.totalorder %s176, %s178
    %p185 = scmp.eq.s32.totalorder %s19, 1
    %p186 = por %p184, %p185
    %p187 = scmp.ne.s32.totalorder %s178, %s179
    %p188 = scmp.eq.s32.totalorder %s19, 0
    %p189 = por %p187, %p188
    %p190 = scmp.ne.s32.totalorder %s178, %s179
    %p191 = scmp.eq.s32.totalorder %s20, 1
    %p192 = por %p190, %p191
    %p194 = scmp.ne.s32.totalorder %s179, %s193
    %p195 = scmp.eq.s32.totalorder %s20, 0
    %p196 = por %p194, %p195
    %s197 = ssub.s32 %s21, %s33
    %s198 = ssub.s32 %s22, %s29
    %s199 = sor.u32 %s197, %s198
    %p200 = scmp.eq.s32.totalorder %s199, 0
    %s202 = sadd.s32 %s201, 1
    %s203 = scalar_select %p200, %s201, %s202
    %p206 = pneg %p200
    %p207 = scmp.eq.s32.totalorder %s14, 1
    %p208 = por %p206, %p207
    %p209 = scmp.ne.s32.totalorder %s201, %s204
    %p210 = scmp.eq.s32.totalorder %s14, 0
    %p211 = por %p209, %p210
    %p212 = scmp.ne.s32.totalorder %s201, %s204
    %p213 = scmp.eq.s32.totalorder %s19, 1
    %p214 = por %p212, %p213
    %p215 = scmp.ne.s32.totalorder %s204, %s205
    %p216 = scmp.eq.s32.totalorder %s19, 0
    %p217 = por %p215, %p216
    %p218 = scmp.ne.s32.totalorder %s204, %s205
    %p219 = scmp.eq.s32.totalorder %s20, 1
    %p220 = por %p218, %p219
    %p222 = scmp.ne.s32.totalorder %s205, %s221
    %p223 = scmp.eq.s32.totalorder %s20, 0
    %p224 = por %p222, %p223
    %s225 = ssub.s32 %s21, %s33
    %s226 = ssub.s32 %s22, %s29
    %s227 = sor.u32 %s225, %s226
    %p228 = scmp.eq.s32.totalorder %s227, 0
    %s230 = sadd.s32 %s229, 1
    %s231 = scalar_select %p228, %s229, %s230
    %p234 = pneg %p228
    %p235 = scmp.eq.s32.totalorder %s14, 1
    %p236 = por %p234, %p235
    %p237 = scmp.ne.s32.totalorder %s229, %s232
    %p238 = scmp.eq.s32.totalorder %s14, 0
    %p239 = por %p237, %p238
    %p240 = scmp.ne.s32.totalorder %s229, %s232
    %p241 = scmp.eq.s32.totalorder %s19, 1
    %p242 = por %p240, %p241
    %p243 = scmp.ne.s32.totalorder %s232, %s233
    %p244 = scmp.eq.s32.totalorder %s19, 0
    %p245 = por %p243, %p244
    %p246 = scmp.ne.s32.totalorder %s232, %s233
    %p247 = scmp.eq.s32.totalorder %s20, 1
    %p248 = por %p246, %p247
    %p250 = scmp.ne.s32.totalorder %s233, %s249
    %p251 = scmp.eq.s32.totalorder %s20, 0
    %p252 = por %p250, %p251
    %p253 = scmp.le.s32.totalorder 1, %s14
    %p254 = scmp.lt.s32.totalorder %s14, 3
    %p255 = pnand %p253, %p254
    %p256 = pneg %p255
    // Predicated region
    $region9: #{double_conv.4} parent=5 // pred_check
      _
    $region10: #{double_conv.4} parent=5 // pred_check_branch
      %258 = sbr.rel (%p255) target = $region12
    $region11: #{double_conv.4} parent=5 // pred_region
      %s259 = ssub.s32 %s14, 1
      // Predicated region
      $region13: #{double_conv.4} parent=11 // pred_check
        %p260 = pneg %p147
      $region14: #{double_conv.4} parent=11 // pred_check_branch
        %262 = sbr.rel (%p260) target = $region16
      $region15: #{double_conv.4} parent=11 // pred_region
        _
      $region16: #{double_conv.4} parent=11 // pred_fallthru
        _
      // Predicated region
      $region17: #{double_conv.4} parent=11 // pred_check
        %p263 = pneg %p168
      $region18: #{double_conv.4} parent=11 // pred_check_branch
        %265 = sbr.rel (%p263) target = $region20
      $region19: #{double_conv.4} parent=11 // pred_region
        _
      $region20: #{double_conv.4} parent=11 // pred_fallthru
        _
      // Predicated region
      $region21: #{double_conv.4} parent=11 // pred_check
        %p266 = pneg %p189
      $region22: #{double_conv.4} parent=11 // pred_check_branch
        %268 = sbr.rel (%p266) target = $region24
      $region23: #{double_conv.4} parent=11 // pred_region
        _
      $region24: #{double_conv.4} parent=11 // pred_fallthru
        _
    $region12: #{double_conv.4} parent=5 // pred_fallthru
      _
    %p269 = scmp.lt.s32.totalorder %s14, 2
    // Predicated region
    $region25: #{double_conv.4} parent=5 // pred_check
      %p270 = pneg %p269
    $region26: #{double_conv.4} parent=5 // pred_check_branch
      %272 = sbr.rel (%p270) target = $region28
    $region27: #{double_conv.4} parent=5 // pred_region
      // Predicated region
      $region29: #{double_conv.4} parent=27 // pred_check
        %p273 = pneg %p48
      $region30: #{double_conv.4} parent=27 // pred_check_branch
        %275 = sbr.rel (%p273) target = $region32
      $region31: #{double_conv.4} parent=27 // pred_region
        %s276 = smul.u32 32, %s22
        %p277 = scmp.lt.s32.totalorder %s21, 1
        %s278 = scalar_select %p277, %s21, 1
        %p279 = scmp.lt.s32.totalorder %s276, 31
        %s280 = scalar_select %p279, %s276, 31
        %s281 = smul.addr %s278, 32
        %s282 = sadd.s32 %s280, %s281
        %s283 = smul.addr %s282, 4
        %s284 = scalar_lea.vmem %s0, %s283
        %s285 = smul.u32 32, %s22
      $region32: #{double_conv.4} parent=27 // pred_fallthru
        _
      // Predicated region
      $region33: #{double_conv.4} parent=27 // pred_check
        %p286 = pneg %p84
      $region34: #{double_conv.4} parent=27 // pred_check_branch
        %288 = sbr.rel (%p286) target = $region36
      $region35: #{double_conv.4} parent=27 // pred_region
        %s289 = smul.u32 %s22, 16
        %s290 = ssub.s32 %s289, 1
        %p291 = scmp.gt.s32.totalorder %s290, 0
        %s292 = scalar_select %p291, %s290, 0
        %s293 = smul.u32 2, %s292
        %p294 = scmp.lt.s32.totalorder %s21, 1
        %s295 = scalar_select %p294, %s21, 1
        %p296 = scmp.lt.s32.totalorder %s293, 31
        %s297 = scalar_select %p296, %s293, 31
        %s298 = smul.addr %s295, 32
        %s299 = sadd.s32 %s297, %s298
        %s300 = smul.addr %s299, 4
        %s301 = scalar_lea.vmem %s1, %s300
        %s302 = smul.u32 %s22, 16
        %s303 = ssub.s32 %s302, 1
        %p304 = scmp.gt.s32.totalorder %s303, 0
        %s305 = scalar_select %p304, %s303, 0
        %s306 = smul.u32 2, %s305
      $region36: #{double_conv.4} parent=27 // pred_fallthru
        _
      // Predicated region
      $region37: #{double_conv.4} parent=27 // pred_check
        %p307 = pneg %p120
      $region38: #{double_conv.4} parent=27 // pred_check_branch
        %309 = sbr.rel (%p307) target = $region40
      $region39: #{double_conv.4} parent=27 // pred_region
        %s310 = sadd.s32 %s22, 1
        %s311 = smul.u32 %s310, 16
        %p312 = scmp.lt.s32.totalorder %s311, 15
        %s313 = scalar_select %p312, %s311, 15
        %s314 = smul.u32 2, %s313
        %p315 = scmp.lt.s32.totalorder %s21, 1
        %s316 = scalar_select %p315, %s21, 1
        %p317 = scmp.lt.s32.totalorder %s314, 31
        %s318 = scalar_select %p317, %s314, 31
        %s319 = smul.addr %s316, 32
        %s320 = sadd.s32 %s318, %s319
        %s321 = smul.addr %s320, 4
        %s322 = scalar_lea.vmem %s2, %s321
        %s323 = sadd.s32 %s22, 1
        %s324 = smul.u32 %s323, 16
        %p325 = scmp.lt.s32.totalorder %s324, 15
        %s326 = scalar_select %p325, %s324, 15
        %s327 = smul.u32 2, %s326
      $region40: #{double_conv.4} parent=27 // pred_fallthru
        _
    $region28: #{double_conv.4} parent=5 // pred_fallthru
      _
    %p328 = scmp.le.s32.totalorder 1, %s14
    %p329 = scmp.lt.s32.totalorder %s14, 3
    %p330 = pnand %p328, %p329
    %p331 = pneg %p330
    // Predicated region
    $region41: #{double_conv.4} parent=5 // pred_check
      _
    $region42: #{double_conv.4} parent=5 // pred_check_branch
      %333 = sbr.rel (%p330) target = $region44
    $region43: #{double_conv.4} parent=5 // pred_region
      %s334 = ssub.s32 %s14, 1
      %s335 = smul.u32 32, %s24
      %p336 = scmp.lt.s32.totalorder %s23, 1
      %s337 = scalar_select %p336, %s23, 1
      %p338 = scmp.lt.s32.totalorder %s335, 31
      %s339 = scalar_select %p338, %s335, 31
      %s340 = smul.addr %s337, 32
      %s341 = sadd.s32 %s339, %s340
      %s342 = smul.addr %s341, 4
      %s343 = scalar_lea.vmem %s0, %s342
      %p344 = pneg %p54
      %p345 = pneg %p51
      %s346 = smul.u32 %s24, 16
      %s347 = ssub.s32 %s346, 1
      %p348 = scmp.gt.s32.totalorder %s347, 0
      %s349 = scalar_select %p348, %s347, 0
      %s350 = smul.u32 2, %s349
      %p351 = scmp.lt.s32.totalorder %s23, 1
      %s352 = scalar_select %p351, %s23, 1
      %p353 = scmp.lt.s32.totalorder %s350, 31
      %s354 = scalar_select %p353, %s350, 31
      %s355 = smul.addr %s352, 32
      %s356 = sadd.s32 %s354, %s355
      %s357 = smul.addr %s356, 4
      %s358 = scalar_lea.vmem %s1, %s357
      %p359 = pneg %p90
      %p360 = pneg %p87
      %s361 = sadd.s32 %s24, 1
      %s362 = smul.u32 %s361, 16
      %p363 = scmp.lt.s32.totalorder %s362, 15
      %s364 = scalar_select %p363, %s362, 15
      %s365 = smul.u32 2, %s364
      %p366 = scmp.lt.s32.totalorder %s23, 1
      %s367 = scalar_select %p366, %s23, 1
      %p368 = scmp.lt.s32.totalorder %s365, 31
      %s369 = scalar_select %p368, %s365, 31
      %s370 = smul.addr %s367, 32
      %s371 = sadd.s32 %s369, %s370
      %s372 = smul.addr %s371, 4
      %s373 = scalar_lea.vmem %s2, %s372
      %p374 = pneg %p126
      %p375 = pneg %p123
      %p376 = pneg %p147
      %p377 = pneg %p144
      %p378 = pneg %p168
      %p379 = pneg %p165
      %p380 = pneg %p189
      %p381 = pneg %p186
      %p382 = pneg %p217
      %p383 = pneg %p214
      %s384 = smul.u32 2, %s24
      %p385 = scmp.lt.s32.totalorder %s23, 1
      %s386 = scalar_select %p385, %s23, 1
      %p387 = scmp.lt.s32.totalorder %s384, 1
      %s388 = scalar_select %p387, %s384, 1
      %s389 = smul.addr %s386, 2
      %s390 = sadd.s32 %s388, %s389
      %s391 = smul.addr %s390, 4
      %s392 = scalar_lea.vmem %s6, %s391
      %p393 = pneg %p245
      %p394 = pneg %p242
      %p395 = scmp.lt.s32.totalorder %s23, 1
      %s396 = scalar_select %p395, %s23, 1
      %p397 = scmp.lt.s32.totalorder %s24, 0
      %s398 = scalar_select %p397, %s24, 0
      %s399 = sadd.s32 %s398, %s396
      %s400 = smul.addr %s399, 8
      %s401 = scalar_lea.vmem %s7, %s400
      %s402 = smul.u32 32, %s24
      %p403 = scmp.lt.s32.totalorder %s23, 1
      %s404 = scalar_select %p403, %s23, 1
      %p405 = scmp.lt.s32.totalorder %s402, 31
      %s406 = scalar_select %p405, %s402, 31
      %s407 = smul.addr %s404, 32
      %s408 = sadd.s32 %s406, %s407
      %s409 = smul.addr %s408, 4
      %s410 = scalar_lea.vmem %s0, %s409
      %s411 = smul.u32 32, %s24
      %s412 = smul.u32 %s24, 16
      %s413 = ssub.s32 %s412, 1
      %p414 = scmp.gt.s32.totalorder %s413, 0
      %s415 = scalar_select %p414, %s413, 0
      %s416 = smul.u32 2, %s415
      %p417 = scmp.lt.s32.totalorder %s23, 1
      %s418 = scalar_select %p417, %s23, 1
      %p419 = scmp.lt.s32.totalorder %s416, 31
      %s420 = scalar_select %p419, %s416, 31
      %s421 = smul.addr %s418, 32
      %s422 = sadd.s32 %s420, %s421
      %s423 = smul.addr %s422, 4
      %s424 = scalar_lea.vmem %s1, %s423
      %s425 = smul.u32 %s24, 16
      %s426 = ssub.s32 %s425, 1
      %p427 = scmp.gt.s32.totalorder %s426, 0
      %s428 = scalar_select %p427, %s426, 0
      %s429 = smul.u32 2, %s428
      %s430 = sadd.s32 %s24, 1
      %s431 = smul.u32 %s430, 16
      %p432 = scmp.lt.s32.totalorder %s431, 15
      %s433 = scalar_select %p432, %s431, 15
      %s434 = smul.u32 2, %s433
      %p435 = scmp.lt.s32.totalorder %s23, 1
      %s436 = scalar_select %p435, %s23, 1
      %p437 = scmp.lt.s32.totalorder %s434, 31
      %s438 = scalar_select %p437, %s434, 31
      %s439 = smul.addr %s436, 32
      %s440 = sadd.s32 %s438, %s439
      %s441 = smul.addr %s440, 4
      %s442 = scalar_lea.vmem %s2, %s441
      %s443 = sadd.s32 %s24, 1
      %s444 = smul.u32 %s443, 16
      %p445 = scmp.lt.s32.totalorder %s444, 15
      %s446 = scalar_select %p445, %s444, 15
      %s447 = smul.u32 2, %s446
      %s448 = smul.u32 2, %s24
      %p449 = scmp.lt.s32.totalorder %s23, 1
      %s450 = scalar_select %p449, %s23, 1
      %p451 = scmp.lt.s32.totalorder %s448, 1
      %s452 = scalar_select %p451, %s448, 1
      %s453 = smul.addr %s450, 2
      %s454 = sadd.s32 %s452, %s453
      %s455 = smul.addr %s454, 4
      %s456 = scalar_lea.vmem %s6, %s455
      %s457 = smul.u32 2, %s24
      %p458 = scmp.lt.s32.totalorder %s23, 1
      %s459 = scalar_select %p458, %s23, 1
      %p460 = scmp.lt.s32.totalorder %s24, 0
      %s461 = scalar_select %p460, %s24, 0
      %s462 = sadd.s32 %s461, %s459
      %s463 = smul.addr %s462, 8
      %s464 = scalar_lea.vmem %s7, %s463
      %v466 = vld [vmem:[%s4] sm:$0x1]
      %v467 = vld [vmem:[%s5] sm:$0x1]
      %v468 = vld [vmem:[%s410] sm:$0xf]
      %v469 = vld [vmem:[%s410 + $0x4] sm:$0xf]
      %v470 = vld [vmem:[%s410 + $0x8] sm:$0xf]
      %v471 = vld [vmem:[%s410 + $0xc] sm:$0xf]
      %v472 = vld [vmem:[%s410 + $0x10] sm:$0xf]
      %v473 = vld [vmem:[%s410 + $0x14] sm:$0xf]
      %v474 = vld [vmem:[%s410 + $0x18] sm:$0xf]
      %v475 = vld [vmem:[%s410 + $0x1c] sm:$0xf]
      %v476 = vld [vmem:[%s410 + $0x20] sm:$0xf]
      %v477 = vld [vmem:[%s410 + $0x24] sm:$0xf]
      %v478 = vld [vmem:[%s410 + $0x28] sm:$0xf]
      %v479 = vld [vmem:[%s410 + $0x2c] sm:$0xf]
      %v480 = vld [vmem:[%s410 + $0x30] sm:$0xf]
      %v481 = vld [vmem:[%s410 + $0x34] sm:$0xf]
      %v482 = vld [vmem:[%s410 + $0x38] sm:$0xf]
      %v483 = vld [vmem:[%s410 + $0x3c] sm:$0xf]
      %v484 = vld [vmem:[%s410 + $0x40] sm:$0xf]
      %v485 = vld [vmem:[%s410 + $0x44] sm:$0xf]
      %v486 = vld [vmem:[%s410 + $0x48] sm:$0xf]
      %v487 = vld [vmem:[%s410 + $0x4c] sm:$0xf]
      %v488 = vld [vmem:[%s410 + $0x50] sm:$0xf]
      %v489 = vld [vmem:[%s410 + $0x54] sm:$0xf]
      %v490 = vld [vmem:[%s410 + $0x58] sm:$0xf]
      %v491 = vld [vmem:[%s410 + $0x5c] sm:$0xf]
      %v492 = vld [vmem:[%s410 + $0x60] sm:$0xf]
      %v493 = vld [vmem:[%s410 + $0x64] sm:$0xf]
      %v494 = vld [vmem:[%s410 + $0x68] sm:$0xf]
      %v495 = vld [vmem:[%s410 + $0x6c] sm:$0xf]
      %v496 = vld [vmem:[%s410 + $0x70] sm:$0xf]
      %v497 = vld [vmem:[%s410 + $0x74] sm:$0xf]
      %v498 = vld [vmem:[%s410 + $0x78] sm:$0xf]
      %v499 = vld [vmem:[%s410 + $0x7c] sm:$0xf]
      %v500 = vunpack.c.l.bf16 %v468
      %v501 = vunpack.c.l.bf16 %v469
      %v502 = vunpack.c.l.bf16 %v470
      %v503 = vunpack.c.l.bf16 %v471
      %v504 = vunpack.c.l.bf16 %v472
      %v505 = vunpack.c.l.bf16 %v473
      %v506 = vunpack.c.l.bf16 %v474
      %v507 = vunpack.c.l.bf16 %v475
      %v508 = vunpack.c.l.bf16 %v476
      %v509 = vunpack.c.l.bf16 %v477
      %v510 = vunpack.c.l.bf16 %v478
      %v511 = vunpack.c.l.bf16 %v479
      %v512 = vunpack.c.l.bf16 %v480
      %v513 = vunpack.c.l.bf16 %v481
      %v514 = vunpack.c.l.bf16 %v482
      %v515 = vunpack.c.l.bf16 %v483
      %v516 = vunpack.c.l.bf16 %v484
      %v517 = vunpack.c.l.bf16 %v485
      %v518 = vunpack.c.l.bf16 %v486
      %v519 = vunpack.c.l.bf16 %v487
      %v520 = vunpack.c.l.bf16 %v488
      %v521 = vunpack.c.l.bf16 %v489
      %v522 = vunpack.c.l.bf16 %v490
      %v523 = vunpack.c.l.bf16 %v491
      %v524 = vunpack.c.l.bf16 %v492
      %v525 = vunpack.c.l.bf16 %v493
      %v526 = vunpack.c.l.bf16 %v494
      %v527 = vunpack.c.l.bf16 %v495
      %v528 = vunpack.c.l.bf16 %v496
      %v529 = vunpack.c.l.bf16 %v497
      %v530 = vunpack.c.l.bf16 %v498
      %v531 = vunpack.c.l.bf16 %v499
      %v533 = vlaneseq
      %v534 = vshrl.u32 %v533, 7
      %v535 = vsub.s32 0, %v534
      %v536 = vrot.slane %v466, %v535
      %v538 = vmul.f32 %v500, %v536
      %v539 = vmul.f32 %v501, %v536
      %v540 = vmul.f32 %v502, %v536
      %v541 = vmul.f32 %v503, %v536
      %v542 = vmul.f32 %v504, %v536
      %v543 = vmul.f32 %v505, %v536
      %v544 = vmul.f32 %v506, %v536
      %v545 = vmul.f32 %v507, %v536
      %v546 = vmul.f32 %v508, %v536
      %v547 = vmul.f32 %v509, %v536
      %v548 = vmul.f32 %v510, %v536
      %v549 = vmul.f32 %v511, %v536
      %v550 = vmul.f32 %v512, %v536
      %v551 = vmul.f32 %v513, %v536
      %v552 = vmul.f32 %v514, %v536
      %v553 = vmul.f32 %v515, %v536
      %v554 = vmul.f32 %v516, %v536
      %v555 = vmul.f32 %v517, %v536
      %v556 = vmul.f32 %v518, %v536
      %v557 = vmul.f32 %v519, %v536
      %v558 = vmul.f32 %v520, %v536
      %v559 = vmul.f32 %v521, %v536
      %v560 = vmul.f32 %v522, %v536
      %v561 = vmul.f32 %v523, %v536
      %v562 = vmul.f32 %v524, %v536
      %v563 = vmul.f32 %v525, %v536
      %v564 = vmul.f32 %v526, %v536
      %v565 = vmul.f32 %v527, %v536
      %v566 = vmul.f32 %v528, %v536
      %v567 = vmul.f32 %v529, %v536
      %v568 = vmul.f32 %v530, %v536
      %v569 = vmul.f32 %v531, %v536
      %v571 = vlaneseq
      %v572 = vshrl.u32 %v571, 7
      %v573 = vsub.s32 0, %v572
      %v574 = vrot.slane %v467, %v573
      %v576 = vadd.f32 %v538, %v574
      %v577 = vadd.f32 %v539, %v574
      %v578 = vadd.f32 %v540, %v574
      %v579 = vadd.f32 %v541, %v574
      %v580 = vadd.f32 %v542, %v574
      %v581 = vadd.f32 %v543, %v574
      %v582 = vadd.f32 %v544, %v574
      %v583 = vadd.f32 %v545, %v574
      %v584 = vadd.f32 %v546, %v574
      %v585 = vadd.f32 %v547, %v574
      %v586 = vadd.f32 %v548, %v574
      %v587 = vadd.f32 %v549, %v574
      %v588 = vadd.f32 %v550, %v574
      %v589 = vadd.f32 %v551, %v574
      %v590 = vadd.f32 %v552, %v574
      %v591 = vadd.f32 %v553, %v574
      %v592 = vadd.f32 %v554, %v574
      %v593 = vadd.f32 %v555, %v574
      %v594 = vadd.f32 %v556, %v574
      %v595 = vadd.f32 %v557, %v574
      %v596 = vadd.f32 %v558, %v574
      %v597 = vadd.f32 %v559, %v574
      %v598 = vadd.f32 %v560, %v574
      %v599 = vadd.f32 %v561, %v574
      %v600 = vadd.f32 %v562, %v574
      %v601 = vadd.f32 %v563, %v574
      %v602 = vadd.f32 %v564, %v574
      %v603 = vadd.f32 %v565, %v574
      %v604 = vadd.f32 %v566, %v574
      %v605 = vadd.f32 %v567, %v574
      %v606 = vadd.f32 %v568, %v574
      %v607 = vadd.f32 %v569, %v574
      %v608 = vmax.f32 %v576, 0.0
      %v609 = vmax.f32 %v577, 0.0
      %v610 = vmax.f32 %v578, 0.0
      %v611 = vmax.f32 %v579, 0.0
      %v612 = vmax.f32 %v580, 0.0
      %v613 = vmax.f32 %v581, 0.0
      %v614 = vmax.f32 %v582, 0.0
      %v615 = vmax.f32 %v583, 0.0
      %v616 = vmax.f32 %v584, 0.0
      %v617 = vmax.f32 %v585, 0.0
      %v618 = vmax.f32 %v586, 0.0
      %v619 = vmax.f32 %v587, 0.0
      %v620 = vmax.f32 %v588, 0.0
      %v621 = vmax.f32 %v589, 0.0
      %v622 = vmax.f32 %v590, 0.0
      %v623 = vmax.f32 %v591, 0.0
      %v624 = vmax.f32 %v592, 0.0
      %v625 = vmax.f32 %v593, 0.0
      %v626 = vmax.f32 %v594, 0.0
      %v627 = vmax.f32 %v595, 0.0
      %v628 = vmax.f32 %v596, 0.0
      %v629 = vmax.f32 %v597, 0.0
      %v630 = vmax.f32 %v598, 0.0
      %v631 = vmax.f32 %v599, 0.0
      %v632 = vmax.f32 %v600, 0.0
      %v633 = vmax.f32 %v601, 0.0
      %v634 = vmax.f32 %v602, 0.0
      %v635 = vmax.f32 %v603, 0.0
      %v636 = vmax.f32 %v604, 0.0
      %v637 = vmax.f32 %v605, 0.0
      %v638 = vmax.f32 %v606, 0.0
      %v639 = vmax.f32 %v607, 0.0
      %v640 = vpack.c.bf16 %v609, %v608
      %v641 = vpack.c.bf16 %v611, %v610
      %v642 = vpack.c.bf16 %v613, %v612
      %v643 = vpack.c.bf16 %v615, %v614
      %v644 = vpack.c.bf16 %v617, %v616
      %v645 = vpack.c.bf16 %v619, %v618
      %v646 = vpack.c.bf16 %v621, %v620
      %v647 = vpack.c.bf16 %v623, %v622
      %v648 = vpack.c.bf16 %v625, %v624
      %v649 = vpack.c.bf16 %v627, %v626
      %v650 = vpack.c.bf16 %v629, %v628
      %v651 = vpack.c.bf16 %v631, %v630
      %v652 = vpack.c.bf16 %v633, %v632
      %v653 = vpack.c.bf16 %v635, %v634
      %v654 = vpack.c.bf16 %v637, %v636
      %v655 = vpack.c.bf16 %v639, %v638
      %v656 = vld [vmem:[%s424] sm:$0xf]
      %v657 = vld [vmem:[%s424 + $0x4] sm:$0xf]
      %v658 = vunpack.c.l.bf16 %v656
      %v659 = vunpack.c.l.bf16 %v657
      %v660 = vmul.f32 %v658, %v536
      %v661 = vmul.f32 %v659, %v536
      %v662 = vadd.f32 %v660, %v574
      %v663 = vadd.f32 %v661, %v574
      %v664 = vmax.f32 %v662, 0.0
      %v665 = vmax.f32 %v663, 0.0
      %v666 = vpack.c.bf16 %v665, %v664
      %p667 = scmp.gt.s32.totalorder %s24, 0
      %s668 = scalar_select %p667, 1, 0
      %s669 = scvt.s32.f32 %s668
      %p671 = scmp.ne.f32.partialorder %s669, %s669
      %s672 = sshrl.u32 %s669, 16
      %s673 = sand.u32 %s672, 1
      %s674 = sadd.s32 32767, %s673
      %s675 = sadd.s32 %s669, %s674
      %s676 = sand.u32 %s675, 4294901760
      %s677 = scalar_select %p671, 2143289344, %s676
      %s679 = sshrl.u32 %s677, 16
      %s680 = sshll.u32 %s679, 16
      %s681 = sor.u32 %s679, %s680
      %v682 = vstv %s681
      %v684 = vmul.bf16 %v666, %v682
      %v685 = vld [vmem:[%s442] sm:$0xf]
      %v686 = vld [vmem:[%s442 + $0x4] sm:$0xf]
      %v687 = vunpack.c.l.bf16 %v685
      %v688 = vunpack.c.l.bf16 %v686
      %v689 = vmul.f32 %v687, %v536
      %v690 = vmul.f32 %v688, %v536
      %v691 = vadd.f32 %v689, %v574
      %v692 = vadd.f32 %v690, %v574
      %v693 = vmax.f32 %v691, 0.0
      %v694 = vmax.f32 %v692, 0.0
      %v695 = vpack.c.bf16 %v694, %v693
      %p696 = scmp.lt.s32.totalorder %s24, 0
      %s697 = scalar_select %p696, 1, 0
      %s698 = scvt.s32.f32 %s697
      %p700 = scmp.ne.f32.partialorder %s698, %s698
      %s701 = sshrl.u32 %s698, 16
      %s702 = sand.u32 %s701, 1
      %s703 = sadd.s32 32767, %s702
      %s704 = sadd.s32 %s698, %s703
      %s705 = sand.u32 %s704, 4294901760
      %s706 = scalar_select %p700, 2143289344, %s705
      %s708 = sshrl.u32 %s706, 16
      %s709 = sshll.u32 %s708, 16
      %s710 = sor.u32 %s708, %s709
      %v711 = vstv %s710
      %v713 = vmul.bf16 %v695, %v711
      %v715 = vshrl.u32 %v684, 16
      %v717 = vrot.slane %v715, 7
      %v718 = vshll.u32 %v684, 16
      %v720 = vor.u32 %v717, %v718
      %vm723 = vsmask.f32 256
      %v725 = vshrl.u32 %v640, 16
      %v727 = vrot.slane %v725, 7
      %v728 = vshll.u32 %v640, 16
      %v730 = vor.u32 %v727, %v728
      %v732 = vshrl.u32 %v641, 16
      %v734 = vrot.slane %v732, 7
      %v735 = vshll.u32 %v641, 16
      %v737 = vor.u32 %v734, %v735
      %v738 = vsel %vm723, %v727, %v737
      %v740 = vshrl.u32 %v642, 16
      %v742 = vrot.slane %v740, 7
      %v743 = vshll.u32 %v642, 16
      %v745 = vor.u32 %v742, %v743
      %v746 = vsel %vm723, %v734, %v745
      %v748 = vshrl.u32 %v643, 16
      %v750 = vrot.slane %v748, 7
      %v751 = vshll.u32 %v643, 16
      %v753 = vor.u32 %v750, %v751
      %v754 = vsel %vm723, %v742, %v753
      %v756 = vshrl.u32 %v644, 16
      %v758 = vrot.slane %v756, 7
      %v759 = vshll.u32 %v644, 16
      %v761 = vor.u32 %v758, %v759
      %v762 = vsel %vm723, %v750, %v761
      %v764 = vshrl.u32 %v645, 16
      %v766 = vrot.slane %v764, 7
      %v767 = vshll.u32 %v645, 16
      %v769 = vor.u32 %v766, %v767
      %v770 = vsel %vm723, %v758, %v769
      %v772 = vshrl.u32 %v646, 16
      %v774 = vrot.slane %v772, 7
      %v775 = vshll.u32 %v646, 16
      %v777 = vor.u32 %v774, %v775
      %v778 = vsel %vm723, %v766, %v777
      %v780 = vshrl.u32 %v647, 16
      %v782 = vrot.slane %v780, 7
      %v783 = vshll.u32 %v647, 16
      %v785 = vor.u32 %v782, %v783
      %v786 = vsel %vm723, %v774, %v785
      %v788 = vshrl.u32 %v648, 16
      %v790 = vrot.slane %v788, 7
      %v791 = vshll.u32 %v648, 16
      %v793 = vor.u32 %v790, %v791
      %v794 = vsel %vm723, %v782, %v793
      %v796 = vshrl.u32 %v649, 16
      %v798 = vrot.slane %v796, 7
      %v799 = vshll.u32 %v649, 16
      %v801 = vor.u32 %v798, %v799
      %v802 = vsel %vm723, %v790, %v801
      %v804 = vshrl.u32 %v650, 16
      %v806 = vrot.slane %v804, 7
      %v807 = vshll.u32 %v650, 16
      %v809 = vor.u32 %v806, %v807
      %v810 = vsel %vm723, %v798, %v809
      %v812 = vshrl.u32 %v651, 16
      %v814 = vrot.slane %v812, 7
      %v815 = vshll.u32 %v651, 16
      %v817 = vor.u32 %v814, %v815
      %v818 = vsel %vm723, %v806, %v817
      %v820 = vshrl.u32 %v652, 16
      %v822 = vrot.slane %v820, 7
      %v823 = vshll.u32 %v652, 16
      %v825 = vor.u32 %v822, %v823
      %v826 = vsel %vm723, %v814, %v825
      %v828 = vshrl.u32 %v653, 16
      %v830 = vrot.slane %v828, 7
      %v831 = vshll.u32 %v653, 16
      %v833 = vor.u32 %v830, %v831
      %v834 = vsel %vm723, %v822, %v833
      %v836 = vshrl.u32 %v654, 16
      %v838 = vrot.slane %v836, 7
      %v839 = vshll.u32 %v654, 16
      %v841 = vor.u32 %v838, %v839
      %v842 = vsel %vm723, %v830, %v841
      %v844 = vshrl.u32 %v655, 16
      %v846 = vrot.slane %v844, 7
      %v847 = vshll.u32 %v655, 16
      %v849 = vor.u32 %v846, %v847
      %v850 = vsel %vm723, %v838, %v849
      %v869 = vshrl.u32 %v713, 16
      %v871 = vrot.slane %v869, 7
      %v872 = vshll.u32 %v713, 16
      %v874 = vor.u32 %v871, %v872
      %vm877 = vcmask 1040384
      %vm878 = vmand %vm877, %vm723
      %v879 = vsel %vm878, 0, %v720
      %v880 = vsel %vm878, %v717, %v730
      %v881 = vsel %vm878, %v846, %v874
      %v882 = vsel %vm878, %v871, 0
      %v883 = vlaneseq
      %v884 = vshrl.u32 %v883, 7
      %v885 = vadd.s32 %v884, 8
      %v886 = vadd.s32 %v884, 16
      %v887 = vadd.s32 %v884, 24
      %v888 = vadd.s32 %v884, 32
      %v889 = vadd.s32 %v884, 40
      %v890 = vadd.s32 %v884, 48
      %v891 = vadd.s32 %v884, 56
      %v892 = vadd.s32 %v884, 64
      %v893 = vadd.s32 %v884, 72
      %v894 = vadd.s32 %v884, 80
      %v895 = vadd.s32 %v884, 88
      %v896 = vadd.s32 %v884, 96
      %v897 = vadd.s32 %v884, 104
      %v898 = vadd.s32 %v884, 112
      %v899 = vadd.s32 %v884, 120
      %v900 = vadd.s32 %v884, 128
      %v901 = vadd.s32 %v884, 136
      %v902 = vadd.s32 %v884, 144
      %v903 = vadd.s32 %v884, 152
      %v904 = vadd.s32 %v884, 160
      %v905 = vadd.s32 %v884, 168
      %v906 = vadd.s32 %v884, 176
      %v907 = vadd.s32 %v884, 184
      %v908 = vadd.s32 %v884, 192
      %v909 = vadd.s32 %v884, 200
      %v910 = vadd.s32 %v884, 208
      %v911 = vadd.s32 %v884, 216
      %v912 = vadd.s32 %v884, 224
      %v913 = vadd.s32 %v884, 232
      %v914 = vadd.s32 %v884, 240
      %v915 = vadd.s32 %v884, 248
      %vm916 = vcmp.lt.s32.totalorder %v884, 0
      %v917 = vsub.s32 0, %v884
      %v918 = vsel %vm916, %v917, %v884
      %v919 = vshrl.u32 %v918, 4
      %v920 = vand.u32 %v918, 15
      %v921 = vsub.s32 0, %v920
      %v922 = vsel %vm916, %v921, %v920
      %vm923 = vcmp.lt.s32.totalorder %v885, 0
      %v924 = vsub.s32 0, %v885
      %v925 = vsel %vm923, %v924, %v885
      %v926 = vshrl.u32 %v925, 4
      %v927 = vand.u32 %v925, 15
      %v928 = vsub.s32 0, %v927
      %v929 = vsel %vm923, %v928, %v927
      %vm930 = vcmp.lt.s32.totalorder %v886, 0
      %v931 = vsub.s32 0, %v886
      %v932 = vsel %vm930, %v931, %v886
      %v933 = vshrl.u32 %v932, 4
      %v934 = vand.u32 %v932, 15
      %v935 = vsub.s32 0, %v934
      %v936 = vsel %vm930, %v935, %v934
      %vm937 = vcmp.lt.s32.totalorder %v887, 0
      %v938 = vsub.s32 0, %v887
      %v939 = vsel %vm937, %v938, %v887
      %v940 = vshrl.u32 %v939, 4
      %v941 = vand.u32 %v939, 15
      %v942 = vsub.s32 0, %v941
      %v943 = vsel %vm937, %v942, %v941
      %vm944 = vcmp.lt.s32.totalorder %v888, 0
      %v945 = vsub.s32 0, %v888
      %v946 = vsel %vm944, %v945, %v888
      %v947 = vshrl.u32 %v946, 4
      %v948 = vand.u32 %v946, 15
      %v949 = vsub.s32 0, %v948
      %v950 = vsel %vm944, %v949, %v948
      %vm951 = vcmp.lt.s32.totalorder %v889, 0
      %v952 = vsub.s32 0, %v889
      %v953 = vsel %vm951, %v952, %v889
      %v954 = vshrl.u32 %v953, 4
      %v955 = vand.u32 %v953, 15
      %v956 = vsub.s32 0, %v955
      %v957 = vsel %vm951, %v956, %v955
      %vm958 = vcmp.lt.s32.totalorder %v890, 0
      %v959 = vsub.s32 0, %v890
      %v960 = vsel %vm958, %v959, %v890
      %v961 = vshrl.u32 %v960, 4
      %v962 = vand.u32 %v960, 15
      %v963 = vsub.s32 0, %v962
      %v964 = vsel %vm958, %v963, %v962
      %vm965 = vcmp.lt.s32.totalorder %v891, 0
      %v966 = vsub.s32 0, %v891
      %v967 = vsel %vm965, %v966, %v891
      %v968 = vshrl.u32 %v967, 4
      %v969 = vand.u32 %v967, 15
      %v970 = vsub.s32 0, %v969
      %v971 = vsel %vm965, %v970, %v969
      %vm972 = vcmp.lt.s32.totalorder %v892, 0
      %v973 = vsub.s32 0, %v892
      %v974 = vsel %vm972, %v973, %v892
      %v975 = vshrl.u32 %v974, 4
      %v976 = vand.u32 %v974, 15
      %v977 = vsub.s32 0, %v976
      %v978 = vsel %vm972, %v977, %v976
      %vm979 = vcmp.lt.s32.totalorder %v893, 0
      %v980 = vsub.s32 0, %v893
      %v981 = vsel %vm979, %v980, %v893
      %v982 = vshrl.u32 %v981, 4
      %v983 = vand.u32 %v981, 15
      %v984 = vsub.s32 0, %v983
      %v985 = vsel %vm979, %v984, %v983
      %vm986 = vcmp.lt.s32.totalorder %v894, 0
      %v987 = vsub.s32 0, %v894
      %v988 = vsel %vm986, %v987, %v894
      %v989 = vshrl.u32 %v988, 4
      %v990 = vand.u32 %v988, 15
      %v991 = vsub.s32 0, %v990
      %v992 = vsel %vm986, %v991, %v990
      %vm993 = vcmp.lt.s32.totalorder %v895, 0
      %v994 = vsub.s32 0, %v895
      %v995 = vsel %vm993, %v994, %v895
      %v996 = vshrl.u32 %v995, 4
      %v997 = vand.u32 %v995, 15
      %v998 = vsub.s32 0, %v997
      %v999 = vsel %vm993, %v998, %v997
      %vm1000 = vcmp.lt.s32.totalorder %v896, 0
      %v1001 = vsub.s32 0, %v896
      %v1002 = vsel %vm1000, %v1001, %v896
      %v1003 = vshrl.u32 %v1002, 4
      %v1004 = vand.u32 %v1002, 15
      %v1005 = vsub.s32 0, %v1004
      %v1006 = vsel %vm1000, %v1005, %v1004
      %vm1007 = vcmp.lt.s32.totalorder %v897, 0
      %v1008 = vsub.s32 0, %v897
      %v1009 = vsel %vm1007, %v1008, %v897
      %v1010 = vshrl.u32 %v1009, 4
      %v1011 = vand.u32 %v1009, 15
      %v1012 = vsub.s32 0, %v1011
      %v1013 = vsel %vm1007, %v1012, %v1011
      %vm1014 = vcmp.lt.s32.totalorder %v898, 0
      %v1015 = vsub.s32 0, %v898
      %v1016 = vsel %vm1014, %v1015, %v898
      %v1017 = vshrl.u32 %v1016, 4
      %v1018 = vand.u32 %v1016, 15
      %v1019 = vsub.s32 0, %v1018
      %v1020 = vsel %vm1014, %v1019, %v1018
      %vm1021 = vcmp.lt.s32.totalorder %v899, 0
      %v1022 = vsub.s32 0, %v899
      %v1023 = vsel %vm1021, %v1022, %v899
      %v1024 = vshrl.u32 %v1023, 4
      %v1025 = vand.u32 %v1023, 15
      %v1026 = vsub.s32 0, %v1025
      %v1027 = vsel %vm1021, %v1026, %v1025
      %vm1028 = vcmp.lt.s32.totalorder %v900, 0
      %v1029 = vsub.s32 0, %v900
      %v1030 = vsel %vm1028, %v1029, %v900
      %v1031 = vshrl.u32 %v1030, 4
      %v1032 = vand.u32 %v1030, 15
      %v1033 = vsub.s32 0, %v1032
      %v1034 = vsel %vm1028, %v1033, %v1032
      %vm1035 = vcmp.lt.s32.totalorder %v901, 0
      %v1036 = vsub.s32 0, %v901
      %v1037 = vsel %vm1035, %v1036, %v901
      %v1038 = vshrl.u32 %v1037, 4
      %v1039 = vand.u32 %v1037, 15
      %v1040 = vsub.s32 0, %v1039
      %v1041 = vsel %vm1035, %v1040, %v1039
      %vm1042 = vcmp.lt.s32.totalorder %v902, 0
      %v1043 = vsub.s32 0, %v902
      %v1044 = vsel %vm1042, %v1043, %v902
      %v1045 = vshrl.u32 %v1044, 4
      %v1046 = vand.u32 %v1044, 15
      %v1047 = vsub.s32 0, %v1046
      %v1048 = vsel %vm1042, %v1047, %v1046
      %vm1049 = vcmp.lt.s32.totalorder %v903, 0
      %v1050 = vsub.s32 0, %v903
      %v1051 = vsel %vm1049, %v1050, %v903
      %v1052 = vshrl.u32 %v1051, 4
      %v1053 = vand.u32 %v1051, 15
      %v1054 = vsub.s32 0, %v1053
      %v1055 = vsel %vm1049, %v1054, %v1053
      %vm1056 = vcmp.lt.s32.totalorder %v904, 0
      %v1057 = vsub.s32 0, %v904
      %v1058 = vsel %vm1056, %v1057, %v904
      %v1059 = vshrl.u32 %v1058, 4
      %v1060 = vand.u32 %v1058, 15
      %v1061 = vsub.s32 0, %v1060
      %v1062 = vsel %vm1056, %v1061, %v1060
      %vm1063 = vcmp.lt.s32.totalorder %v905, 0
      %v1064 = vsub.s32 0, %v905
      %v1065 = vsel %vm1063, %v1064, %v905
      %v1066 = vshrl.u32 %v1065, 4
      %v1067 = vand.u32 %v1065, 15
      %v1068 = vsub.s32 0, %v1067
      %v1069 = vsel %vm1063, %v1068, %v1067
      %vm1070 = vcmp.lt.s32.totalorder %v906, 0
      %v1071 = vsub.s32 0, %v906
      %v1072 = vsel %vm1070, %v1071, %v906
      %v1073 = vshrl.u32 %v1072, 4
      %v1074 = vand.u32 %v1072, 15
      %v1075 = vsub.s32 0, %v1074
      %v1076 = vsel %vm1070, %v1075, %v1074
      %vm1077 = vcmp.lt.s32.totalorder %v907, 0
      %v1078 = vsub.s32 0, %v907
      %v1079 = vsel %vm1077, %v1078, %v907
      %v1080 = vshrl.u32 %v1079, 4
      %v1081 = vand.u32 %v1079, 15
      %v1082 = vsub.s32 0, %v1081
      %v1083 = vsel %vm1077, %v1082, %v1081
      %vm1084 = vcmp.lt.s32.totalorder %v908, 0
      %v1085 = vsub.s32 0, %v908
      %v1086 = vsel %vm1084, %v1085, %v908
      %v1087 = vshrl.u32 %v1086, 4
      %v1088 = vand.u32 %v1086, 15
      %v1089 = vsub.s32 0, %v1088
      %v1090 = vsel %vm1084, %v1089, %v1088
      %vm1091 = vcmp.lt.s32.totalorder %v909, 0
      %v1092 = vsub.s32 0, %v909
      %v1093 = vsel %vm1091, %v1092, %v909
      %v1094 = vshrl.u32 %v1093, 4
      %v1095 = vand.u32 %v1093, 15
      %v1096 = vsub.s32 0, %v1095
      %v1097 = vsel %vm1091, %v1096, %v1095
      %vm1098 = vcmp.lt.s32.totalorder %v910, 0
      %v1099 = vsub.s32 0, %v910
      %v1100 = vsel %vm1098, %v1099, %v910
      %v1101 = vshrl.u32 %v1100, 4
      %v1102 = vand.u32 %v1100, 15
      %v1103 = vsub.s32 0, %v1102
      %v1104 = vsel %vm1098, %v1103, %v1102
      %vm1105 = vcmp.lt.s32.totalorder %v911, 0
      %v1106 = vsub.s32 0, %v911
      %v1107 = vsel %vm1105, %v1106, %v911
      %v1108 = vshrl.u32 %v1107, 4
      %v1109 = vand.u32 %v1107, 15
      %v1110 = vsub.s32 0, %v1109
      %v1111 = vsel %vm1105, %v1110, %v1109
      %vm1112 = vcmp.lt.s32.totalorder %v912, 0
      %v1113 = vsub.s32 0, %v912
      %v1114 = vsel %vm1112, %v1113, %v912
      %v1115 = vshrl.u32 %v1114, 4
      %v1116 = vand.u32 %v1114, 15
      %v1117 = vsub.s32 0, %v1116
      %v1118 = vsel %vm1112, %v1117, %v1116
      %vm1119 = vcmp.lt.s32.totalorder %v913, 0
      %v1120 = vsub.s32 0, %v913
      %v1121 = vsel %vm1119, %v1120, %v913
      %v1122 = vshrl.u32 %v1121, 4
      %v1123 = vand.u32 %v1121, 15
      %v1124 = vsub.s32 0, %v1123
      %v1125 = vsel %vm1119, %v1124, %v1123
      %vm1126 = vcmp.lt.s32.totalorder %v914, 0
      %v1127 = vsub.s32 0, %v914
      %v1128 = vsel %vm1126, %v1127, %v914
      %v1129 = vshrl.u32 %v1128, 4
      %v1130 = vand.u32 %v1128, 15
      %v1131 = vsub.s32 0, %v1130
      %v1132 = vsel %vm1126, %v1131, %v1130
      %vm1133 = vcmp.lt.s32.totalorder %v915, 0
      %v1134 = vsub.s32 0, %v915
      %v1135 = vsel %vm1133, %v1134, %v915
      %v1136 = vshrl.u32 %v1135, 4
      %v1137 = vand.u32 %v1135, 15
      %v1138 = vsub.s32 0, %v1137
      %v1139 = vsel %vm1133, %v1138, %v1137
      %vm1140 = vcmp.ne.s32.totalorder %v922, 0
      %vm1141 = vcmp.ne.s32.totalorder %v929, 0
      %vm1142 = vcmp.ne.s32.totalorder %v936, 0
      %vm1143 = vcmp.ne.s32.totalorder %v943, 0
      %vm1144 = vcmp.ne.s32.totalorder %v950, 0
      %vm1145 = vcmp.ne.s32.totalorder %v957, 0
      %vm1146 = vcmp.ne.s32.totalorder %v964, 0
      %vm1147 = vcmp.ne.s32.totalorder %v971, 0
      %vm1148 = vcmp.ne.s32.totalorder %v978, 0
      %vm1149 = vcmp.ne.s32.totalorder %v985, 0
      %vm1150 = vcmp.ne.s32.totalorder %v992, 0
      %vm1151 = vcmp.ne.s32.totalorder %v999, 0
      %vm1152 = vcmp.ne.s32.totalorder %v1006, 0
      %vm1153 = vcmp.ne.s32.totalorder %v1013, 0
      %vm1154 = vcmp.ne.s32.totalorder %v1020, 0
      %vm1155 = vcmp.ne.s32.totalorder %v1027, 0
      %vm1156 = vcmp.ne.s32.totalorder %v1034, 0
      %vm1157 = vcmp.ne.s32.totalorder %v1041, 0
      %vm1158 = vcmp.ne.s32.totalorder %v1048, 0
      %vm1159 = vcmp.ne.s32.totalorder %v1055, 0
      %vm1160 = vcmp.ne.s32.totalorder %v1062, 0
      %vm1161 = vcmp.ne.s32.totalorder %v1069, 0
      %vm1162 = vcmp.ne.s32.totalorder %v1076, 0
      %vm1163 = vcmp.ne.s32.totalorder %v1083, 0
      %vm1164 = vcmp.ne.s32.totalorder %v1090, 0
      %vm1165 = vcmp.ne.s32.totalorder %v1097, 0
      %vm1166 = vcmp.ne.s32.totalorder %v1104, 0
      %vm1167 = vcmp.ne.s32.totalorder %v1111, 0
      %vm1168 = vcmp.ne.s32.totalorder %v1118, 0
      %vm1169 = vcmp.ne.s32.totalorder %v1125, 0
      %vm1170 = vcmp.ne.s32.totalorder %v1132, 0
      %vm1171 = vcmp.ne.s32.totalorder %v1139, 0
      %vm1172 = vcmp.lt.s32.totalorder %v922, 0
      %vm1173 = vcmp.lt.s32.totalorder %v929, 0
      %vm1174 = vcmp.lt.s32.totalorder %v936, 0
      %vm1175 = vcmp.lt.s32.totalorder %v943, 0
      %vm1176 = vcmp.lt.s32.totalorder %v950, 0
      %vm1177 = vcmp.lt.s32.totalorder %v957, 0
      %vm1178 = vcmp.lt.s32.totalorder %v964, 0
      %vm1179 = vcmp.lt.s32.totalorder %v971, 0
      %vm1180 = vcmp.lt.s32.totalorder %v978, 0
      %vm1181 = vcmp.lt.s32.totalorder %v985, 0
      %vm1182 = vcmp.lt.s32.totalorder %v992, 0
      %vm1183 = vcmp.lt.s32.totalorder %v999, 0
      %vm1184 = vcmp.lt.s32.totalorder %v1006, 0
      %vm1185 = vcmp.lt.s32.totalorder %v1013, 0
      %vm1186 = vcmp.lt.s32.totalorder %v1020, 0
      %vm1187 = vcmp.lt.s32.totalorder %v1027, 0
      %vm1188 = vcmp.lt.s32.totalorder %v1034, 0
      %vm1189 = vcmp.lt.s32.totalorder %v1041, 0
      %vm1190 = vcmp.lt.s32.totalorder %v1048, 0
      %vm1191 = vcmp.lt.s32.totalorder %v1055, 0
      %vm1192 = vcmp.lt.s32.totalorder %v1062, 0
      %vm1193 = vcmp.lt.s32.totalorder %v1069, 0
      %vm1194 = vcmp.lt.s32.totalorder %v1076, 0
      %vm1195 = vcmp.lt.s32.totalorder %v1083, 0
      %vm1196 = vcmp.lt.s32.totalorder %v1090, 0
      %vm1197 = vcmp.lt.s32.totalorder %v1097, 0
      %vm1198 = vcmp.lt.s32.totalorder %v1104, 0
      %vm1199 = vcmp.lt.s32.totalorder %v1111, 0
      %vm1200 = vcmp.lt.s32.totalorder %v1118, 0
      %vm1201 = vcmp.lt.s32.totalorder %v1125, 0
      %vm1202 = vcmp.lt.s32.totalorder %v1132, 0
      %vm1203 = vcmp.lt.s32.totalorder %v1139, 0
      %vm1204 = vmand %vm1172, %vm1140
      %vm1205 = vmand %vm1173, %vm1141
      %vm1206 = vmand %vm1174, %vm1142
      %vm1207 = vmand %vm1175, %vm1143
      %vm1208 = vmand %vm1176, %vm1144
      %vm1209 = vmand %vm1177, %vm1145
      %vm1210 = vmand %vm1178, %vm1146
      %vm1211 = vmand %vm1179, %vm1147
      %vm1212 = vmand %vm1180, %vm1148
      %vm1213 = vmand %vm1181, %vm1149
      %vm1214 = vmand %vm1182, %vm1150
      %vm1215 = vmand %vm1183, %vm1151
      %vm1216 = vmand %vm1184, %vm1152
      %vm1217 = vmand %vm1185, %vm1153
      %vm1218 = vmand %vm1186, %vm1154
      %vm1219 = vmand %vm1187, %vm1155
      %vm1220 = vmand %vm1188, %vm1156
      %vm1221 = vmand %vm1189, %vm1157
      %vm1222 = vmand %vm1190, %vm1158
      %vm1223 = vmand %vm1191, %vm1159
      %vm1224 = vmand %vm1192, %vm1160
      %vm1225 = vmand %vm1193, %vm1161
      %vm1226 = vmand %vm1194, %vm1162
      %vm1227 = vmand %vm1195, %vm1163
      %vm1228 = vmand %vm1196, %vm1164
      %vm1229 = vmand %vm1197, %vm1165
      %vm1230 = vmand %vm1198, %vm1166
      %vm1231 = vmand %vm1199, %vm1167
      %vm1232 = vmand %vm1200, %vm1168
      %vm1233 = vmand %vm1201, %vm1169
      %vm1234 = vmand %vm1202, %vm1170
      %vm1235 = vmand %vm1203, %vm1171
      %v1236 = vadd.s32 %v922, 16
      %v1237 = vadd.s32 %v929, 16
      %v1238 = vadd.s32 %v936, 16
      %v1239 = vadd.s32 %v943, 16
      %v1240 = vadd.s32 %v950, 16
      %v1241 = vadd.s32 %v957, 16
      %v1242 = vadd.s32 %v964, 16
      %v1243 = vadd.s32 %v971, 16
      %v1244 = vadd.s32 %v978, 16
      %v1245 = vadd.s32 %v985, 16
      %v1246 = vadd.s32 %v992, 16
      %v1247 = vadd.s32 %v999, 16
      %v1248 = vadd.s32 %v1006, 16
      %v1249 = vadd.s32 %v1013, 16
      %v1250 = vadd.s32 %v1020, 16
      %v1251 = vadd.s32 %v1027, 16
      %v1252 = vadd.s32 %v1034, 16
      %v1253 = vadd.s32 %v1041, 16
      %v1254 = vadd.s32 %v1048, 16
      %v1255 = vadd.s32 %v1055, 16
      %v1256 = vadd.s32 %v1062, 16
      %v1257 = vadd.s32 %v1069, 16
      %v1258 = vadd.s32 %v1076, 16
      %v1259 = vadd.s32 %v1083, 16
      %v1260 = vadd.s32 %v1090, 16
      %v1261 = vadd.s32 %v1097, 16
      %v1262 = vadd.s32 %v1104, 16
      %v1263 = vadd.s32 %v1111, 16
      %v1264 = vadd.s32 %v1118, 16
      %v1265 = vadd.s32 %v1125, 16
      %v1266 = vadd.s32 %v1132, 16
      %v1267 = vadd.s32 %v1139, 16
      %v1268 = vsel %vm1204, %v1236, %v922
      %v1269 = vsel %vm1205, %v1237, %v929
      %v1270 = vsel %vm1206, %v1238, %v936
      %v1271 = vsel %vm1207, %v1239, %v943
      %v1272 = vsel %vm1208, %v1240, %v950
      %v1273 = vsel %vm1209, %v1241, %v957
      %v1274 = vsel %vm1210, %v1242, %v964
      %v1275 = vsel %vm1211, %v1243, %v971
      %v1276 = vsel %vm1212, %v1244, %v978
      %v1277 = vsel %vm1213, %v1245, %v985
      %v1278 = vsel %vm1214, %v1246, %v992
      %v1279 = vsel %vm1215, %v1247, %v999
      %v1280 = vsel %vm1216, %v1248, %v1006
      %v1281 = vsel %vm1217, %v1249, %v1013
      %v1282 = vsel %vm1218, %v1250, %v1020
      %v1283 = vsel %vm1219, %v1251, %v1027
      %v1284 = vsel %vm1220, %v1252, %v1034
      %v1285 = vsel %vm1221, %v1253, %v1041
      %v1286 = vsel %vm1222, %v1254, %v1048
      %v1287 = vsel %vm1223, %v1255, %v1055
      %v1288 = vsel %vm1224, %v1256, %v1062
      %v1289 = vsel %vm1225, %v1257, %v1069
      %v1290 = vsel %vm1226, %v1258, %v1076
      %v1291 = vsel %vm1227, %v1259, %v1083
      %v1292 = vsel %vm1228, %v1260, %v1090
      %v1293 = vsel %vm1229, %v1261, %v1097
      %v1294 = vsel %vm1230, %v1262, %v1104
      %v1295 = vsel %vm1231, %v1263, %v1111
      %v1296 = vsel %vm1232, %v1264, %v1118
      %v1297 = vsel %vm1233, %v1265, %v1125
      %v1298 = vsel %vm1234, %v1266, %v1132
      %v1299 = vsel %vm1235, %v1267, %v1139
      %vm1300 = vcmp.ne.s32.totalorder %v1268, 0
      %vm1301 = vcmp.ne.s32.totalorder %v1269, 0
      %vm1302 = vcmp.ne.s32.totalorder %v1270, 0
      %vm1303 = vcmp.ne.s32.totalorder %v1271, 0
      %vm1304 = vcmp.ne.s32.totalorder %v1272, 0
      %vm1305 = vcmp.ne.s32.totalorder %v1273, 0
      %vm1306 = vcmp.ne.s32.totalorder %v1274, 0
      %vm1307 = vcmp.ne.s32.totalorder %v1275, 0
      %vm1308 = vcmp.ne.s32.totalorder %v1276, 0
      %vm1309 = vcmp.ne.s32.totalorder %v1277, 0
      %vm1310 = vcmp.ne.s32.totalorder %v1278, 0
      %vm1311 = vcmp.ne.s32.totalorder %v1279, 0
      %vm1312 = vcmp.ne.s32.totalorder %v1280, 0
      %vm1313 = vcmp.ne.s32.totalorder %v1281, 0
      %vm1314 = vcmp.ne.s32.totalorder %v1282, 0
      %vm1315 = vcmp.ne.s32.totalorder %v1283, 0
      %vm1316 = vcmp.ne.s32.totalorder %v1284, 0
      %vm1317 = vcmp.ne.s32.totalorder %v1285, 0
      %vm1318 = vcmp.ne.s32.totalorder %v1286, 0
      %vm1319 = vcmp.ne.s32.totalorder %v1287, 0
      %vm1320 = vcmp.ne.s32.totalorder %v1288, 0
      %vm1321 = vcmp.ne.s32.totalorder %v1289, 0
      %vm1322 = vcmp.ne.s32.totalorder %v1290, 0
      %vm1323 = vcmp.ne.s32.totalorder %v1291, 0
      %vm1324 = vcmp.ne.s32.totalorder %v1292, 0
      %vm1325 = vcmp.ne.s32.totalorder %v1293, 0
      %vm1326 = vcmp.ne.s32.totalorder %v1294, 0
      %vm1327 = vcmp.ne.s32.totalorder %v1295, 0
      %vm1328 = vcmp.ne.s32.totalorder %v1296, 0
      %vm1329 = vcmp.ne.s32.totalorder %v1297, 0
      %vm1330 = vcmp.ne.s32.totalorder %v1298, 0
      %vm1331 = vcmp.ne.s32.totalorder %v1299, 0
      %v1332 = vsel %vm1300, 1, 0
      %v1333 = vsel %vm1301, 1, 0
      %v1334 = vsel %vm1302, 1, 0
      %v1335 = vsel %vm1303, 1, 0
      %v1336 = vsel %vm1304, 1, 0
      %v1337 = vsel %vm1305, 1, 0
      %v1338 = vsel %vm1306, 1, 0
      %v1339 = vsel %vm1307, 1, 0
      %v1340 = vsel %vm1308, 1, 0
      %v1341 = vsel %vm1309, 1, 0
      %v1342 = vsel %vm1310, 1, 0
      %v1343 = vsel %vm1311, 1, 0
      %v1344 = vsel %vm1312, 1, 0
      %v1345 = vsel %vm1313, 1, 0
      %v1346 = vsel %vm1314, 1, 0
      %v1347 = vsel %vm1315, 1, 0
      %v1348 = vsel %vm1316, 1, 0
      %v1349 = vsel %vm1317, 1, 0
      %v1350 = vsel %vm1318, 1, 0
      %v1351 = vsel %vm1319, 1, 0
      %v1352 = vsel %vm1320, 1, 0
      %v1353 = vsel %vm1321, 1, 0
      %v1354 = vsel %vm1322, 1, 0
      %v1355 = vsel %vm1323, 1, 0
      %v1356 = vsel %vm1324, 1, 0
      %v1357 = vsel %vm1325, 1, 0
      %v1358 = vsel %vm1326, 1, 0
      %v1359 = vsel %vm1327, 1, 0
      %v1360 = vsel %vm1328, 1, 0
      %v1361 = vsel %vm1329, 1, 0
      %v1362 = vsel %vm1330, 1, 0
      %v1363 = vsel %vm1331, 1, 0
      %v1364 = vcvt.s32.f32 %v1332
      %v1365 = vcvt.s32.f32 %v1333
      %v1366 = vcvt.s32.f32 %v1334
      %v1367 = vcvt.s32.f32 %v1335
      %v1368 = vcvt.s32.f32 %v1336
      %v1369 = vcvt.s32.f32 %v1337
      %v1370 = vcvt.s32.f32 %v1338
      %v1371 = vcvt.s32.f32 %v1339
      %v1372 = vcvt.s32.f32 %v1340
      %v1373 = vcvt.s32.f32 %v1341
      %v1374 = vcvt.s32.f32 %v1342
      %v1375 = vcvt.s32.f32 %v1343
      %v1376 = vcvt.s32.f32 %v1344
      %v1377 = vcvt.s32.f32 %v1345
      %v1378 = vcvt.s32.f32 %v1346
      %v1379 = vcvt.s32.f32 %v1347
      %v1380 = vcvt.s32.f32 %v1348
      %v1381 = vcvt.s32.f32 %v1349
      %v1382 = vcvt.s32.f32 %v1350
      %v1383 = vcvt.s32.f32 %v1351
      %v1384 = vcvt.s32.f32 %v1352
      %v1385 = vcvt.s32.f32 %v1353
      %v1386 = vcvt.s32.f32 %v1354
      %v1387 = vcvt.s32.f32 %v1355
      %v1388 = vcvt.s32.f32 %v1356
      %v1389 = vcvt.s32.f32 %v1357
      %v1390 = vcvt.s32.f32 %v1358
      %v1391 = vcvt.s32.f32 %v1359
      %v1392 = vcvt.s32.f32 %v1360
      %v1393 = vcvt.s32.f32 %v1361
      %v1394 = vcvt.s32.f32 %v1362
      %v1395 = vcvt.s32.f32 %v1363
      %v1396 = vpack.c.bf16 %v1365, %v1364
      %v1397 = vpack.c.bf16 %v1367, %v1366
      %v1398 = vpack.c.bf16 %v1369, %v1368
      %v1399 = vpack.c.bf16 %v1371, %v1370
      %v1400 = vpack.c.bf16 %v1373, %v1372
      %v1401 = vpack.c.bf16 %v1375, %v1374
      %v1402 = vpack.c.bf16 %v1377, %v1376
      %v1403 = vpack.c.bf16 %v1379, %v1378
      %v1404 = vpack.c.bf16 %v1381, %v1380
      %v1405 = vpack.c.bf16 %v1383, %v1382
      %v1406 = vpack.c.bf16 %v1385, %v1384
      %v1407 = vpack.c.bf16 %v1387, %v1386
      %v1408 = vpack.c.bf16 %v1389, %v1388
      %v1409 = vpack.c.bf16 %v1391, %v1390
      %v1410 = vpack.c.bf16 %v1393, %v1392
      %v1411 = vpack.c.bf16 %v1395, %v1394
      %vm1412 = vcmp.ne.s32.totalorder %v1268, 15
      %vm1413 = vcmp.ne.s32.totalorder %v1269, 15
      %vm1414 = vcmp.ne.s32.totalorder %v1270, 15
      %vm1415 = vcmp.ne.s32.totalorder %v1271, 15
      %vm1416 = vcmp.ne.s32.totalorder %v1272, 15
      %vm1417 = vcmp.ne.s32.totalorder %v1273, 15
      %vm1418 = vcmp.ne.s32.totalorder %v1274, 15
      %vm1419 = vcmp.ne.s32.totalorder %v1275, 15
      %vm1420 = vcmp.ne.s32.totalorder %v1276, 15
      %vm1421 = vcmp.ne.s32.totalorder %v1277, 15
      %vm1422 = vcmp.ne.s32.totalorder %v1278, 15
      %vm1423 = vcmp.ne.s32.totalorder %v1279, 15
      %vm1424 = vcmp.ne.s32.totalorder %v1280, 15
      %vm1425 = vcmp.ne.s32.totalorder %v1281, 15
      %vm1426 = vcmp.ne.s32.totalorder %v1282, 15
      %vm1427 = vcmp.ne.s32.totalorder %v1283, 15
      %vm1428 = vcmp.ne.s32.totalorder %v1284, 15
      %vm1429 = vcmp.ne.s32.totalorder %v1285, 15
      %vm1430 = vcmp.ne.s32.totalorder %v1286, 15
      %vm1431 = vcmp.ne.s32.totalorder %v1287, 15
      %vm1432 = vcmp.ne.s32.totalorder %v1288, 15
      %vm1433 = vcmp.ne.s32.totalorder %v1289, 15
      %vm1434 = vcmp.ne.s32.totalorder %v1290, 15
      %vm1435 = vcmp.ne.s32.totalorder %v1291, 15
      %vm1436 = vcmp.ne.s32.totalorder %v1292, 15
      %vm1437 = vcmp.ne.s32.totalorder %v1293, 15
      %vm1438 = vcmp.ne.s32.totalorder %v1294, 15
      %vm1439 = vcmp.ne.s32.totalorder %v1295, 15
      %vm1440 = vcmp.ne.s32.totalorder %v1296, 15
      %vm1441 = vcmp.ne.s32.totalorder %v1297, 15
      %vm1442 = vcmp.ne.s32.totalorder %v1298, 15
      %vm1443 = vcmp.ne.s32.totalorder %v1299, 15
      %v1444 = vsel %vm1412, 1, 0
      %v1445 = vsel %vm1413, 1, 0
      %v1446 = vsel %vm1414, 1, 0
      %v1447 = vsel %vm1415, 1, 0
      %v1448 = vsel %vm1416, 1, 0
      %v1449 = vsel %vm1417, 1, 0
      %v1450 = vsel %vm1418, 1, 0
      %v1451 = vsel %vm1419, 1, 0
      %v1452 = vsel %vm1420, 1, 0
      %v1453 = vsel %vm1421, 1, 0
      %v1454 = vsel %vm1422, 1, 0
      %v1455 = vsel %vm1423, 1, 0
      %v1456 = vsel %vm1424, 1, 0
      %v1457 = vsel %vm1425, 1, 0
      %v1458 = vsel %vm1426, 1, 0
      %v1459 = vsel %vm1427, 1, 0
      %v1460 = vsel %vm1428, 1, 0
      %v1461 = vsel %vm1429, 1, 0
      %v1462 = vsel %vm1430, 1, 0
      %v1463 = vsel %vm1431, 1, 0
      %v1464 = vsel %vm1432, 1, 0
      %v1465 = vsel %vm1433, 1, 0
      %v1466 = vsel %vm1434, 1, 0
      %v1467 = vsel %vm1435, 1, 0
      %v1468 = vsel %vm1436, 1, 0
      %v1469 = vsel %vm1437, 1, 0
      %v1470 = vsel %vm1438, 1, 0
      %v1471 = vsel %vm1439, 1, 0
      %v1472 = vsel %vm1440, 1, 0
      %v1473 = vsel %vm1441, 1, 0
      %v1474 = vsel %vm1442, 1, 0
      %v1475 = vsel %vm1443, 1, 0
      %v1476 = vcvt.s32.f32 %v1444
      %v1477 = vcvt.s32.f32 %v1445
      %v1478 = vcvt.s32.f32 %v1446
      %v1479 = vcvt.s32.f32 %v1447
      %v1480 = vcvt.s32.f32 %v1448
      %v1481 = vcvt.s32.f32 %v1449
      %v1482 = vcvt.s32.f32 %v1450
      %v1483 = vcvt.s32.f32 %v1451
      %v1484 = vcvt.s32.f32 %v1452
      %v1485 = vcvt.s32.f32 %v1453
      %v1486 = vcvt.s32.f32 %v1454
      %v1487 = vcvt.s32.f32 %v1455
      %v1488 = vcvt.s32.f32 %v1456
      %v1489 = vcvt.s32.f32 %v1457
      %v1490 = vcvt.s32.f32 %v1458
      %v1491 = vcvt.s32.f32 %v1459
      %v1492 = vcvt.s32.f32 %v1460
      %v1493 = vcvt.s32.f32 %v1461
      %v1494 = vcvt.s32.f32 %v1462
      %v1495 = vcvt.s32.f32 %v1463
      %v1496 = vcvt.s32.f32 %v1464
      %v1497 = vcvt.s32.f32 %v1465
      %v1498 = vcvt.s32.f32 %v1466
      %v1499 = vcvt.s32.f32 %v1467
      %v1500 = vcvt.s32.f32 %v1468
      %v1501 = vcvt.s32.f32 %v1469
      %v1502 = vcvt.s32.f32 %v1470
      %v1503 = vcvt.s32.f32 %v1471
      %v1504 = vcvt.s32.f32 %v1472
      %v1505 = vcvt.s32.f32 %v1473
      %v1506 = vcvt.s32.f32 %v1474
      %v1507 = vcvt.s32.f32 %v1475
      %v1508 = vpack.c.bf16 %v1477, %v1476
      %v1509 = vpack.c.bf16 %v1479, %v1478
      %v1510 = vpack.c.bf16 %v1481, %v1480
      %v1511 = vpack.c.bf16 %v1483, %v1482
      %v1512 = vpack.c.bf16 %v1485, %v1484
      %v1513 = vpack.c.bf16 %v1487, %v1486
      %v1514 = vpack.c.bf16 %v1489, %v1488
      %v1515 = vpack.c.bf16 %v1491, %v1490
      %v1516 = vpack.c.bf16 %v1493, %v1492
      %v1517 = vpack.c.bf16 %v1495, %v1494
      %v1518 = vpack.c.bf16 %v1497, %v1496
      %v1519 = vpack.c.bf16 %v1499, %v1498
      %v1520 = vpack.c.bf16 %v1501, %v1500
      %v1521 = vpack.c.bf16 %v1503, %v1502
      %v1522 = vpack.c.bf16 %v1505, %v1504
      %v1523 = vpack.c.bf16 %v1507, %v1506
      %v1524 = vmul.bf16 %v879, %v1396
      %v1525 = vmul.bf16 %v880, %v1397
      %v1526 = vmul.bf16 %v738, %v1398
      %v1527 = vmul.bf16 %v746, %v1399
      %v1528 = vmul.bf16 %v754, %v1400
      %v1529 = vmul.bf16 %v762, %v1401
      %v1530 = vmul.bf16 %v770, %v1402
      %v1531 = vmul.bf16 %v778, %v1403
      %v1532 = vmul.bf16 %v786, %v1404
      %v1533 = vmul.bf16 %v794, %v1405
      %v1534 = vmul.bf16 %v802, %v1406
      %v1535 = vmul.bf16 %v810, %v1407
      %v1536 = vmul.bf16 %v818, %v1408
      %v1537 = vmul.bf16 %v826, %v1409
      %v1538 = vmul.bf16 %v834, %v1410
      %v1539 = vmul.bf16 %v842, %v1411
      %v1556 = vrot.slane %v1508, 7
      %v1557 = vrot.slane %v1509, 7
      %v1558 = vsel %vm877, %v1556, %v1557
      %v1559 = vrot.slane %v1510, 7
      %v1560 = vsel %vm877, %v1557, %v1559
      %v1561 = vrot.slane %v1511, 7
      %v1562 = vsel %vm877, %v1559, %v1561
      %v1563 = vrot.slane %v1512, 7
      %v1564 = vsel %vm877, %v1561, %v1563
      %v1565 = vrot.slane %v1513, 7
      %v1566 = vsel %vm877, %v1563, %v1565
      %v1567 = vrot.slane %v1514, 7
      %v1568 = vsel %vm877, %v1565, %v1567
      %v1569 = vrot.slane %v1515, 7
      %v1570 = vsel %vm877, %v1567, %v1569
      %v1571 = vrot.slane %v1516, 7
      %v1572 = vsel %vm877, %v1569, %v1571
      %v1573 = vrot.slane %v1517, 7
      %v1574 = vsel %vm877, %v1571, %v1573
      %v1575 = vrot.slane %v1518, 7
      %v1576 = vsel %vm877, %v1573, %v1575
      %v1577 = vrot.slane %v1519, 7
      %v1578 = vsel %vm877, %v1575, %v1577
      %v1579 = vrot.slane %v1520, 7
      %v1580 = vsel %vm877, %v1577, %v1579
      %v1581 = vrot.slane %v1521, 7
      %v1582 = vsel %vm877, %v1579, %v1581
      %v1583 = vrot.slane %v1522, 7
      %v1584 = vsel %vm877, %v1581, %v1583
      %v1585 = vrot.slane %v1523, 7
      %v1586 = vsel %vm877, %v1583, %v1585
      %v1604 = vmul.bf16 %v879, %v1556
      %v1605 = vmul.bf16 %v880, %v1558
      %v1606 = vmul.bf16 %v738, %v1560
      %v1607 = vmul.bf16 %v746, %v1562
      %v1608 = vmul.bf16 %v754, %v1564
      %v1609 = vmul.bf16 %v762, %v1566
      %v1610 = vmul.bf16 %v770, %v1568
      %v1611 = vmul.bf16 %v778, %v1570
      %v1612 = vmul.bf16 %v786, %v1572
      %v1613 = vmul.bf16 %v794, %v1574
      %v1614 = vmul.bf16 %v802, %v1576
      %v1615 = vmul.bf16 %v810, %v1578
      %v1616 = vmul.bf16 %v818, %v1580
      %v1617 = vmul.bf16 %v826, %v1582
      %v1618 = vmul.bf16 %v834, %v1584
      %v1619 = vmul.bf16 %v842, %v1586
      %v1620 = vmul.bf16 %v850, %v1585
      %vm1621 = vsmask.f32 7424
      %v1623 = vshrl.u32 %v879, 16
      %v1625 = vshll.u32 %v879, 16
      %v1627 = vrot.slane %v1625, 1
      %v1628 = vor.u32 %v1623, %v1627
      %v1630 = vshll.u32 %v880, 16
      %v1632 = vrot.slane %v1630, 1
      %v1633 = vsel %vm1621, %v1628, %v1632
      %v1634 = vshrl.u32 %v880, 16
      %v1636 = vor.u32 %v1634, %v1632
      %v1638 = vshll.u32 %v738, 16
      %v1640 = vrot.slane %v1638, 1
      %v1641 = vsel %vm1621, %v1636, %v1640
      %v1642 = vshrl.u32 %v738, 16
      %v1644 = vor.u32 %v1642, %v1640
      %v1646 = vshll.u32 %v746, 16
      %v1648 = vrot.slane %v1646, 1
      %v1649 = vsel %vm1621, %v1644, %v1648
      %v1650 = vshrl.u32 %v746, 16
      %v1652 = vor.u32 %v1650, %v1648
      %v1654 = vshll.u32 %v754, 16
      %v1656 = vrot.slane %v1654, 1
      %v1657 = vsel %vm1621, %v1652, %v1656
      %v1658 = vshrl.u32 %v754, 16
      %v1660 = vor.u32 %v1658, %v1656
      %v1662 = vshll.u32 %v762, 16
      %v1664 = vrot.slane %v1662, 1
      %v1665 = vsel %vm1621, %v1660, %v1664
      %v1666 = vshrl.u32 %v762, 16
      %v1668 = vor.u32 %v1666, %v1664
      %v1670 = vshll.u32 %v770, 16
      %v1672 = vrot.slane %v1670, 1
      %v1673 = vsel %vm1621, %v1668, %v1672
      %v1674 = vshrl.u32 %v770, 16
      %v1676 = vor.u32 %v1674, %v1672
      %v1678 = vshll.u32 %v778, 16
      %v1680 = vrot.slane %v1678, 1
      %v1681 = vsel %vm1621, %v1676, %v1680
      %v1682 = vshrl.u32 %v778, 16
      %v1684 = vor.u32 %v1682, %v1680
      %v1686 = vshll.u32 %v786, 16
      %v1688 = vrot.slane %v1686, 1
      %v1689 = vsel %vm1621, %v1684, %v1688
      %v1690 = vshrl.u32 %v786, 16
      %v1692 = vor.u32 %v1690, %v1688
      %v1694 = vshll.u32 %v794, 16
      %v1696 = vrot.slane %v1694, 1
      %v1697 = vsel %vm1621, %v1692, %v1696
      %v1698 = vshrl.u32 %v794, 16
      %v1700 = vor.u32 %v1698, %v1696
      %v1702 = vshll.u32 %v802, 16
      %v1704 = vrot.slane %v1702, 1
      %v1705 = vsel %vm1621, %v1700, %v1704
      %v1706 = vshrl.u32 %v802, 16
      %v1708 = vor.u32 %v1706, %v1704
      %v1710 = vshll.u32 %v810, 16
      %v1712 = vrot.slane %v1710, 1
      %v1713 = vsel %vm1621, %v1708, %v1712
      %v1714 = vshrl.u32 %v810, 16
      %v1716 = vor.u32 %v1714, %v1712
      %v1718 = vshll.u32 %v818, 16
      %v1720 = vrot.slane %v1718, 1
      %v1721 = vsel %vm1621, %v1716, %v1720
      %v1722 = vshrl.u32 %v818, 16
      %v1724 = vor.u32 %v1722, %v1720
      %v1726 = vshll.u32 %v826, 16
      %v1728 = vrot.slane %v1726, 1
      %v1729 = vsel %vm1621, %v1724, %v1728
      %v1730 = vshrl.u32 %v826, 16
      %v1732 = vor.u32 %v1730, %v1728
      %v1734 = vshll.u32 %v834, 16
      %v1736 = vrot.slane %v1734, 1
      %v1737 = vsel %vm1621, %v1732, %v1736
      %v1738 = vshrl.u32 %v834, 16
      %v1740 = vor.u32 %v1738, %v1736
      %v1742 = vshll.u32 %v842, 16
      %v1744 = vrot.slane %v1742, 1
      %v1745 = vsel %vm1621, %v1740, %v1744
      %v1746 = vshrl.u32 %v842, 16
      %v1748 = vor.u32 %v1746, %v1744
      %v1750 = vshll.u32 %v850, 16
      %v1752 = vrot.slane %v1750, 1
      %v1753 = vsel %vm1621, %v1748, %v1752
      %1754 = vrot.lane.b32.xlu0 %v1633, 8
      %v1755 = vpop.permute.xlu0 %1754
      %1756 = vrot.lane.b32.xlu0 %v1641, 8
      %v1757 = vpop.permute.xlu0 %1756
      %1758 = vrot.lane.b32.xlu0 %v1649, 8
      %v1759 = vpop.permute.xlu0 %1758
      %1760 = vrot.lane.b32.xlu0 %v1657, 8
      %v1761 = vpop.permute.xlu0 %1760
      %1762 = vrot.lane.b32.xlu0 %v1665, 8
      %v1763 = vpop.permute.xlu0 %1762
      %1764 = vrot.lane.b32.xlu0 %v1673, 8
      %v1765 = vpop.permute.xlu0 %1764
      %1766 = vrot.lane.b32.xlu0 %v1681, 8
      %v1767 = vpop.permute.xlu0 %1766
      %1768 = vrot.lane.b32.xlu0 %v1689, 8
      %v1769 = vpop.permute.xlu0 %1768
      %1770 = vrot.lane.b32.xlu0 %v1697, 8
      %v1771 = vpop.permute.xlu0 %1770
      %1772 = vrot.lane.b32.xlu0 %v1705, 8
      %v1773 = vpop.permute.xlu0 %1772
      %1774 = vrot.lane.b32.xlu0 %v1713, 8
      %v1775 = vpop.permute.xlu0 %1774
      %1776 = vrot.lane.b32.xlu0 %v1721, 8
      %v1777 = vpop.permute.xlu0 %1776
      %1778 = vrot.lane.b32.xlu0 %v1729, 8
      %v1779 = vpop.permute.xlu0 %1778
      %1780 = vrot.lane.b32.xlu0 %v1737, 8
      %v1781 = vpop.permute.xlu0 %1780
      %1782 = vrot.lane.b32.xlu0 %v1745, 8
      %v1783 = vpop.permute.xlu0 %1782
      %1784 = vrot.lane.b32.xlu0 %v1753, 8
      %v1785 = vpop.permute.xlu0 %1784
      %vm1803 = vcmask 1046528
      %v1804 = vrot.slane %v1604, 1
      %v1805 = vrot.slane %v1605, 1
      %v1806 = vsel %vm1803, %v1804, %v1805
      %v1807 = vrot.slane %v1606, 1
      %v1808 = vsel %vm1803, %v1805, %v1807
      %v1809 = vrot.slane %v1607, 1
      %v1810 = vsel %vm1803, %v1807, %v1809
      %v1811 = vrot.slane %v1608, 1
      %v1812 = vsel %vm1803, %v1809, %v1811
      %v1813 = vrot.slane %v1609, 1
      %v1814 = vsel %vm1803, %v1811, %v1813
      %v1815 = vrot.slane %v1610, 1
      %v1816 = vsel %vm1803, %v1813, %v1815
      %v1817 = vrot.slane %v1611, 1
      %v1818 = vsel %vm1803, %v1815, %v1817
      %v1819 = vrot.slane %v1612, 1
      %v1820 = vsel %vm1803, %v1817, %v1819
      %v1821 = vrot.slane %v1613, 1
      %v1822 = vsel %vm1803, %v1819, %v1821
      %v1823 = vrot.slane %v1614, 1
      %v1824 = vsel %vm1803, %v1821, %v1823
      %v1825 = vrot.slane %v1615, 1
      %v1826 = vsel %vm1803, %v1823, %v1825
      %v1827 = vrot.slane %v1616, 1
      %v1828 = vsel %vm1803, %v1825, %v1827
      %v1829 = vrot.slane %v1617, 1
      %v1830 = vsel %vm1803, %v1827, %v1829
      %v1831 = vrot.slane %v1618, 1
      %v1832 = vsel %vm1803, %v1829, %v1831
      %v1833 = vrot.slane %v1619, 1
      %v1834 = vsel %vm1803, %v1831, %v1833
      %v1835 = vrot.slane %v1620, 1
      %v1836 = vsel %vm1803, %v1833, %v1835
      %1837 = vrot.lane.b32.xlu0 %v1806, 16
      %v1838 = vpop.permute.xlu0 %1837
      %1839 = vrot.lane.b32.xlu0 %v1808, 16
      %v1840 = vpop.permute.xlu0 %1839
      %1841 = vrot.lane.b32.xlu0 %v1810, 16
      %v1842 = vpop.permute.xlu0 %1841
      %1843 = vrot.lane.b32.xlu0 %v1812, 16
      %v1844 = vpop.permute.xlu0 %1843
      %1845 = vrot.lane.b32.xlu0 %v1814, 16
      %v1846 = vpop.permute.xlu0 %1845
      %1847 = vrot.lane.b32.xlu0 %v1816, 16
      %v1848 = vpop.permute.xlu0 %1847
      %1849 = vrot.lane.b32.xlu0 %v1818, 16
      %v1850 = vpop.permute.xlu0 %1849
      %1851 = vrot.lane.b32.xlu0 %v1820, 16
      %v1852 = vpop.permute.xlu0 %1851
      %1853 = vrot.lane.b32.xlu0 %v1822, 16
      %v1854 = vpop.permute.xlu0 %1853
      %1855 = vrot.lane.b32.xlu0 %v1824, 16
      %v1856 = vpop.permute.xlu0 %1855
      %1857 = vrot.lane.b32.xlu0 %v1826, 16
      %v1858 = vpop.permute.xlu0 %1857
      %1859 = vrot.lane.b32.xlu0 %v1828, 16
      %v1860 = vpop.permute.xlu0 %1859
      %1861 = vrot.lane.b32.xlu0 %v1830, 16
      %v1862 = vpop.permute.xlu0 %1861
      %1863 = vrot.lane.b32.xlu0 %v1832, 16
      %v1864 = vpop.permute.xlu0 %1863
      %1865 = vrot.lane.b32.xlu0 %v1834, 16
      %v1866 = vpop.permute.xlu0 %1865
      %1867 = vrot.lane.b32.xlu0 %v1836, 16
      %v1868 = vpop.permute.xlu0 %1867
      %vm1869 = vcmask 64512
      %v1872 = vsel %vm1869, %v1524, %v1755
      %v1875 = vsel %vm1869, %v1525, %v1757
      %v1878 = vsel %vm1869, %v1526, %v1759
      %v1881 = vsel %vm1869, %v1527, %v1761
      %v1884 = vsel %vm1869, %v1528, %v1763
      %v1887 = vsel %vm1869, %v1529, %v1765
      %v1890 = vsel %vm1869, %v1530, %v1767
      %v1893 = vsel %vm1869, %v1531, %v1769
      %v1896 = vsel %vm1869, %v1532, %v1771
      %v1899 = vsel %vm1869, %v1533, %v1773
      %v1902 = vsel %vm1869, %v1534, %v1775
      %v1905 = vsel %vm1869, %v1535, %v1777
      %v1908 = vsel %vm1869, %v1536, %v1779
      %v1911 = vsel %vm1869, %v1537, %v1781
      %v1914 = vsel %vm1869, %v1538, %v1783
      %v1917 = vsel %vm1869, %v1539, %v1785
      %vm1918 = vcmask 130048
      %v1920 = vsel %vm1918, %v1872, %v1838
      %v1922 = vsel %vm1918, %v1875, %v1840
      %v1924 = vsel %vm1918, %v1878, %v1842
      %v1926 = vsel %vm1918, %v1881, %v1844
      %v1928 = vsel %vm1918, %v1884, %v1846
      %v1930 = vsel %vm1918, %v1887, %v1848
      %v1932 = vsel %vm1918, %v1890, %v1850
      %v1934 = vsel %vm1918, %v1893, %v1852
      %v1936 = vsel %vm1918, %v1896, %v1854
      %v1938 = vsel %vm1918, %v1899, %v1856
      %v1940 = vsel %vm1918, %v1902, %v1858
      %v1942 = vsel %vm1918, %v1905, %v1860
      %v1944 = vsel %vm1918, %v1908, %v1862
      %v1946 = vsel %vm1918, %v1911, %v1864
      %v1948 = vsel %vm1918, %v1914, %v1866
      %v1950 = vsel %vm1918, %v1917, %v1868
      %v1951 = vld [vmem:[%s3] sm:$0xf]
      %v1952 = vmul.bf16 %v880, %v1396
      %v1953 = vmul.bf16 %v738, %v1397
      %v1954 = vmul.bf16 %v746, %v1398
      %v1955 = vmul.bf16 %v754, %v1399
      %v1956 = vmul.bf16 %v762, %v1400
      %v1957 = vmul.bf16 %v770, %v1401
      %v1958 = vmul.bf16 %v778, %v1402
      %v1959 = vmul.bf16 %v786, %v1403
      %v1960 = vmul.bf16 %v794, %v1404
      %v1961 = vmul.bf16 %v802, %v1405
      %v1962 = vmul.bf16 %v810, %v1406
      %v1963 = vmul.bf16 %v818, %v1407
      %v1964 = vmul.bf16 %v826, %v1408
      %v1965 = vmul.bf16 %v834, %v1409
      %v1966 = vmul.bf16 %v842, %v1410
      %v1967 = vmul.bf16 %v850, %v1411
      %v1968 = vmul.bf16 %v880, %v1556
      %v1969 = vmul.bf16 %v738, %v1558
      %v1970 = vmul.bf16 %v746, %v1560
      %v1971 = vmul.bf16 %v754, %v1562
      %v1972 = vmul.bf16 %v762, %v1564
      %v1973 = vmul.bf16 %v770, %v1566
      %v1974 = vmul.bf16 %v778, %v1568
      %v1975 = vmul.bf16 %v786, %v1570
      %v1976 = vmul.bf16 %v794, %v1572
      %v1977 = vmul.bf16 %v802, %v1574
      %v1978 = vmul.bf16 %v810, %v1576
      %v1979 = vmul.bf16 %v818, %v1578
      %v1980 = vmul.bf16 %v826, %v1580
      %v1981 = vmul.bf16 %v834, %v1582
      %v1982 = vmul.bf16 %v842, %v1584
      %v1983 = vmul.bf16 %v850, %v1586
      %v1984 = vmul.bf16 %v881, %v1585
      %v1985 = vshrl.u32 %v850, 16
      %v1987 = vor.u32 %v1985, %v1752
      %v1989 = vshll.u32 %v881, 16
      %v1991 = vrot.slane %v1989, 1
      %v1992 = vsel %vm1621, %v1987, %v1991
      %1993 = vrot.lane.b32.xlu0 %v1992, 8
      %v1994 = vpop.permute.xlu0 %1993
      %v2012 = vrot.slane %v1968, 1
      %v2013 = vrot.slane %v1969, 1
      %v2014 = vsel %vm1803, %v2012, %v2013
      %v2015 = vrot.slane %v1970, 1
      %v2016 = vsel %vm1803, %v2013, %v2015
      %v2017 = vrot.slane %v1971, 1
      %v2018 = vsel %vm1803, %v2015, %v2017
      %v2019 = vrot.slane %v1972, 1
      %v2020 = vsel %vm1803, %v2017, %v2019
      %v2021 = vrot.slane %v1973, 1
      %v2022 = vsel %vm1803, %v2019, %v2021
      %v2023 = vrot.slane %v1974, 1
      %v2024 = vsel %vm1803, %v2021, %v2023
      %v2025 = vrot.slane %v1975, 1
      %v2026 = vsel %vm1803, %v2023, %v2025
      %v2027 = vrot.slane %v1976, 1
      %v2028 = vsel %vm1803, %v2025, %v2027
      %v2029 = vrot.slane %v1977, 1
      %v2030 = vsel %vm1803, %v2027, %v2029
      %v2031 = vrot.slane %v1978, 1
      %v2032 = vsel %vm1803, %v2029, %v2031
      %v2033 = vrot.slane %v1979, 1
      %v2034 = vsel %vm1803, %v2031, %v2033
      %v2035 = vrot.slane %v1980, 1
      %v2036 = vsel %vm1803, %v2033, %v2035
      %v2037 = vrot.slane %v1981, 1
      %v2038 = vsel %vm1803, %v2035, %v2037
      %v2039 = vrot.slane %v1982, 1
      %v2040 = vsel %vm1803, %v2037, %v2039
      %v2041 = vrot.slane %v1983, 1
      %v2042 = vsel %vm1803, %v2039, %v2041
      %v2043 = vrot.slane %v1984, 1
      %v2044 = vsel %vm1803, %v2041, %v2043
      %2045 = vrot.lane.b32.xlu0 %v2014, 16
      %v2046 = vpop.permute.xlu0 %2045
      %2047 = vrot.lane.b32.xlu0 %v2016, 16
      %v2048 = vpop.permute.xlu0 %2047
      %2049 = vrot.lane.b32.xlu0 %v2018, 16
      %v2050 = vpop.permute.xlu0 %2049
      %2051 = vrot.lane.b32.xlu0 %v2020, 16
      %v2052 = vpop.permute.xlu0 %2051
      %2053 = vrot.lane.b32.xlu0 %v2022, 16
      %v2054 = vpop.permute.xlu0 %2053
      %2055 = vrot.lane.b32.xlu0 %v2024, 16
      %v2056 = vpop.permute.xlu0 %2055
      %2057 = vrot.lane.b32.xlu0 %v2026, 16
      %v2058 = vpop.permute.xlu0 %2057
      %2059 = vrot.lane.b32.xlu0 %v2028, 16
      %v2060 = vpop.permute.xlu0 %2059
      %2061 = vrot.lane.b32.xlu0 %v2030, 16
      %v2062 = vpop.permute.xlu0 %2061
      %2063 = vrot.lane.b32.xlu0 %v2032, 16
      %v2064 = vpop.permute.xlu0 %2063
      %2065 = vrot.lane.b32.xlu0 %v2034, 16
      %v2066 = vpop.permute.xlu0 %2065
      %2067 = vrot.lane.b32.xlu0 %v2036, 16
      %v2068 = vpop.permute.xlu0 %2067
      %2069 = vrot.lane.b32.xlu0 %v2038, 16
      %v2070 = vpop.permute.xlu0 %2069
      %2071 = vrot.lane.b32.xlu0 %v2040, 16
      %v2072 = vpop.permute.xlu0 %2071
      %2073 = vrot.lane.b32.xlu0 %v2042, 16
      %v2074 = vpop.permute.xlu0 %2073
      %2075 = vrot.lane.b32.xlu0 %v2044, 16
      %v2076 = vpop.permute.xlu0 %2075
      %v2078 = vsel %vm1869, %v1952, %v1757
      %v2080 = vsel %vm1869, %v1953, %v1759
      %v2082 = vsel %vm1869, %v1954, %v1761
      %v2084 = vsel %vm1869, %v1955, %v1763
      %v2086 = vsel %vm1869, %v1956, %v1765
      %v2088 = vsel %vm1869, %v1957, %v1767
      %v2090 = vsel %vm1869, %v1958, %v1769
      %v2092 = vsel %vm1869, %v1959, %v1771
      %v2094 = vsel %vm1869, %v1960, %v1773
      %v2096 = vsel %vm1869, %v1961, %v1775
      %v2098 = vsel %vm1869, %v1962, %v1777
      %v2100 = vsel %vm1869, %v1963, %v1779
      %v2102 = vsel %vm1869, %v1964, %v1781
      %v2104 = vsel %vm1869, %v1965, %v1783
      %v2106 = vsel %vm1869, %v1966, %v1785
      %v2109 = vsel %vm1869, %v1967, %v1994
      %v2111 = vsel %vm1918, %v2078, %v2046
      %v2113 = vsel %vm1918, %v2080, %v2048
      %v2115 = vsel %vm1918, %v2082, %v2050
      %v2117 = vsel %vm1918, %v2084, %v2052
      %v2119 = vsel %vm1918, %v2086, %v2054
      %v2121 = vsel %vm1918, %v2088, %v2056
      %v2123 = vsel %vm1918, %v2090, %v2058
      %v2125 = vsel %vm1918, %v2092, %v2060
      %v2127 = vsel %vm1918, %v2094, %v2062
      %v2129 = vsel %vm1918, %v2096, %v2064
      %v2131 = vsel %vm1918, %v2098, %v2066
      %v2133 = vsel %vm1918, %v2100, %v2068
      %v2135 = vsel %vm1918, %v2102, %v2070
      %v2137 = vsel %vm1918, %v2104, %v2072
      %v2139 = vsel %vm1918, %v2106, %v2074
      %v2141 = vsel %vm1918, %v2109, %v2076
      %s2142 = scalar_lea.vmem %s3, 4
      %v2143 = vld [vmem:[%s2142] sm:$0xf]
      %vm2144 = vcmask 195584
      %v2146 = vsel %vm2144, %v2143, 0
      %v2148 = vsel %vm2144, %v2111, 0
      %v2150 = vsel %vm2144, %v2113, 0
      %v2152 = vsel %vm2144, %v2115, 0
      %v2154 = vsel %vm2144, %v2117, 0
      %v2156 = vsel %vm2144, %v2119, 0
      %v2158 = vsel %vm2144, %v2121, 0
      %v2160 = vsel %vm2144, %v2123, 0
      %v2162 = vsel %vm2144, %v2125, 0
      %v2164 = vsel %vm2144, %v2127, 0
      %v2166 = vsel %vm2144, %v2129, 0
      %v2168 = vsel %vm2144, %v2131, 0
      %v2170 = vsel %vm2144, %v2133, 0
      %v2172 = vsel %vm2144, %v2135, 0
      %v2174 = vsel %vm2144, %v2137, 0
      %v2176 = vsel %vm2144, %v2139, 0
      %v2178 = vsel %vm2144, %v2141, 0
      %2180 = vmatprep.subr.bf16.mxu0 0
      %2181 = vmatpush1.bf16.xpose.msra.mxu0 %v2148
      %2182 = vmatprep.subr.bf16.mxu0 0
      %2183 = vmatpush1.bf16.xpose.msra.mxu0 %v2150
      %2184 = vmatprep.subr.bf16.mxu0 0
      %2185 = vmatpush1.bf16.xpose.msra.mxu0 %v2152
      %2186 = vmatprep.subr.bf16.mxu0 0
      %2187 = vmatpush1.bf16.xpose.msra.mxu0 %v2154
      %2188 = vmatprep.subr.bf16.mxu0 0
      %2189 = vmatpush1.bf16.xpose.msra.mxu0 %v2156
      %2190 = vmatprep.subr.bf16.mxu0 0
      %2191 = vmatpush1.bf16.xpose.msra.mxu0 %v2158
      %2192 = vmatprep.subr.bf16.mxu0 0
      %2193 = vmatpush1.bf16.xpose.msra.mxu0 %v2160
      %2194 = vmatprep.subr.bf16.mxu0 0
      %2195 = vmatpush1.bf16.xpose.msra.mxu0 %v2162
      %2196 = vmatprep.subr.bf16.mxu0 0
      %2197 = vmatpush1.bf16.xpose.msra.mxu0 %v2164
      %2198 = vmatprep.subr.bf16.mxu0 0
      %2199 = vmatpush1.bf16.xpose.msra.mxu0 %v2166
      %2200 = vmatprep.subr.bf16.mxu0 0
      %2201 = vmatpush1.bf16.xpose.msra.mxu0 %v2168
      %2202 = vmatprep.subr.bf16.mxu0 0
      %2203 = vmatpush1.bf16.xpose.msra.mxu0 %v2170
      %2204 = vmatprep.subr.bf16.mxu0 0
      %2205 = vmatpush1.bf16.xpose.msra.mxu0 %v2172
      %2206 = vmatprep.subr.bf16.mxu0 0
      %2207 = vmatpush1.bf16.xpose.msra.mxu0 %v2174
      %2208 = vmatprep.subr.bf16.mxu0 0
      %2209 = vmatpush1.bf16.xpose.msra.mxu0 %v2176
      %2210 = vmatprep.subr.bf16.mxu0 0
      %2211 = vmatpush1.bf16.xpose.msra.mxu0 %v2178
      %2212 = vmatprep.mubr.bf16.mxu0 0
      %2213 = vmatmul.mubr.bf16.gmra.mrb[0].mxu0 %v2146
      %v2214 = vpop.f32.mrb[0].mxu0
      %v2215 = vadd.f32 0.0, %v2214
      %v2216 = vpop.f32.mrb[0].mxu0
      %v2217 = vadd.f32 0.0, %v2216
      %v2218 = vpop.f32.mrb[0].mxu0
      %v2219 = vpop.f32.mrb[0].mxu0
      %2220 = vdwg.mxu0
      %v2222 = vsel %vm2144, %v1951, 0
      %v2224 = vsel %vm2144, %v1920, 0
      %v2226 = vsel %vm2144, %v1922, 0
      %v2228 = vsel %vm2144, %v1924, 0
      %v2230 = vsel %vm2144, %v1926, 0
      %v2232 = vsel %vm2144, %v1928, 0
      %v2234 = vsel %vm2144, %v1930, 0
      %v2236 = vsel %vm2144, %v1932, 0
      %v2238 = vsel %vm2144, %v1934, 0
      %v2240 = vsel %vm2144, %v1936, 0
      %v2242 = vsel %vm2144, %v1938, 0
      %v2244 = vsel %vm2144, %v1940, 0
      %v2246 = vsel %vm2144, %v1942, 0
      %v2248 = vsel %vm2144, %v1944, 0
      %v2250 = vsel %vm2144, %v1946, 0
      %v2252 = vsel %vm2144, %v1948, 0
      %v2254 = vsel %vm2144, %v1950, 0
      %2256 = vmatprep.subr.bf16.mxu0 0
      %2257 = vmatpush1.bf16.xpose.msra.mxu0 %v2224
      %2258 = vmatprep.subr.bf16.mxu0 0
      %2259 = vmatpush1.bf16.xpose.msra.mxu0 %v2226
      %2260 = vmatprep.subr.bf16.mxu0 0
      %2261 = vmatpush1.bf16.xpose.msra.mxu0 %v2228
      %2262 = vmatprep.subr.bf16.mxu0 0
      %2263 = vmatpush1.bf16.xpose.msra.mxu0 %v2230
      %2264 = vmatprep.subr.bf16.mxu0 0
      %2265 = vmatpush1.bf16.xpose.msra.mxu0 %v2232
      %2266 = vmatprep.subr.bf16.mxu0 0
      %2267 = vmatpush1.bf16.xpose.msra.mxu0 %v2234
      %2268 = vmatprep.subr.bf16.mxu0 0
      %2269 = vmatpush1.bf16.xpose.msra.mxu0 %v2236
      %2270 = vmatprep.subr.bf16.mxu0 0
      %2271 = vmatpush1.bf16.xpose.msra.mxu0 %v2238
      %2272 = vmatprep.subr.bf16.mxu0 0
      %2273 = vmatpush1.bf16.xpose.msra.mxu0 %v2240
      %2274 = vmatprep.subr.bf16.mxu0 0
      %2275 = vmatpush1.bf16.xpose.msra.mxu0 %v2242
      %2276 = vmatprep.subr.bf16.mxu0 0
      %2277 = vmatpush1.bf16.xpose.msra.mxu0 %v2244
      %2278 = vmatprep.subr.bf16.mxu0 0
      %2279 = vmatpush1.bf16.xpose.msra.mxu0 %v2246
      %2280 = vmatprep.subr.bf16.mxu0 0
      %2281 = vmatpush1.bf16.xpose.msra.mxu0 %v2248
      %2282 = vmatprep.subr.bf16.mxu0 0
      %2283 = vmatpush1.bf16.xpose.msra.mxu0 %v2250
      %2284 = vmatprep.subr.bf16.mxu0 0
      %2285 = vmatpush1.bf16.xpose.msra.mxu0 %v2252
      %2286 = vmatprep.subr.bf16.mxu0 0
      %2287 = vmatpush1.bf16.xpose.msra.mxu0 %v2254
      %2288 = vmatprep.mubr.bf16.mxu0 0
      %2289 = vmatmul.mubr.bf16.gmra.mrb[0].mxu0 %v2222
      %v2290 = vpop.f32.mrb[0].mxu0
      %v2291 = vadd.f32 %v2215, %v2290
      %v2292 = vpop.f32.mrb[0].mxu0
      %v2293 = vadd.f32 %v2217, %v2292
      %v2294 = vpop.f32.mrb[0].mxu0
      %v2295 = vpop.f32.mrb[0].mxu0
      %2296 = vdwg.mxu0
      %v2297 = vmul.bf16 %v738, %v1396
      %v2298 = vmul.bf16 %v746, %v1397
      %v2299 = vmul.bf16 %v754, %v1398
      %v2300 = vmul.bf16 %v762, %v1399
      %v2301 = vmul.bf16 %v770, %v1400
      %v2302 = vmul.bf16 %v778, %v1401
      %v2303 = vmul.bf16 %v786, %v1402
      %v2304 = vmul.bf16 %v794, %v1403
      %v2305 = vmul.bf16 %v802, %v1404
      %v2306 = vmul.bf16 %v810, %v1405
      %v2307 = vmul.bf16 %v818, %v1406
      %v2308 = vmul.bf16 %v826, %v1407
      %v2309 = vmul.bf16 %v834, %v1408
      %v2310 = vmul.bf16 %v842, %v1409
      %v2311 = vmul.bf16 %v850, %v1410
      %v2312 = vmul.bf16 %v881, %v1411
      %v2313 = vmul.bf16 %v738, %v1556
      %v2314 = vmul.bf16 %v746, %v1558
      %v2315 = vmul.bf16 %v754, %v1560
      %v2316 = vmul.bf16 %v762, %v1562
      %v2317 = vmul.bf16 %v770, %v1564
      %v2318 = vmul.bf16 %v778, %v1566
      %v2319 = vmul.bf16 %v786, %v1568
      %v2320 = vmul.bf16 %v794, %v1570
      %v2321 = vmul.bf16 %v802, %v1572
      %v2322 = vmul.bf16 %v810, %v1574
      %v2323 = vmul.bf16 %v818, %v1576
      %v2324 = vmul.bf16 %v826, %v1578
      %v2325 = vmul.bf16 %v834, %v1580
      %v2326 = vmul.bf16 %v842, %v1582
      %v2327 = vmul.bf16 %v850, %v1584
      %v2328 = vmul.bf16 %v881, %v1586
      %v2329 = vmul.bf16 %v882, %v1585
      %v2330 = vshrl.u32 %v881, 16
      %v2332 = vor.u32 %v2330, %v1991
      %v2334 = vshll.u32 %v882, 16
      %v2336 = vrot.slane %v2334, 1
      %v2337 = vsel %vm1621, %v2332, %v2336
      %2338 = vrot.lane.b32.xlu0 %v2337, 8
      %v2339 = vpop.permute.xlu0 %2338
      %v2357 = vrot.slane %v2313, 1
      %v2358 = vrot.slane %v2314, 1
      %v2359 = vsel %vm1803, %v2357, %v2358
      %v2360 = vrot.slane %v2315, 1
      %v2361 = vsel %vm1803, %v2358, %v2360
      %v2362 = vrot.slane %v2316, 1
      %v2363 = vsel %vm1803, %v2360, %v2362
      %v2364 = vrot.slane %v2317, 1
      %v2365 = vsel %vm1803, %v2362, %v2364
      %v2366 = vrot.slane %v2318, 1
      %v2367 = vsel %vm1803, %v2364, %v2366
      %v2368 = vrot.slane %v2319, 1
      %v2369 = vsel %vm1803, %v2366, %v2368
      %v2370 = vrot.slane %v2320, 1
      %v2371 = vsel %vm1803, %v2368, %v2370
      %v2372 = vrot.slane %v2321, 1
      %v2373 = vsel %vm1803, %v2370, %v2372
      %v2374 = vrot.slane %v2322, 1
      %v2375 = vsel %vm1803, %v2372, %v2374
      %v2376 = vrot.slane %v2323, 1
      %v2377 = vsel %vm1803, %v2374, %v2376
      %v2378 = vrot.slane %v2324, 1
      %v2379 = vsel %vm1803, %v2376, %v2378
      %v2380 = vrot.slane %v2325, 1
      %v2381 = vsel %vm1803, %v2378, %v2380
      %v2382 = vrot.slane %v2326, 1
      %v2383 = vsel %vm1803, %v2380, %v2382
      %v2384 = vrot.slane %v2327, 1
      %v2385 = vsel %vm1803, %v2382, %v2384
      %v2386 = vrot.slane %v2328, 1
      %v2387 = vsel %vm1803, %v2384, %v2386
      %v2388 = vrot.slane %v2329, 1
      %v2389 = vsel %vm1803, %v2386, %v2388
      %2390 = vrot.lane.b32.xlu0 %v2359, 16
      %v2391 = vpop.permute.xlu0 %2390
      %2392 = vrot.lane.b32.xlu0 %v2361, 16
      %v2393 = vpop.permute.xlu0 %2392
      %2394 = vrot.lane.b32.xlu0 %v2363, 16
      %v2395 = vpop.permute.xlu0 %2394
      %2396 = vrot.lane.b32.xlu0 %v2365, 16
      %v2397 = vpop.permute.xlu0 %2396
      %2398 = vrot.lane.b32.xlu0 %v2367, 16
      %v2399 = vpop.permute.xlu0 %2398
      %2400 = vrot.lane.b32.xlu0 %v2369, 16
      %v2401 = vpop.permute.xlu0 %2400
      %2402 = vrot.lane.b32.xlu0 %v2371, 16
      %v2403 = vpop.permute.xlu0 %2402
      %2404 = vrot.lane.b32.xlu0 %v2373, 16
      %v2405 = vpop.permute.xlu0 %2404
      %2406 = vrot.lane.b32.xlu0 %v2375, 16
      %v2407 = vpop.permute.xlu0 %2406
      %2408 = vrot.lane.b32.xlu0 %v2377, 16
      %v2409 = vpop.permute.xlu0 %2408
      %2410 = vrot.lane.b32.xlu0 %v2379, 16
      %v2411 = vpop.permute.xlu0 %2410
      %2412 = vrot.lane.b32.xlu0 %v2381, 16
      %v2413 = vpop.permute.xlu0 %2412
      %2414 = vrot.lane.b32.xlu0 %v2383, 16
      %v2415 = vpop.permute.xlu0 %2414
      %2416 = vrot.lane.b32.xlu0 %v2385, 16
      %v2417 = vpop.permute.xlu0 %2416
      %2418 = vrot.lane.b32.xlu0 %v2387, 16
      %v2419 = vpop.permute.xlu0 %2418
      %2420 = vrot.lane.b32.xlu0 %v2389, 16
      %v2421 = vpop.permute.xlu0 %2420
      %v2423 = vsel %vm1869, %v2297, %v1759
      %v2425 = vsel %vm1869, %v2298, %v1761
      %v2427 = vsel %vm1869, %v2299, %v1763
      %v2429 = vsel %vm1869, %v2300, %v1765
      %v2431 = vsel %vm1869, %v2301, %v1767
      %v2433 = vsel %vm1869, %v2302, %v1769
      %v2435 = vsel %vm1869, %v2303, %v1771
      %v2437 = vsel %vm1869, %v2304, %v1773
      %v2439 = vsel %vm1869, %v2305, %v1775
      %v2441 = vsel %vm1869, %v2306, %v1777
      %v2443 = vsel %vm1869, %v2307, %v1779
      %v2445 = vsel %vm1869, %v2308, %v1781
      %v2447 = vsel %vm1869, %v2309, %v1783
      %v2449 = vsel %vm1869, %v2310, %v1785
      %v2451 = vsel %vm1869, %v2311, %v1994
      %v2454 = vsel %vm1869, %v2312, %v2339
      %v2456 = vsel %vm1918, %v2423, %v2391
      %v2458 = vsel %vm1918, %v2425, %v2393
      %v2460 = vsel %vm1918, %v2427, %v2395
      %v2462 = vsel %vm1918, %v2429, %v2397
      %v2464 = vsel %vm1918, %v2431, %v2399
      %v2466 = vsel %vm1918, %v2433, %v2401
      %v2468 = vsel %vm1918, %v2435, %v2403
      %v2470 = vsel %vm1918, %v2437, %v2405
      %v2472 = vsel %vm1918, %v2439, %v2407
      %v2474 = vsel %vm1918, %v2441, %v2409
      %v2476 = vsel %vm1918, %v2443, %v2411
      %v2478 = vsel %vm1918, %v2445, %v2413
      %v2480 = vsel %vm1918, %v2447, %v2415
      %v2482 = vsel %vm1918, %v2449, %v2417
      %v2484 = vsel %vm1918, %v2451, %v2419
      %v2486 = vsel %vm1918, %v2454, %v2421
      %s2487 = scalar_lea.vmem %s3, 8
      %v2488 = vld [vmem:[%s2487] sm:$0xf]
      %v2490 = vsel %vm2144, %v2488, 0
      %v2492 = vsel %vm2144, %v2456, 0
      %v2494 = vsel %vm2144, %v2458, 0
      %v2496 = vsel %vm2144, %v2460, 0
      %v2498 = vsel %vm2144, %v2462, 0
      %v2500 = vsel %vm2144, %v2464, 0
      %v2502 = vsel %vm2144, %v2466, 0
      %v2504 = vsel %vm2144, %v2468, 0
      %v2506 = vsel %vm2144, %v2470, 0
      %v2508 = vsel %vm2144, %v2472, 0
      %v2510 = vsel %vm2144, %v2474, 0
      %v2512 = vsel %vm2144, %v2476, 0
      %v2514 = vsel %vm2144, %v2478, 0
      %v2516 = vsel %vm2144, %v2480, 0
      %v2518 = vsel %vm2144, %v2482, 0
      %v2520 = vsel %vm2144, %v2484, 0
      %v2522 = vsel %vm2144, %v2486, 0
      %2524 = vmatprep.subr.bf16.mxu0 0
      %2525 = vmatpush1.bf16.xpose.msra.mxu0 %v2492
      %2526 = vmatprep.subr.bf16.mxu0 0
      %2527 = vmatpush1.bf16.xpose.msra.mxu0 %v2494
      %2528 = vmatprep.subr.bf16.mxu0 0
      %2529 = vmatpush1.bf16.xpose.msra.mxu0 %v2496
      %2530 = vmatprep.subr.bf16.mxu0 0
      %2531 = vmatpush1.bf16.xpose.msra.mxu0 %v2498
      %2532 = vmatprep.subr.bf16.mxu0 0
      %2533 = vmatpush1.bf16.xpose.msra.mxu0 %v2500
      %2534 = vmatprep.subr.bf16.mxu0 0
      %2535 = vmatpush1.bf16.xpose.msra.mxu0 %v2502
      %2536 = vmatprep.subr.bf16.mxu0 0
      %2537 = vmatpush1.bf16.xpose.msra.mxu0 %v2504
      %2538 = vmatprep.subr.bf16.mxu0 0
      %2539 = vmatpush1.bf16.xpose.msra.mxu0 %v2506
      %2540 = vmatprep.subr.bf16.mxu0 0
      %2541 = vmatpush1.bf16.xpose.msra.mxu0 %v2508
      %2542 = vmatprep.subr.bf16.mxu0 0
      %2543 = vmatpush1.bf16.xpose.msra.mxu0 %v2510
      %2544 = vmatprep.subr.bf16.mxu0 0
      %2545 = vmatpush1.bf16.xpose.msra.mxu0 %v2512
      %2546 = vmatprep.subr.bf16.mxu0 0
      %2547 = vmatpush1.bf16.xpose.msra.mxu0 %v2514
      %2548 = vmatprep.subr.bf16.mxu0 0
      %2549 = vmatpush1.bf16.xpose.msra.mxu0 %v2516
      %2550 = vmatprep.subr.bf16.mxu0 0
      %2551 = vmatpush1.bf16.xpose.msra.mxu0 %v2518
      %2552 = vmatprep.subr.bf16.mxu0 0
      %2553 = vmatpush1.bf16.xpose.msra.mxu0 %v2520
      %2554 = vmatprep.subr.bf16.mxu0 0
      %2555 = vmatpush1.bf16.xpose.msra.mxu0 %v2522
      %2556 = vmatprep.mubr.bf16.mxu0 0
      %2557 = vmatmul.mubr.bf16.gmra.mrb[0].mxu0 %v2490
      %v2558 = vpop.f32.mrb[0].mxu0
      %v2559 = vadd.f32 0.0, %v2558
      %v2560 = vpop.f32.mrb[0].mxu0
      %v2561 = vadd.f32 0.0, %v2560
      %v2562 = vpop.f32.mrb[0].mxu0
      %v2563 = vpop.f32.mrb[0].mxu0
      %2564 = vdwg.mxu0
      %v2565 = vadd.f32 %v2291, %v2559
      %v2566 = vadd.f32 %v2293, %v2561
      %v2567 = vpack.c.bf16 %v2565, %v2565
      %v2568 = vpack.c.bf16 %v2566, %v2566
      %v2571 = vunpack.c.l.b16 %v2567
      %v2572 = vunpack.c.l.b16 %v2568
      %v2573 = vpack.c.b16 %v2572, %v2571
      %2575 = vst [vmem:[%s456] sm:$0xff] %v2573
      %v2576 = vadd.f32 %v2565, %v2566
      %2577 = vadd.xlane.f32.xlu0 %v2576
      %v2578 = vpop.xlane.xlu0 %2577
      %vm2579 = vcmask 7168
      %2580 = vst.msk [vmem:[%s464] sm:$0xff] %vm2579, %v2578
      %v2581 = vmul.f32 %v2565, %v2565
      %v2582 = vmul.f32 %v2566, %v2566
      %v2583 = vadd.f32 %v2581, %v2582
      %2584 = vadd.xlane.f32.xlu0 %v2583
      %v2585 = vpop.xlane.xlu0 %2584
      %vm2586 = vcmask 15368
      %2587 = vst.msk [vmem:[%s464] sm:$0xff] %vm2586, %v2585
      %s2588 = smul.u32 2, %s24
      %p2589 = scmp.lt.s32.totalorder %s23, 1
      %s2590 = scalar_select %p2589, %s23, 1
      %p2591 = scmp.lt.s32.totalorder %s2588, 1
      %s2592 = scalar_select %p2591, %s2588, 1
      %s2593 = smul.addr %s2590, 2
      %s2594 = sadd.s32 %s2592, %s2593
      %s2595 = smul.addr %s2594, 4
      %s2596 = scalar_lea.vmem %s6, %s2595
      %p2597 = scmp.lt.s32.totalorder %s23, 1
      %s2598 = scalar_select %p2597, %s23, 1
      %p2599 = scmp.lt.s32.totalorder %s24, 0
      %s2600 = scalar_select %p2599, %s24, 0
      %s2601 = sadd.s32 %s2600, %s2598
      %s2602 = smul.addr %s2601, 8
      %s2603 = scalar_lea.vmem %s7, %s2602
      // Predicated region
      $region45: #{double_conv.4} parent=43 // pred_check
        %p2604 = pneg %p214
      $region46: #{double_conv.4} parent=43 // pred_check_branch
        %2606 = sbr.rel (%p2604) target = $region48
      $region47: #{double_conv.4} parent=43 // pred_region
        %s2607 = smul.u32 2, %s24
      $region48: #{double_conv.4} parent=43 // pred_fallthru
        _
      // Predicated region
      $region49: #{double_conv.4} parent=43 // pred_check
        %p2608 = pneg %p242
      $region50: #{double_conv.4} parent=43 // pred_check_branch
        %2610 = sbr.rel (%p2608) target = $region52
      $region51: #{double_conv.4} parent=43 // pred_region
        _
      $region52: #{double_conv.4} parent=43 // pred_fallthru
        _
    $region44: #{double_conv.4} parent=5 // pred_fallthru
      _
    %p2611 = scmp.le.s32.totalorder 2, %s14
    // Predicated region
    $region53: #{double_conv.4} parent=5 // pred_check
      %p2612 = pneg %p2611
    $region54: #{double_conv.4} parent=5 // pred_check_branch
      %2614 = sbr.rel (%p2612) target = $region56
    $region55: #{double_conv.4} parent=5 // pred_region
      %s2615 = ssub.s32 %s14, 2
      // Predicated region
      $region57: #{double_conv.4} parent=55 // pred_check
        %p2616 = pneg %p220
      $region58: #{double_conv.4} parent=55 // pred_check_branch
        %2618 = sbr.rel (%p2616) target = $region60
      $region59: #{double_conv.4} parent=55 // pred_region
        %s2619 = smul.u32 2, %s26
        %p2620 = scmp.lt.s32.totalorder %s25, 1
        %s2621 = scalar_select %p2620, %s25, 1
        %p2622 = scmp.lt.s32.totalorder %s2619, 1
        %s2623 = scalar_select %p2622, %s2619, 1
        %s2624 = smul.addr %s2621, 2
        %s2625 = sadd.s32 %s2623, %s2624
        %s2626 = smul.addr %s2625, 4
        %s2627 = scalar_lea.vmem %s6, %s2626
      $region60: #{double_conv.4} parent=55 // pred_fallthru
        _
      // Predicated region
      $region61: #{double_conv.4} parent=55 // pred_check
        %p2628 = pneg %p248
      $region62: #{double_conv.4} parent=55 // pred_check_branch
        %2630 = sbr.rel (%p2628) target = $region64
      $region63: #{double_conv.4} parent=55 // pred_region
        %p2631 = scmp.lt.s32.totalorder %s25, 1
        %s2632 = scalar_select %p2631, %s25, 1
        %p2633 = scmp.lt.s32.totalorder %s26, 0
        %s2634 = scalar_select %p2633, %s26, 0
        %s2635 = sadd.s32 %s2634, %s2632
        %s2636 = smul.addr %s2635, 8
        %s2637 = scalar_lea.vmem %s7, %s2636
      $region64: #{double_conv.4} parent=55 // pred_fallthru
        _
    $region56: #{double_conv.4} parent=5 // pred_fallthru
      _
  $region6: #{double_conv.4} parent=0 // loop_footer
    %s18 = sadd.s32 1, %s14
  $region7: #{double_conv.4} parent=0 // loop_footer_branch
    %13 = sbr.rel target = $region3
  $region8: #{double_conv.4} parent=0 // loop_exit
    _

// kernel: double_conv.3
$region0: #{double_conv.3}
  #allocation0 [shape = 'u32[]', space=smem, size = 0x4, offset = 0x4, fixed_abs, tag = 'smem constant byte address 0x4 - core index']
  #allocation1 [shape = 'u32[144,128]{1,0:T(1,128)}', space=vmem, size = 0x12000, scoped, tag = 'internal scratch']
  %s0 = inlined_call_operand.vmem [shape: bf16[2,256,4], index: 0, kind: input, shape index: {}, may-alias: {0,1,2}]
  %s1 = inlined_call_operand.vmem [shape: bf16[2,256,4], index: 1, kind: input, shape index: {}, may-alias: {0,1,2}]
  %s2 = inlined_call_operand.vmem [shape: bf16[2,256,4], index: 2, kind: input, shape index: {}, may-alias: {0,1,2}]
  %s3 = inlined_call_operand.vmem [shape: bf16[3,12,8], index: 3, kind: input, shape index: {}]
  %s4 = inlined_call_operand.vmem [shape: bf16[2,256,8], index: 4, kind: output, shape index: {0}]
  %s5 = inlined_call_operand.vmem [shape: f32[2,1,2,8], index: 5, kind: output, shape index: {1}]
  %6 = xla_tuple %s4, %s5
  %s7 = sld [smem:[#allocation0]]
  $region57: #{double_conv.3} parent=0
    _
  %s9 = ssub.s32 1, %s7
  %s10 = scalar_select 0, %s9, %s7
  loop: start=0, step=1, limit=4
  $region2: #{double_conv.3} parent=0 // loop_pre_header
    _
  $region3: #{double_conv.3} parent=0 // loop_header
    %s12 = sphi 0, %s16
    %p13 = scmp.ge.s32.totalorder %s12, 4
    %s19 = sphi 0, %s31
    %s20 = sphi 0, %s27
    %s21 = sphi 0, %s19
    %s22 = sphi 0, %s20
    %s23 = sphi 0, %s21
    %s24 = sphi 0, %s22
    %s36 = sphi 0, %s38
    %s39 = sphi 0, %s36
    %s40 = sphi 0, %s39
    %s56 = sphi 0, %s40
    %s72 = sphi 0, %s74
    %s75 = sphi 0, %s72
    %s76 = sphi 0, %s75
    %s92 = sphi 0, %s76
    %s108 = sphi 0, %s110
    %s111 = sphi 0, %s108
    %s112 = sphi 0, %s111
    %s128 = sphi 0, %s112
    %s132 = sphi 0, %s132
    %s134 = sphi 0, %s132
    %s135 = sphi 0, %s134
    %s149 = sphi 0, %s135
    %s157 = sphi 0, %s159
    %s160 = sphi 0, %s157
    %s161 = sphi 0, %s160
    %s177 = sphi 0, %s161
    %s185 = sphi 0, %s187
    %s188 = sphi 0, %s185
    %s189 = sphi 0, %s188
    %s205 = sphi 0, %s189
  $region4: #{double_conv.3} parent=0 // loop_header_branch
    %15 = sbr.rel (%p13) target = $region8
  $region5: #{double_conv.3} parent=0 // loop_body
    %s17 = ssub.s32 %s12, 1
    %s18 = ssub.s32 %s12, 2
    %s25 = sadd.s32 1, %s20
    %p26 = scmp.ge.s32.totalorder %s25, 1
    %s27 = scalar_select %p26, 0, %s25
    %s28 = sadd.s32 1, %s19
    %s29 = scalar_select %p26, %s28, %s19
    %p30 = scmp.ge.s32.totalorder %s29, 2
    %s31 = scalar_select %p30, 0, %s29
    %s32 = ssub.s32 %s19, %s31
    %s33 = ssub.s32 %s20, %s27
    %s34 = sor.u32 %s32, %s33
    %p35 = scmp.eq.s32.totalorder %s34, 0
    %s37 = sadd.s32 %s36, 1
    %s38 = scalar_select %p35, %s36, %s37
    %p41 = pneg %p35
    %p42 = scmp.eq.s32.totalorder %s12, 1
    %p43 = por %p41, %p42
    %p44 = scmp.ne.s32.totalorder %s36, %s39
    %p45 = scmp.eq.s32.totalorder %s12, 0
    %p46 = por %p44, %p45
    %p47 = scmp.ne.s32.totalorder %s36, %s39
    %p48 = scmp.eq.s32.totalorder %s17, 1
    %p49 = por %p47, %p48
    %p50 = scmp.ne.s32.totalorder %s39, %s40
    %p51 = scmp.eq.s32.totalorder %s17, 0
    %p52 = por %p50, %p51
    %p53 = scmp.ne.s32.totalorder %s39, %s40
    %p54 = scmp.eq.s32.totalorder %s18, 1
    %p55 = por %p53, %p54
    %p57 = scmp.ne.s32.totalorder %s40, %s56
    %p58 = scmp.eq.s32.totalorder %s18, 0
    %p59 = por %p57, %p58
    %s60 = smul.u32 %s20, 16
    %s61 = ssub.s32 %s60, 1
    %p62 = scmp.gt.s32.totalorder %s61, 0
    %s63 = scalar_select %p62, %s61, 0
    %s64 = smul.u32 %s27, 16
    %s65 = ssub.s32 %s64, 1
    %p66 = scmp.gt.s32.totalorder %s65, 0
    %s67 = scalar_select %p66, %s65, 0
    %s68 = ssub.s32 %s19, %s31
    %s69 = ssub.s32 %s63, %s67
    %s70 = sor.u32 %s68, %s69
    %p71 = scmp.eq.s32.totalorder %s70, 0
    %s73 = sadd.s32 %s72, 1
    %s74 = scalar_select %p71, %s72, %s73
    %p77 = pneg %p71
    %p78 = scmp.eq.s32.totalorder %s12, 1
    %p79 = por %p77, %p78
    %p80 = scmp.ne.s32.totalorder %s72, %s75
    %p81 = scmp.eq.s32.totalorder %s12, 0
    %p82 = por %p80, %p81
    %p83 = scmp.ne.s32.totalorder %s72, %s75
    %p84 = scmp.eq.s32.totalorder %s17, 1
    %p85 = por %p83, %p84
    %p86 = scmp.ne.s32.totalorder %s75, %s76
    %p87 = scmp.eq.s32.totalorder %s17, 0
    %p88 = por %p86, %p87
    %p89 = scmp.ne.s32.totalorder %s75, %s76
    %p90 = scmp.eq.s32.totalorder %s18, 1
    %p91 = por %p89, %p90
    %p93 = scmp.ne.s32.totalorder %s76, %s92
    %p94 = scmp.eq.s32.totalorder %s18, 0
    %p95 = por %p93, %p94
    %s96 = sadd.s32 %s20, 1
    %s97 = smul.u32 %s96, 16
    %p98 = scmp.lt.s32.totalorder %s97, 15
    %s99 = scalar_select %p98, %s97, 15
    %s100 = sadd.s32 %s27, 1
    %s101 = smul.u32 %s100, 16
    %p102 = scmp.lt.s32.totalorder %s101, 15
    %s103 = scalar_select %p102, %s101, 15
    %s104 = ssub.s32 %s19, %s31
    %s105 = ssub.s32 %s99, %s103
    %s106 = sor.u32 %s104, %s105
    %p107 = scmp.eq.s32.totalorder %s106, 0
    %s109 = sadd.s32 %s108, 1
    %s110 = scalar_select %p107, %s108, %s109
    %p113 = pneg %p107
    %p114 = scmp.eq.s32.totalorder %s12, 1
    %p115 = por %p113, %p114
    %p116 = scmp.ne.s32.totalorder %s108, %s111
    %p117 = scmp.eq.s32.totalorder %s12, 0
    %p118 = por %p116, %p117
    %p119 = scmp.ne.s32.totalorder %s108, %s111
    %p120 = scmp.eq.s32.totalorder %s17, 1
    %p121 = por %p119, %p120
    %p122 = scmp.ne.s32.totalorder %s111, %s112
    %p123 = scmp.eq.s32.totalorder %s17, 0
    %p124 = por %p122, %p123
    %p125 = scmp.ne.s32.totalorder %s111, %s112
    %p126 = scmp.eq.s32.totalorder %s18, 1
    %p127 = por %p125, %p126
    %p129 = scmp.ne.s32.totalorder %s112, %s128
    %p130 = scmp.eq.s32.totalorder %s18, 0
    %p131 = por %p129, %p130
    %s133 = sadd.s32 %s132, 1
    %p136 = scmp.eq.s32.totalorder %s12, 1
    %p137 = scmp.ne.s32.totalorder %s132, %s134
    %p138 = scmp.eq.s32.totalorder %s12, 0
    %p139 = por %p137, %p138
    %p140 = scmp.ne.s32.totalorder %s132, %s134
    %p141 = scmp.eq.s32.totalorder %s17, 1
    %p142 = por %p140, %p141
    %p143 = scmp.ne.s32.totalorder %s134, %s135
    %p144 = scmp.eq.s32.totalorder %s17, 0
    %p145 = por %p143, %p144
    %p146 = scmp.ne.s32.totalorder %s134, %s135
    %p147 = scmp.eq.s32.totalorder %s18, 1
    %p148 = por %p146, %p147
    %p150 = scmp.ne.s32.totalorder %s135, %s149
    %p151 = scmp.eq.s32.totalorder %s18, 0
    %p152 = por %p150, %p151
    %s153 = ssub.s32 %s19, %s31
    %s154 = ssub.s32 %s20, %s27
    %s155 = sor.u32 %s153, %s154
    %p156 = scmp.eq.s32.totalorder %s155, 0
    %s158 = sadd.s32 %s157, 1
    %s159 = scalar_select %p156, %s157, %s158
    %p162 = pneg %p156
    %p163 = scmp.eq.s32.totalorder %s12, 1
    %p164 = por %p162, %p163
    %p165 = scmp.ne.s32.totalorder %s157, %s160
    %p166 = scmp.eq.s32.totalorder %s12, 0
    %p167 = por %p165, %p166
    %p168 = scmp.ne.s32.totalorder %s157, %s160
    %p169 = scmp.eq.s32.totalorder %s17, 1
    %p170 = por %p168, %p169
    %p171 = scmp.ne.s32.totalorder %s160, %s161
    %p172 = scmp.eq.s32.totalorder %s17, 0
    %p173 = por %p171, %p172
    %p174 = scmp.ne.s32.totalorder %s160, %s161
    %p175 = scmp.eq.s32.totalorder %s18, 1
    %p176 = por %p174, %p175
    %p178 = scmp.ne.s32.totalorder %s161, %s177
    %p179 = scmp.eq.s32.totalorder %s18, 0
    %p180 = por %p178, %p179
    %s181 = ssub.s32 %s19, %s31
    %s182 = ssub.s32 %s20, %s27
    %s183 = sor.u32 %s181, %s182
    %p184 = scmp.eq.s32.totalorder %s183, 0
    %s186 = sadd.s32 %s185, 1
    %s187 = scalar_select %p184, %s185, %s186
    %p190 = pneg %p184
    %p191 = scmp.eq.s32.totalorder %s12, 1
    %p192 = por %p190, %p191
    %p193 = scmp.ne.s32.totalorder %s185, %s188
    %p194 = scmp.eq.s32.totalorder %s12, 0
    %p195 = por %p193, %p194
    %p196 = scmp.ne.s32.totalorder %s185, %s188
    %p197 = scmp.eq.s32.totalorder %s17, 1
    %p198 = por %p196, %p197
    %p199 = scmp.ne.s32.totalorder %s188, %s189
    %p200 = scmp.eq.s32.totalorder %s17, 0
    %p201 = por %p199, %p200
    %p202 = scmp.ne.s32.totalorder %s188, %s189
    %p203 = scmp.eq.s32.totalorder %s18, 1
    %p204 = por %p202, %p203
    %p206 = scmp.ne.s32.totalorder %s189, %s205
    %p207 = scmp.eq.s32.totalorder %s18, 0
    %p208 = por %p206, %p207
    %p209 = scmp.le.s32.totalorder 1, %s12
    %p210 = scmp.lt.s32.totalorder %s12, 3
    %p211 = pnand %p209, %p210
    %p212 = pneg %p211
    // Predicated region
    $region9: #{double_conv.3} parent=5 // pred_check
      _
    $region10: #{double_conv.3} parent=5 // pred_check_branch
      %214 = sbr.rel (%p211) target = $region12
    $region11: #{double_conv.3} parent=5 // pred_region
      %s215 = ssub.s32 %s12, 1
      // Predicated region
      $region13: #{double_conv.3} parent=11 // pred_check
        %p216 = pneg %p145
      $region14: #{double_conv.3} parent=11 // pred_check_branch
        %218 = sbr.rel (%p216) target = $region16
      $region15: #{double_conv.3} parent=11 // pred_region
        _
      $region16: #{double_conv.3} parent=11 // pred_fallthru
        _
    $region12: #{double_conv.3} parent=5 // pred_fallthru
      _
    %p219 = scmp.lt.s32.totalorder %s12, 2
    // Predicated region
    $region17: #{double_conv.3} parent=5 // pred_check
      %p220 = pneg %p219
    $region18: #{double_conv.3} parent=5 // pred_check_branch
      %222 = sbr.rel (%p220) target = $region20
    $region19: #{double_conv.3} parent=5 // pred_region
      // Predicated region
      $region21: #{double_conv.3} parent=19 // pred_check
        %p223 = pneg %p46
      $region22: #{double_conv.3} parent=19 // pred_check_branch
        %225 = sbr.rel (%p223) target = $region24
      $region23: #{double_conv.3} parent=19 // pred_region
        %s226 = smul.u32 32, %s20
        %p227 = scmp.lt.s32.totalorder %s19, 1
        %s228 = scalar_select %p227, %s19, 1
        %p229 = scmp.lt.s32.totalorder %s226, 31
        %s230 = scalar_select %p229, %s226, 31
        %s231 = smul.addr %s228, 32
        %s232 = sadd.s32 %s230, %s231
        %s233 = smul.addr %s232, 4
        %s234 = scalar_lea.vmem %s0, %s233
        %s235 = smul.u32 32, %s20
      $region24: #{double_conv.3} parent=19 // pred_fallthru
        _
      // Predicated region
      $region25: #{double_conv.3} parent=19 // pred_check
        %p236 = pneg %p82
      $region26: #{double_conv.3} parent=19 // pred_check_branch
        %238 = sbr.rel (%p236) target = $region28
      $region27: #{double_conv.3} parent=19 // pred_region
        %s239 = smul.u32 %s20, 16
        %s240 = ssub.s32 %s239, 1
        %p241 = scmp.gt.s32.totalorder %s240, 0
        %s242 = scalar_select %p241, %s240, 0
        %s243 = smul.u32 2, %s242
        %p244 = scmp.lt.s32.totalorder %s19, 1
        %s245 = scalar_select %p244, %s19, 1
        %p246 = scmp.lt.s32.totalorder %s243, 31
        %s247 = scalar_select %p246, %s243, 31
        %s248 = smul.addr %s245, 32
        %s249 = sadd.s32 %s247, %s248
        %s250 = smul.addr %s249, 4
        %s251 = scalar_lea.vmem %s1, %s250
        %s252 = smul.u32 %s20, 16
        %s253 = ssub.s32 %s252, 1
        %p254 = scmp.gt.s32.totalorder %s253, 0
        %s255 = scalar_select %p254, %s253, 0
        %s256 = smul.u32 2, %s255
      $region28: #{double_conv.3} parent=19 // pred_fallthru
        _
      // Predicated region
      $region29: #{double_conv.3} parent=19 // pred_check
        %p257 = pneg %p118
      $region30: #{double_conv.3} parent=19 // pred_check_branch
        %259 = sbr.rel (%p257) target = $region32
      $region31: #{double_conv.3} parent=19 // pred_region
        %s260 = sadd.s32 %s20, 1
        %s261 = smul.u32 %s260, 16
        %p262 = scmp.lt.s32.totalorder %s261, 15
        %s263 = scalar_select %p262, %s261, 15
        %s264 = smul.u32 2, %s263
        %p265 = scmp.lt.s32.totalorder %s19, 1
        %s266 = scalar_select %p265, %s19, 1
        %p267 = scmp.lt.s32.totalorder %s264, 31
        %s268 = scalar_select %p267, %s264, 31
        %s269 = smul.addr %s266, 32
        %s270 = sadd.s32 %s268, %s269
        %s271 = smul.addr %s270, 4
        %s272 = scalar_lea.vmem %s2, %s271
        %s273 = sadd.s32 %s20, 1
        %s274 = smul.u32 %s273, 16
        %p275 = scmp.lt.s32.totalorder %s274, 15
        %s276 = scalar_select %p275, %s274, 15
        %s277 = smul.u32 2, %s276
      $region32: #{double_conv.3} parent=19 // pred_fallthru
        _
    $region20: #{double_conv.3} parent=5 // pred_fallthru
      _
    %p278 = scmp.le.s32.totalorder 1, %s12
    %p279 = scmp.lt.s32.totalorder %s12, 3
    %p280 = pnand %p278, %p279
    %p281 = pneg %p280
    // Predicated region
    $region33: #{double_conv.3} parent=5 // pred_check
      _
    $region34: #{double_conv.3} parent=5 // pred_check_branch
      %283 = sbr.rel (%p280) target = $region36
    $region35: #{double_conv.3} parent=5 // pred_region
      %s284 = ssub.s32 %s12, 1
      %s285 = smul.u32 32, %s22
      %p286 = scmp.lt.s32.totalorder %s21, 1
      %s287 = scalar_select %p286, %s21, 1
      %p288 = scmp.lt.s32.totalorder %s285, 31
      %s289 = scalar_select %p288, %s285, 31
      %s290 = smul.addr %s287, 32
      %s291 = sadd.s32 %s289, %s290
      %s292 = smul.addr %s291, 4
      %s293 = scalar_lea.vmem %s0, %s292
      %p294 = pneg %p52
      %p295 = pneg %p49
      %s296 = smul.u32 %s22, 16
      %s297 = ssub.s32 %s296, 1
      %p298 = scmp.gt.s32.totalorder %s297, 0
      %s299 = scalar_select %p298, %s297, 0
      %s300 = smul.u32 2, %s299
      %p301 = scmp.lt.s32.totalorder %s21, 1
      %s302 = scalar_select %p301, %s21, 1
      %p303 = scmp.lt.s32.totalorder %s300, 31
      %s304 = scalar_select %p303, %s300, 31
      %s305 = smul.addr %s302, 32
      %s306 = sadd.s32 %s304, %s305
      %s307 = smul.addr %s306, 4
      %s308 = scalar_lea.vmem %s1, %s307
      %p309 = pneg %p88
      %p310 = pneg %p85
      %s311 = sadd.s32 %s22, 1
      %s312 = smul.u32 %s311, 16
      %p313 = scmp.lt.s32.totalorder %s312, 15
      %s314 = scalar_select %p313, %s312, 15
      %s315 = smul.u32 2, %s314
      %p316 = scmp.lt.s32.totalorder %s21, 1
      %s317 = scalar_select %p316, %s21, 1
      %p318 = scmp.lt.s32.totalorder %s315, 31
      %s319 = scalar_select %p318, %s315, 31
      %s320 = smul.addr %s317, 32
      %s321 = sadd.s32 %s319, %s320
      %s322 = smul.addr %s321, 4
      %s323 = scalar_lea.vmem %s2, %s322
      %p324 = pneg %p124
      %p325 = pneg %p121
      %p326 = pneg %p145
      %p327 = pneg %p142
      %p328 = pneg %p173
      %p329 = pneg %p170
      %s330 = smul.u32 32, %s22
      %p331 = scmp.lt.s32.totalorder %s21, 1
      %s332 = scalar_select %p331, %s21, 1
      %p333 = scmp.lt.s32.totalorder %s330, 31
      %s334 = scalar_select %p333, %s330, 31
      %s335 = smul.addr %s332, 32
      %s336 = sadd.s32 %s334, %s335
      %s337 = smul.addr %s336, 4
      %s338 = scalar_lea.vmem %s4, %s337
      %p339 = pneg %p201
      %p340 = pneg %p198
      %p341 = scmp.lt.s32.totalorder %s21, 1
      %s342 = scalar_select %p341, %s21, 1
      %p343 = scmp.lt.s32.totalorder %s22, 0
      %s344 = scalar_select %p343, %s22, 0
      %s345 = sadd.s32 %s344, %s342
      %s346 = smul.addr %s345, 2
      %s347 = scalar_lea.vmem %s5, %s346
      %s348 = smul.u32 32, %s22
      %p349 = scmp.lt.s32.totalorder %s21, 1
      %s350 = scalar_select %p349, %s21, 1
      %p351 = scmp.lt.s32.totalorder %s348, 31
      %s352 = scalar_select %p351, %s348, 31
      %s353 = smul.addr %s350, 32
      %s354 = sadd.s32 %s352, %s353
      %s355 = smul.addr %s354, 4
      %s356 = scalar_lea.vmem %s0, %s355
      %s357 = smul.u32 32, %s22
      %s358 = smul.u32 %s22, 16
      %s359 = ssub.s32 %s358, 1
      %p360 = scmp.gt.s32.totalorder %s359, 0
      %s361 = scalar_select %p360, %s359, 0
      %s362 = smul.u32 2, %s361
      %p363 = scmp.lt.s32.totalorder %s21, 1
      %s364 = scalar_select %p363, %s21, 1
      %p365 = scmp.lt.s32.totalorder %s362, 31
      %s366 = scalar_select %p365, %s362, 31
      %s367 = smul.addr %s364, 32
      %s368 = sadd.s32 %s366, %s367
      %s369 = smul.addr %s368, 4
      %s370 = scalar_lea.vmem %s1, %s369
      %s371 = smul.u32 %s22, 16
      %s372 = ssub.s32 %s371, 1
      %p373 = scmp.gt.s32.totalorder %s372, 0
      %s374 = scalar_select %p373, %s372, 0
      %s375 = smul.u32 2, %s374
      %s376 = sadd.s32 %s22, 1
      %s377 = smul.u32 %s376, 16
      %p378 = scmp.lt.s32.totalorder %s377, 15
      %s379 = scalar_select %p378, %s377, 15
      %s380 = smul.u32 2, %s379
      %p381 = scmp.lt.s32.totalorder %s21, 1
      %s382 = scalar_select %p381, %s21, 1
      %p383 = scmp.lt.s32.totalorder %s380, 31
      %s384 = scalar_select %p383, %s380, 31
      %s385 = smul.addr %s382, 32
      %s386 = sadd.s32 %s384, %s385
      %s387 = smul.addr %s386, 4
      %s388 = scalar_lea.vmem %s2, %s387
      %s389 = sadd.s32 %s22, 1
      %s390 = smul.u32 %s389, 16
      %p391 = scmp.lt.s32.totalorder %s390, 15
      %s392 = scalar_select %p391, %s390, 15
      %s393 = smul.u32 2, %s392
      %s394 = smul.u32 32, %s22
      %p395 = scmp.lt.s32.totalorder %s21, 1
      %s396 = scalar_select %p395, %s21, 1
      %p397 = scmp.lt.s32.totalorder %s394, 31
      %s398 = scalar_select %p397, %s394, 31
      %s399 = smul.addr %s396, 32
      %s400 = sadd.s32 %s398, %s399
      %s401 = smul.addr %s400, 4
      %s402 = scalar_lea.vmem %s4, %s401
      %s403 = smul.u32 32, %s22
      %p404 = scmp.lt.s32.totalorder %s21, 1
      %s405 = scalar_select %p404, %s21, 1
      %p406 = scmp.lt.s32.totalorder %s22, 0
      %s407 = scalar_select %p406, %s22, 0
      %s408 = sadd.s32 %s407, %s405
      %s409 = smul.addr %s408, 2
      %s410 = scalar_lea.vmem %s5, %s409
      %v412 = vld [vmem:[%s356] sm:$0xf]
      %v413 = vld [vmem:[%s356 + $0x4] sm:$0xf]
      %v414 = vld [vmem:[%s356 + $0x8] sm:$0xf]
      %v415 = vld [vmem:[%s356 + $0xc] sm:$0xf]
      %v416 = vld [vmem:[%s356 + $0x10] sm:$0xf]
      %v417 = vld [vmem:[%s356 + $0x14] sm:$0xf]
      %v418 = vld [vmem:[%s356 + $0x18] sm:$0xf]
      %v419 = vld [vmem:[%s356 + $0x1c] sm:$0xf]
      %v420 = vld [vmem:[%s356 + $0x20] sm:$0xf]
      %v421 = vld [vmem:[%s356 + $0x24] sm:$0xf]
      %v422 = vld [vmem:[%s356 + $0x28] sm:$0xf]
      %v423 = vld [vmem:[%s356 + $0x2c] sm:$0xf]
      %v424 = vld [vmem:[%s356 + $0x30] sm:$0xf]
      %v425 = vld [vmem:[%s356 + $0x34] sm:$0xf]
      %v426 = vld [vmem:[%s356 + $0x38] sm:$0xf]
      %v427 = vld [vmem:[%s356 + $0x3c] sm:$0xf]
      %v428 = vld [vmem:[%s356 + $0x40] sm:$0xf]
      %v429 = vld [vmem:[%s356 + $0x44] sm:$0xf]
      %v430 = vld [vmem:[%s356 + $0x48] sm:$0xf]
      %v431 = vld [vmem:[%s356 + $0x4c] sm:$0xf]
      %v432 = vld [vmem:[%s356 + $0x50] sm:$0xf]
      %v433 = vld [vmem:[%s356 + $0x54] sm:$0xf]
      %v434 = vld [vmem:[%s356 + $0x58] sm:$0xf]
      %v435 = vld [vmem:[%s356 + $0x5c] sm:$0xf]
      %v436 = vld [vmem:[%s356 + $0x60] sm:$0xf]
      %v437 = vld [vmem:[%s356 + $0x64] sm:$0xf]
      %v438 = vld [vmem:[%s356 + $0x68] sm:$0xf]
      %v439 = vld [vmem:[%s356 + $0x6c] sm:$0xf]
      %v440 = vld [vmem:[%s356 + $0x70] sm:$0xf]
      %v441 = vld [vmem:[%s356 + $0x74] sm:$0xf]
      %v442 = vld [vmem:[%s356 + $0x78] sm:$0xf]
      %v443 = vld [vmem:[%s356 + $0x7c] sm:$0xf]
      %v444 = vld [vmem:[%s370] sm:$0xf]
      %v445 = vld [vmem:[%s370 + $0x4] sm:$0xf]
      %p446 = scmp.gt.s32.totalorder %s22, 0
      %s447 = scalar_select %p446, 1, 0
      %s448 = scvt.s32.f32 %s447
      %p450 = scmp.ne.f32.partialorder %s448, %s448
      %s451 = sshrl.u32 %s448, 16
      %s452 = sand.u32 %s451, 1
      %s453 = sadd.s32 32767, %s452
      %s454 = sadd.s32 %s448, %s453
      %s455 = sand.u32 %s454, 4294901760
      %s456 = scalar_select %p450, 2143289344, %s455
      %s458 = sshrl.u32 %s456, 16
      %s459 = sshll.u32 %s458, 16
      %s460 = sor.u32 %s458, %s459
      %v461 = vstv %s460
      %v463 = vmul.bf16 %v444, %v461
      %v464 = vmul.bf16 %v445, %v461
      %v465 = vld [vmem:[%s388] sm:$0xf]
      %v466 = vld [vmem:[%s388 + $0x4] sm:$0xf]
      %p467 = scmp.lt.s32.totalorder %s22, 0
      %s468 = scalar_select %p467, 1, 0
      %s469 = scvt.s32.f32 %s468
      %p471 = scmp.ne.f32.partialorder %s469, %s469
      %s472 = sshrl.u32 %s469, 16
      %s473 = sand.u32 %s472, 1
      %s474 = sadd.s32 32767, %s473
      %s475 = sadd.s32 %s469, %s474
      %s476 = sand.u32 %s475, 4294901760
      %s477 = scalar_select %p471, 2143289344, %s476
      %s479 = sshrl.u32 %s477, 16
      %s480 = sshll.u32 %s479, 16
      %s481 = sor.u32 %s479, %s480
      %v482 = vstv %s481
      %v484 = vmul.bf16 %v465, %v482
      %v485 = vmul.bf16 %v466, %v482
      %v488 = vunpack.c.l.b16 %v463
      %v489 = vunpack.c.l.b16 %v464
      %v490 = vpack.c.b16 %v489, %v488
      %v492 = vshrl.u32 %v490, 16
      %v494 = vrot.slane %v492, 7
      %v495 = vshll.u32 %v490, 16
      %v497 = vor.u32 %v494, %v495
      %v532 = vunpack.c.l.b16 %v412
      %v533 = vunpack.c.l.b16 %v413
      %v534 = vunpack.c.l.b16 %v414
      %v535 = vunpack.c.l.b16 %v415
      %v536 = vunpack.c.l.b16 %v416
      %v537 = vunpack.c.l.b16 %v417
      %v538 = vunpack.c.l.b16 %v418
      %v539 = vunpack.c.l.b16 %v419
      %v540 = vunpack.c.l.b16 %v420
      %v541 = vunpack.c.l.b16 %v421
      %v542 = vunpack.c.l.b16 %v422
      %v543 = vunpack.c.l.b16 %v423
      %v544 = vunpack.c.l.b16 %v424
      %v545 = vunpack.c.l.b16 %v425
      %v546 = vunpack.c.l.b16 %v426
      %v547 = vunpack.c.l.b16 %v427
      %v548 = vunpack.c.l.b16 %v428
      %v549 = vunpack.c.l.b16 %v429
      %v550 = vunpack.c.l.b16 %v430
      %v551 = vunpack.c.l.b16 %v431
      %v552 = vunpack.c.l.b16 %v432
      %v553 = vunpack.c.l.b16 %v433
      %v554 = vunpack.c.l.b16 %v434
      %v555 = vunpack.c.l.b16 %v435
      %v556 = vunpack.c.l.b16 %v436
      %v557 = vunpack.c.l.b16 %v437
      %v558 = vunpack.c.l.b16 %v438
      %v559 = vunpack.c.l.b16 %v439
      %v560 = vunpack.c.l.b16 %v440
      %v561 = vunpack.c.l.b16 %v441
      %v562 = vunpack.c.l.b16 %v442
      %v563 = vunpack.c.l.b16 %v443
      %v564 = vpack.c.b16 %v533, %v532
      %v565 = vpack.c.b16 %v535, %v534
      %v566 = vpack.c.b16 %v537, %v536
      %v567 = vpack.c.b16 %v539, %v538
      %v568 = vpack.c.b16 %v541, %v540
      %v569 = vpack.c.b16 %v543, %v542
      %v570 = vpack.c.b16 %v545, %v544
      %v571 = vpack.c.b16 %v547, %v546
      %v572 = vpack.c.b16 %v549, %v548
      %v573 = vpack.c.b16 %v551, %v550
      %v574 = vpack.c.b16 %v553, %v552
      %v575 = vpack.c.b16 %v555, %v554
      %v576 = vpack.c.b16 %v557, %v556
      %v577 = vpack.c.b16 %v559, %v558
      %v578 = vpack.c.b16 %v561, %v560
      %v579 = vpack.c.b16 %v563, %v562
      %vm580 = vsmask.f32 256
      %v582 = vshrl.u32 %v564, 16
      %v584 = vrot.slane %v582, 7
      %v585 = vshll.u32 %v564, 16
      %v587 = vor.u32 %v584, %v585
      %v589 = vshrl.u32 %v565, 16
      %v591 = vrot.slane %v589, 7
      %v592 = vshll.u32 %v565, 16
      %v594 = vor.u32 %v591, %v592
      %v595 = vsel %vm580, %v584, %v594
      %v597 = vshrl.u32 %v566, 16
      %v599 = vrot.slane %v597, 7
      %v600 = vshll.u32 %v566, 16
      %v602 = vor.u32 %v599, %v600
      %v603 = vsel %vm580, %v591, %v602
      %v605 = vshrl.u32 %v567, 16
      %v607 = vrot.slane %v605, 7
      %v608 = vshll.u32 %v567, 16
      %v610 = vor.u32 %v607, %v608
      %v611 = vsel %vm580, %v599, %v610
      %v613 = vshrl.u32 %v568, 16
      %v615 = vrot.slane %v613, 7
      %v616 = vshll.u32 %v568, 16
      %v618 = vor.u32 %v615, %v616
      %v619 = vsel %vm580, %v607, %v618
      %v621 = vshrl.u32 %v569, 16
      %v623 = vrot.slane %v621, 7
      %v624 = vshll.u32 %v569, 16
      %v626 = vor.u32 %v623, %v624
      %v627 = vsel %vm580, %v615, %v626
      %v629 = vshrl.u32 %v570, 16
      %v631 = vrot.slane %v629, 7
      %v632 = vshll.u32 %v570, 16
      %v634 = vor.u32 %v631, %v632
      %v635 = vsel %vm580, %v623, %v634
      %v637 = vshrl.u32 %v571, 16
      %v639 = vrot.slane %v637, 7
      %v640 = vshll.u32 %v571, 16
      %v642 = vor.u32 %v639, %v640
      %v643 = vsel %vm580, %v631, %v642
      %v645 = vshrl.u32 %v572, 16
      %v647 = vrot.slane %v645, 7
      %v648 = vshll.u32 %v572, 16
      %v650 = vor.u32 %v647, %v648
      %v651 = vsel %vm580, %v639, %v650
      %v653 = vshrl.u32 %v573, 16
      %v655 = vrot.slane %v653, 7
      %v656 = vshll.u32 %v573, 16
      %v658 = vor.u32 %v655, %v656
      %v659 = vsel %vm580, %v647, %v658
      %v661 = vshrl.u32 %v574, 16
      %v663 = vrot.slane %v661, 7
      %v664 = vshll.u32 %v574, 16
      %v666 = vor.u32 %v663, %v664
      %v667 = vsel %vm580, %v655, %v666
      %v669 = vshrl.u32 %v575, 16
      %v671 = vrot.slane %v669, 7
      %v672 = vshll.u32 %v575, 16
      %v674 = vor.u32 %v671, %v672
      %v675 = vsel %vm580, %v663, %v674
      %v677 = vshrl.u32 %v576, 16
      %v679 = vrot.slane %v677, 7
      %v680 = vshll.u32 %v576, 16
      %v682 = vor.u32 %v679, %v680
      %v683 = vsel %vm580, %v671, %v682
      %v685 = vshrl.u32 %v577, 16
      %v687 = vrot.slane %v685, 7
      %v688 = vshll.u32 %v577, 16
      %v690 = vor.u32 %v687, %v688
      %v691 = vsel %vm580, %v679, %v690
      %v693 = vshrl.u32 %v578, 16
      %v695 = vrot.slane %v693, 7
      %v696 = vshll.u32 %v578, 16
      %v698 = vor.u32 %v695, %v696
      %v699 = vsel %vm580, %v687, %v698
      %v701 = vshrl.u32 %v579, 16
      %v703 = vrot.slane %v701, 7
      %v704 = vshll.u32 %v579, 16
      %v706 = vor.u32 %v703, %v704
      %v707 = vsel %vm580, %v695, %v706
      %v727 = vunpack.c.l.b16 %v484
      %v728 = vunpack.c.l.b16 %v485
      %v729 = vpack.c.b16 %v728, %v727
      %v731 = vshrl.u32 %v729, 16
      %v733 = vrot.slane %v731, 7
      %v734 = vshll.u32 %v729, 16
      %v736 = vor.u32 %v733, %v734
      %vm739 = vcmask 1040384
      %vm740 = vmand %vm739, %vm580
      %v741 = vsel %vm740, 0, %v497
      %v742 = vsel %vm740, %v494, %v587
      %v743 = vsel %vm740, %v703, %v736
      %v744 = vsel %vm740, %v733, 0
      %v745 = vlaneseq
      %v746 = vshrl.u32 %v745, 7
      %v747 = vadd.s32 %v746, 8
      %v748 = vadd.s32 %v746, 16
      %v749 = vadd.s32 %v746, 24
      %v750 = vadd.s32 %v746, 32
      %v751 = vadd.s32 %v746, 40
      %v752 = vadd.s32 %v746, 48
      %v753 = vadd.s32 %v746, 56
      %v754 = vadd.s32 %v746, 64
      %v755 = vadd.s32 %v746, 72
      %v756 = vadd.s32 %v746, 80
      %v757 = vadd.s32 %v746, 88
      %v758 = vadd.s32 %v746, 96
      %v759 = vadd.s32 %v746, 104
      %v760 = vadd.s32 %v746, 112
      %v761 = vadd.s32 %v746, 120
      %v762 = vadd.s32 %v746, 128
      %v763 = vadd.s32 %v746, 136
      %v764 = vadd.s32 %v746, 144
      %v765 = vadd.s32 %v746, 152
      %v766 = vadd.s32 %v746, 160
      %v767 = vadd.s32 %v746, 168
      %v768 = vadd.s32 %v746, 176
      %v769 = vadd.s32 %v746, 184
      %v770 = vadd.s32 %v746, 192
      %v771 = vadd.s32 %v746, 200
      %v772 = vadd.s32 %v746, 208
      %v773 = vadd.s32 %v746, 216
      %v774 = vadd.s32 %v746, 224
      %v775 = vadd.s32 %v746, 232
      %v776 = vadd.s32 %v746, 240
      %v777 = vadd.s32 %v746, 248
      %vm778 = vcmp.lt.s32.totalorder %v746, 0
      %v779 = vsub.s32 0, %v746
      %v780 = vsel %vm778, %v779, %v746
      %v781 = vshrl.u32 %v780, 4
      %v782 = vand.u32 %v780, 15
      %v783 = vsub.s32 0, %v782
      %v784 = vsel %vm778, %v783, %v782
      %vm785 = vcmp.lt.s32.totalorder %v747, 0
      %v786 = vsub.s32 0, %v747
      %v787 = vsel %vm785, %v786, %v747
      %v788 = vshrl.u32 %v787, 4
      %v789 = vand.u32 %v787, 15
      %v790 = vsub.s32 0, %v789
      %v791 = vsel %vm785, %v790, %v789
      %vm792 = vcmp.lt.s32.totalorder %v748, 0
      %v793 = vsub.s32 0, %v748
      %v794 = vsel %vm792, %v793, %v748
      %v795 = vshrl.u32 %v794, 4
      %v796 = vand.u32 %v794, 15
      %v797 = vsub.s32 0, %v796
      %v798 = vsel %vm792, %v797, %v796
      %vm799 = vcmp.lt.s32.totalorder %v749, 0
      %v800 = vsub.s32 0, %v749
      %v801 = vsel %vm799, %v800, %v749
      %v802 = vshrl.u32 %v801, 4
      %v803 = vand.u32 %v801, 15
      %v804 = vsub.s32 0, %v803
      %v805 = vsel %vm799, %v804, %v803
      %vm806 = vcmp.lt.s32.totalorder %v750, 0
      %v807 = vsub.s32 0, %v750
      %v808 = vsel %vm806, %v807, %v750
      %v809 = vshrl.u32 %v808, 4
      %v810 = vand.u32 %v808, 15
      %v811 = vsub.s32 0, %v810
      %v812 = vsel %vm806, %v811, %v810
      %vm813 = vcmp.lt.s32.totalorder %v751, 0
      %v814 = vsub.s32 0, %v751
      %v815 = vsel %vm813, %v814, %v751
      %v816 = vshrl.u32 %v815, 4
      %v817 = vand.u32 %v815, 15
      %v818 = vsub.s32 0, %v817
      %v819 = vsel %vm813, %v818, %v817
      %vm820 = vcmp.lt.s32.totalorder %v752, 0
      %v821 = vsub.s32 0, %v752
      %v822 = vsel %vm820, %v821, %v752
      %v823 = vshrl.u32 %v822, 4
      %v824 = vand.u32 %v822, 15
      %v825 = vsub.s32 0, %v824
      %v826 = vsel %vm820, %v825, %v824
      %vm827 = vcmp.lt.s32.totalorder %v753, 0
      %v828 = vsub.s32 0, %v753
      %v829 = vsel %vm827, %v828, %v753
      %v830 = vshrl.u32 %v829, 4
      %v831 = vand.u32 %v829, 15
      %v832 = vsub.s32 0, %v831
      %v833 = vsel %vm827, %v832, %v831
      %vm834 = vcmp.lt.s32.totalorder %v754, 0
      %v835 = vsub.s32 0, %v754
      %v836 = vsel %vm834, %v835, %v754
      %v837 = vshrl.u32 %v836, 4
      %v838 = vand.u32 %v836, 15
      %v839 = vsub.s32 0, %v838
      %v840 = vsel %vm834, %v839, %v838
      %vm841 = vcmp.lt.s32.totalorder %v755, 0
      %v842 = vsub.s32 0, %v755
      %v843 = vsel %vm841, %v842, %v755
      %v844 = vshrl.u32 %v843, 4
      %v845 = vand.u32 %v843, 15
      %v846 = vsub.s32 0, %v845
      %v847 = vsel %vm841, %v846, %v845
      %vm848 = vcmp.lt.s32.totalorder %v756, 0
      %v849 = vsub.s32 0, %v756
      %v850 = vsel %vm848, %v849, %v756
      %v851 = vshrl.u32 %v850, 4
      %v852 = vand.u32 %v850, 15
      %v853 = vsub.s32 0, %v852
      %v854 = vsel %vm848, %v853, %v852
      %vm855 = vcmp.lt.s32.totalorder %v757, 0
      %v856 = vsub.s32 0, %v757
      %v857 = vsel %vm855, %v856, %v757
      %v858 = vshrl.u32 %v857, 4
      %v859 = vand.u32 %v857, 15
      %v860 = vsub.s32 0, %v859
      %v861 = vsel %vm855, %v860, %v859
      %vm862 = vcmp.lt.s32.totalorder %v758, 0
      %v863 = vsub.s32 0, %v758
      %v864 = vsel %vm862, %v863, %v758
      %v865 = vshrl.u32 %v864, 4
      %v866 = vand.u32 %v864, 15
      %v867 = vsub.s32 0, %v866
      %v868 = vsel %vm862, %v867, %v866
      %vm869 = vcmp.lt.s32.totalorder %v759, 0
      %v870 = vsub.s32 0, %v759
      %v871 = vsel %vm869, %v870, %v759
      %v872 = vshrl.u32 %v871, 4
      %v873 = vand.u32 %v871, 15
      %v874 = vsub.s32 0, %v873
      %v875 = vsel %vm869, %v874, %v873
      %vm876 = vcmp.lt.s32.totalorder %v760, 0
      %v877 = vsub.s32 0, %v760
      %v878 = vsel %vm876, %v877, %v760
      %v879 = vshrl.u32 %v878, 4
      %v880 = vand.u32 %v878, 15
      %v881 = vsub.s32 0, %v880
      %v882 = vsel %vm876, %v881, %v880
      %vm883 = vcmp.lt.s32.totalorder %v761, 0
      %v884 = vsub.s32 0, %v761
      %v885 = vsel %vm883, %v884, %v761
      %v886 = vshrl.u32 %v885, 4
      %v887 = vand.u32 %v885, 15
      %v888 = vsub.s32 0, %v887
      %v889 = vsel %vm883, %v888, %v887
      %vm890 = vcmp.lt.s32.totalorder %v762, 0
      %v891 = vsub.s32 0, %v762
      %v892 = vsel %vm890, %v891, %v762
      %v893 = vshrl.u32 %v892, 4
      %v894 = vand.u32 %v892, 15
      %v895 = vsub.s32 0, %v894
      %v896 = vsel %vm890, %v895, %v894
      %vm897 = vcmp.lt.s32.totalorder %v763, 0
      %v898 = vsub.s32 0, %v763
      %v899 = vsel %vm897, %v898, %v763
      %v900 = vshrl.u32 %v899, 4
      %v901 = vand.u32 %v899, 15
      %v902 = vsub.s32 0, %v901
      %v903 = vsel %vm897, %v902, %v901
      %vm904 = vcmp.lt.s32.totalorder %v764, 0
      %v905 = vsub.s32 0, %v764
      %v906 = vsel %vm904, %v905, %v764
      %v907 = vshrl.u32 %v906, 4
      %v908 = vand.u32 %v906, 15
      %v909 = vsub.s32 0, %v908
      %v910 = vsel %vm904, %v909, %v908
      %vm911 = vcmp.lt.s32.totalorder %v765, 0
      %v912 = vsub.s32 0, %v765
      %v913 = vsel %vm911, %v912, %v765
      %v914 = vshrl.u32 %v913, 4
      %v915 = vand.u32 %v913, 15
      %v916 = vsub.s32 0, %v915
      %v917 = vsel %vm911, %v916, %v915
      %vm918 = vcmp.lt.s32.totalorder %v766, 0
      %v919 = vsub.s32 0, %v766
      %v920 = vsel %vm918, %v919, %v766
      %v921 = vshrl.u32 %v920, 4
      %v922 = vand.u32 %v920, 15
      %v923 = vsub.s32 0, %v922
      %v924 = vsel %vm918, %v923, %v922
      %vm925 = vcmp.lt.s32.totalorder %v767, 0
      %v926 = vsub.s32 0, %v767
      %v927 = vsel %vm925, %v926, %v767
      %v928 = vshrl.u32 %v927, 4
      %v929 = vand.u32 %v927, 15
      %v930 = vsub.s32 0, %v929
      %v931 = vsel %vm925, %v930, %v929
      %vm932 = vcmp.lt.s32.totalorder %v768, 0
      %v933 = vsub.s32 0, %v768
      %v934 = vsel %vm932, %v933, %v768
      %v935 = vshrl.u32 %v934, 4
      %v936 = vand.u32 %v934, 15
      %v937 = vsub.s32 0, %v936
      %v938 = vsel %vm932, %v937, %v936
      %vm939 = vcmp.lt.s32.totalorder %v769, 0
      %v940 = vsub.s32 0, %v769
      %v941 = vsel %vm939, %v940, %v769
      %v942 = vshrl.u32 %v941, 4
      %v943 = vand.u32 %v941, 15
      %v944 = vsub.s32 0, %v943
      %v945 = vsel %vm939, %v944, %v943
      %vm946 = vcmp.lt.s32.totalorder %v770, 0
      %v947 = vsub.s32 0, %v770
      %v948 = vsel %vm946, %v947, %v770
      %v949 = vshrl.u32 %v948, 4
      %v950 = vand.u32 %v948, 15
      %v951 = vsub.s32 0, %v950
      %v952 = vsel %vm946, %v951, %v950
      %vm953 = vcmp.lt.s32.totalorder %v771, 0
      %v954 = vsub.s32 0, %v771
      %v955 = vsel %vm953, %v954, %v771
      %v956 = vshrl.u32 %v955, 4
      %v957 = vand.u32 %v955, 15
      %v958 = vsub.s32 0, %v957
      %v959 = vsel %vm953, %v958, %v957
      %vm960 = vcmp.lt.s32.totalorder %v772, 0
      %v961 = vsub.s32 0, %v772
      %v962 = vsel %vm960, %v961, %v772
      %v963 = vshrl.u32 %v962, 4
      %v964 = vand.u32 %v962, 15
      %v965 = vsub.s32 0, %v964
      %v966 = vsel %vm960, %v965, %v964
      %vm967 = vcmp.lt.s32.totalorder %v773, 0
      %v968 = vsub.s32 0, %v773
      %v969 = vsel %vm967, %v968, %v773
      %v970 = vshrl.u32 %v969, 4
      %v971 = vand.u32 %v969, 15
      %v972 = vsub.s32 0, %v971
      %v973 = vsel %vm967, %v972, %v971
      %vm974 = vcmp.lt.s32.totalorder %v774, 0
      %v975 = vsub.s32 0, %v774
      %v976 = vsel %vm974, %v975, %v774
      %v977 = vshrl.u32 %v976, 4
      %v978 = vand.u32 %v976, 15
      %v979 = vsub.s32 0, %v978
      %v980 = vsel %vm974, %v979, %v978
      %vm981 = vcmp.lt.s32.totalorder %v775, 0
      %v982 = vsub.s32 0, %v775
      %v983 = vsel %vm981, %v982, %v775
      %v984 = vshrl.u32 %v983, 4
      %v985 = vand.u32 %v983, 15
      %v986 = vsub.s32 0, %v985
      %v987 = vsel %vm981, %v986, %v985
      %vm988 = vcmp.lt.s32.totalorder %v776, 0
      %v989 = vsub.s32 0, %v776
      %v990 = vsel %vm988, %v989, %v776
      %v991 = vshrl.u32 %v990, 4
      %v992 = vand.u32 %v990, 15
      %v993 = vsub.s32 0, %v992
      %v994 = vsel %vm988, %v993, %v992
      %vm995 = vcmp.lt.s32.totalorder %v777, 0
      %v996 = vsub.s32 0, %v777
      %v997 = vsel %vm995, %v996, %v777
      %v998 = vshrl.u32 %v997, 4
      %v999 = vand.u32 %v997, 15
      %v1000 = vsub.s32 0, %v999
      %v1001 = vsel %vm995, %v1000, %v999
      %vm1002 = vcmp.ne.s32.totalorder %v784, 0
      %vm1003 = vcmp.ne.s32.totalorder %v791, 0
      %vm1004 = vcmp.ne.s32.totalorder %v798, 0
      %vm1005 = vcmp.ne.s32.totalorder %v805, 0
      %vm1006 = vcmp.ne.s32.totalorder %v812, 0
      %vm1007 = vcmp.ne.s32.totalorder %v819, 0
      %vm1008 = vcmp.ne.s32.totalorder %v826, 0
      %vm1009 = vcmp.ne.s32.totalorder %v833, 0
      %vm1010 = vcmp.ne.s32.totalorder %v840, 0
      %vm1011 = vcmp.ne.s32.totalorder %v847, 0
      %vm1012 = vcmp.ne.s32.totalorder %v854, 0
      %vm1013 = vcmp.ne.s32.totalorder %v861, 0
      %vm1014 = vcmp.ne.s32.totalorder %v868, 0
      %vm1015 = vcmp.ne.s32.totalorder %v875, 0
      %vm1016 = vcmp.ne.s32.totalorder %v882, 0
      %vm1017 = vcmp.ne.s32.totalorder %v889, 0
      %vm1018 = vcmp.ne.s32.totalorder %v896, 0
      %vm1019 = vcmp.ne.s32.totalorder %v903, 0
      %vm1020 = vcmp.ne.s32.totalorder %v910, 0
      %vm1021 = vcmp.ne.s32.totalorder %v917, 0
      %vm1022 = vcmp.ne.s32.totalorder %v924, 0
      %vm1023 = vcmp.ne.s32.totalorder %v931, 0
      %vm1024 = vcmp.ne.s32.totalorder %v938, 0
      %vm1025 = vcmp.ne.s32.totalorder %v945, 0
      %vm1026 = vcmp.ne.s32.totalorder %v952, 0
      %vm1027 = vcmp.ne.s32.totalorder %v959, 0
      %vm1028 = vcmp.ne.s32.totalorder %v966, 0
      %vm1029 = vcmp.ne.s32.totalorder %v973, 0
      %vm1030 = vcmp.ne.s32.totalorder %v980, 0
      %vm1031 = vcmp.ne.s32.totalorder %v987, 0
      %vm1032 = vcmp.ne.s32.totalorder %v994, 0
      %vm1033 = vcmp.ne.s32.totalorder %v1001, 0
      %vm1034 = vcmp.lt.s32.totalorder %v784, 0
      %vm1035 = vcmp.lt.s32.totalorder %v791, 0
      %vm1036 = vcmp.lt.s32.totalorder %v798, 0
      %vm1037 = vcmp.lt.s32.totalorder %v805, 0
      %vm1038 = vcmp.lt.s32.totalorder %v812, 0
      %vm1039 = vcmp.lt.s32.totalorder %v819, 0
      %vm1040 = vcmp.lt.s32.totalorder %v826, 0
      %vm1041 = vcmp.lt.s32.totalorder %v833, 0
      %vm1042 = vcmp.lt.s32.totalorder %v840, 0
      %vm1043 = vcmp.lt.s32.totalorder %v847, 0
      %vm1044 = vcmp.lt.s32.totalorder %v854, 0
      %vm1045 = vcmp.lt.s32.totalorder %v861, 0
      %vm1046 = vcmp.lt.s32.totalorder %v868, 0
      %vm1047 = vcmp.lt.s32.totalorder %v875, 0
      %vm1048 = vcmp.lt.s32.totalorder %v882, 0
      %vm1049 = vcmp.lt.s32.totalorder %v889, 0
      %vm1050 = vcmp.lt.s32.totalorder %v896, 0
      %vm1051 = vcmp.lt.s32.totalorder %v903, 0
      %vm1052 = vcmp.lt.s32.totalorder %v910, 0
      %vm1053 = vcmp.lt.s32.totalorder %v917, 0
      %vm1054 = vcmp.lt.s32.totalorder %v924, 0
      %vm1055 = vcmp.lt.s32.totalorder %v931, 0
      %vm1056 = vcmp.lt.s32.totalorder %v938, 0
      %vm1057 = vcmp.lt.s32.totalorder %v945, 0
      %vm1058 = vcmp.lt.s32.totalorder %v952, 0
      %vm1059 = vcmp.lt.s32.totalorder %v959, 0
      %vm1060 = vcmp.lt.s32.totalorder %v966, 0
      %vm1061 = vcmp.lt.s32.totalorder %v973, 0
      %vm1062 = vcmp.lt.s32.totalorder %v980, 0
      %vm1063 = vcmp.lt.s32.totalorder %v987, 0
      %vm1064 = vcmp.lt.s32.totalorder %v994, 0
      %vm1065 = vcmp.lt.s32.totalorder %v1001, 0
      %vm1066 = vmand %vm1034, %vm1002
      %vm1067 = vmand %vm1035, %vm1003
      %vm1068 = vmand %vm1036, %vm1004
      %vm1069 = vmand %vm1037, %vm1005
      %vm1070 = vmand %vm1038, %vm1006
      %vm1071 = vmand %vm1039, %vm1007
      %vm1072 = vmand %vm1040, %vm1008
      %vm1073 = vmand %vm1041, %vm1009
      %vm1074 = vmand %vm1042, %vm1010
      %vm1075 = vmand %vm1043, %vm1011
      %vm1076 = vmand %vm1044, %vm1012
      %vm1077 = vmand %vm1045, %vm1013
      %vm1078 = vmand %vm1046, %vm1014
      %vm1079 = vmand %vm1047, %vm1015
      %vm1080 = vmand %vm1048, %vm1016
      %vm1081 = vmand %vm1049, %vm1017
      %vm1082 = vmand %vm1050, %vm1018
      %vm1083 = vmand %vm1051, %vm1019
      %vm1084 = vmand %vm1052, %vm1020
      %vm1085 = vmand %vm1053, %vm1021
      %vm1086 = vmand %vm1054, %vm1022
      %vm1087 = vmand %vm1055, %vm1023
      %vm1088 = vmand %vm1056, %vm1024
      %vm1089 = vmand %vm1057, %vm1025
      %vm1090 = vmand %vm1058, %vm1026
      %vm1091 = vmand %vm1059, %vm1027
      %vm1092 = vmand %vm1060, %vm1028
      %vm1093 = vmand %vm1061, %vm1029
      %vm1094 = vmand %vm1062, %vm1030
      %vm1095 = vmand %vm1063, %vm1031
      %vm1096 = vmand %vm1064, %vm1032
      %vm1097 = vmand %vm1065, %vm1033
      %v1098 = vadd.s32 %v784, 16
      %v1099 = vadd.s32 %v791, 16
      %v1100 = vadd.s32 %v798, 16
      %v1101 = vadd.s32 %v805, 16
      %v1102 = vadd.s32 %v812, 16
      %v1103 = vadd.s32 %v819, 16
      %v1104 = vadd.s32 %v826, 16
      %v1105 = vadd.s32 %v833, 16
      %v1106 = vadd.s32 %v840, 16
      %v1107 = vadd.s32 %v847, 16
      %v1108 = vadd.s32 %v854, 16
      %v1109 = vadd.s32 %v861, 16
      %v1110 = vadd.s32 %v868, 16
      %v1111 = vadd.s32 %v875, 16
      %v1112 = vadd.s32 %v882, 16
      %v1113 = vadd.s32 %v889, 16
      %v1114 = vadd.s32 %v896, 16
      %v1115 = vadd.s32 %v903, 16
      %v1116 = vadd.s32 %v910, 16
      %v1117 = vadd.s32 %v917, 16
      %v1118 = vadd.s32 %v924, 16
      %v1119 = vadd.s32 %v931, 16
      %v1120 = vadd.s32 %v938, 16
      %v1121 = vadd.s32 %v945, 16
      %v1122 = vadd.s32 %v952, 16
      %v1123 = vadd.s32 %v959, 16
      %v1124 = vadd.s32 %v966, 16
      %v1125 = vadd.s32 %v973, 16
      %v1126 = vadd.s32 %v980, 16
      %v1127 = vadd.s32 %v987, 16
      %v1128 = vadd.s32 %v994, 16
      %v1129 = vadd.s32 %v1001, 16
      %v1130 = vsel %vm1066, %v1098, %v784
      %v1131 = vsel %vm1067, %v1099, %v791
      %v1132 = vsel %vm1068, %v1100, %v798
      %v1133 = vsel %vm1069, %v1101, %v805
      %v1134 = vsel %vm1070, %v1102, %v812
      %v1135 = vsel %vm1071, %v1103, %v819
      %v1136 = vsel %vm1072, %v1104, %v826
      %v1137 = vsel %vm1073, %v1105, %v833
      %v1138 = vsel %vm1074, %v1106, %v840
      %v1139 = vsel %vm1075, %v1107, %v847
      %v1140 = vsel %vm1076, %v1108, %v854
      %v1141 = vsel %vm1077, %v1109, %v861
      %v1142 = vsel %vm1078, %v1110, %v868
      %v1143 = vsel %vm1079, %v1111, %v875
      %v1144 = vsel %vm1080, %v1112, %v882
      %v1145 = vsel %vm1081, %v1113, %v889
      %v1146 = vsel %vm1082, %v1114, %v896
      %v1147 = vsel %vm1083, %v1115, %v903
      %v1148 = vsel %vm1084, %v1116, %v910
      %v1149 = vsel %vm1085, %v1117, %v917
      %v1150 = vsel %vm1086, %v1118, %v924
      %v1151 = vsel %vm1087, %v1119, %v931
      %v1152 = vsel %vm1088, %v1120, %v938
      %v1153 = vsel %vm1089, %v1121, %v945
      %v1154 = vsel %vm1090, %v1122, %v952
      %v1155 = vsel %vm1091, %v1123, %v959
      %v1156 = vsel %vm1092, %v1124, %v966
      %v1157 = vsel %vm1093, %v1125, %v973
      %v1158 = vsel %vm1094, %v1126, %v980
      %v1159 = vsel %vm1095, %v1127, %v987
      %v1160 = vsel %vm1096, %v1128, %v994
      %v1161 = vsel %vm1097, %v1129, %v1001
      %vm1162 = vcmp.ne.s32.totalorder %v1130, 0
      %vm1163 = vcmp.ne.s32.totalorder %v1131, 0
      %vm1164 = vcmp.ne.s32.totalorder %v1132, 0
      %vm1165 = vcmp.ne.s32.totalorder %v1133, 0
      %vm1166 = vcmp.ne.s32.totalorder %v1134, 0
      %vm1167 = vcmp.ne.s32.totalorder %v1135, 0
      %vm1168 = vcmp.ne.s32.totalorder %v1136, 0
      %vm1169 = vcmp.ne.s32.totalorder %v1137, 0
      %vm1170 = vcmp.ne.s32.totalorder %v1138, 0
      %vm1171 = vcmp.ne.s32.totalorder %v1139, 0
      %vm1172 = vcmp.ne.s32.totalorder %v1140, 0
      %vm1173 = vcmp.ne.s32.totalorder %v1141, 0
      %vm1174 = vcmp.ne.s32.totalorder %v1142, 0
      %vm1175 = vcmp.ne.s32.totalorder %v1143, 0
      %vm1176 = vcmp.ne.s32.totalorder %v1144, 0
      %vm1177 = vcmp.ne.s32.totalorder %v1145, 0
      %vm1178 = vcmp.ne.s32.totalorder %v1146, 0
      %vm1179 = vcmp.ne.s32.totalorder %v1147, 0
      %vm1180 = vcmp.ne.s32.totalorder %v1148, 0
      %vm1181 = vcmp.ne.s32.totalorder %v1149, 0
      %vm1182 = vcmp.ne.s32.totalorder %v1150, 0
      %vm1183 = vcmp.ne.s32.totalorder %v1151, 0
      %vm1184 = vcmp.ne.s32.totalorder %v1152, 0
      %vm1185 = vcmp.ne.s32.totalorder %v1153, 0
      %vm1186 = vcmp.ne.s32.totalorder %v1154, 0
      %vm1187 = vcmp.ne.s32.totalorder %v1155, 0
      %vm1188 = vcmp.ne.s32.totalorder %v1156, 0
      %vm1189 = vcmp.ne.s32.totalorder %v1157, 0
      %vm1190 = vcmp.ne.s32.totalorder %v1158, 0
      %vm1191 = vcmp.ne.s32.totalorder %v1159, 0
      %vm1192 = vcmp.ne.s32.totalorder %v1160, 0
      %vm1193 = vcmp.ne.s32.totalorder %v1161, 0
      %v1194 = vsel %vm1162, 1, 0
      %v1195 = vsel %vm1163, 1, 0
      %v1196 = vsel %vm1164, 1, 0
      %v1197 = vsel %vm1165, 1, 0
      %v1198 = vsel %vm1166, 1, 0
      %v1199 = vsel %vm1167, 1, 0
      %v1200 = vsel %vm1168, 1, 0
      %v1201 = vsel %vm1169, 1, 0
      %v1202 = vsel %vm1170, 1, 0
      %v1203 = vsel %vm1171, 1, 0
      %v1204 = vsel %vm1172, 1, 0
      %v1205 = vsel %vm1173, 1, 0
      %v1206 = vsel %vm1174, 1, 0
      %v1207 = vsel %vm1175, 1, 0
      %v1208 = vsel %vm1176, 1, 0
      %v1209 = vsel %vm1177, 1, 0
      %v1210 = vsel %vm1178, 1, 0
      %v1211 = vsel %vm1179, 1, 0
      %v1212 = vsel %vm1180, 1, 0
      %v1213 = vsel %vm1181, 1, 0
      %v1214 = vsel %vm1182, 1, 0
      %v1215 = vsel %vm1183, 1, 0
      %v1216 = vsel %vm1184, 1, 0
      %v1217 = vsel %vm1185, 1, 0
      %v1218 = vsel %vm1186, 1, 0
      %v1219 = vsel %vm1187, 1, 0
      %v1220 = vsel %vm1188, 1, 0
      %v1221 = vsel %vm1189, 1, 0
      %v1222 = vsel %vm1190, 1, 0
      %v1223 = vsel %vm1191, 1, 0
      %v1224 = vsel %vm1192, 1, 0
      %v1225 = vsel %vm1193, 1, 0
      %v1226 = vcvt.s32.f32 %v1194
      %v1227 = vcvt.s32.f32 %v1195
      %v1228 = vcvt.s32.f32 %v1196
      %v1229 = vcvt.s32.f32 %v1197
      %v1230 = vcvt.s32.f32 %v1198
      %v1231 = vcvt.s32.f32 %v1199
      %v1232 = vcvt.s32.f32 %v1200
      %v1233 = vcvt.s32.f32 %v1201
      %v1234 = vcvt.s32.f32 %v1202
      %v1235 = vcvt.s32.f32 %v1203
      %v1236 = vcvt.s32.f32 %v1204
      %v1237 = vcvt.s32.f32 %v1205
      %v1238 = vcvt.s32.f32 %v1206
      %v1239 = vcvt.s32.f32 %v1207
      %v1240 = vcvt.s32.f32 %v1208
      %v1241 = vcvt.s32.f32 %v1209
      %v1242 = vcvt.s32.f32 %v1210
      %v1243 = vcvt.s32.f32 %v1211
      %v1244 = vcvt.s32.f32 %v1212
      %v1245 = vcvt.s32.f32 %v1213
      %v1246 = vcvt.s32.f32 %v1214
      %v1247 = vcvt.s32.f32 %v1215
      %v1248 = vcvt.s32.f32 %v1216
      %v1249 = vcvt.s32.f32 %v1217
      %v1250 = vcvt.s32.f32 %v1218
      %v1251 = vcvt.s32.f32 %v1219
      %v1252 = vcvt.s32.f32 %v1220
      %v1253 = vcvt.s32.f32 %v1221
      %v1254 = vcvt.s32.f32 %v1222
      %v1255 = vcvt.s32.f32 %v1223
      %v1256 = vcvt.s32.f32 %v1224
      %v1257 = vcvt.s32.f32 %v1225
      %v1258 = vpack.c.bf16 %v1227, %v1226
      %v1259 = vpack.c.bf16 %v1229, %v1228
      %v1260 = vpack.c.bf16 %v1231, %v1230
      %v1261 = vpack.c.bf16 %v1233, %v1232
      %v1262 = vpack.c.bf16 %v1235, %v1234
      %v1263 = vpack.c.bf16 %v1237, %v1236
      %v1264 = vpack.c.bf16 %v1239, %v1238
      %v1265 = vpack.c.bf16 %v1241, %v1240
      %v1266 = vpack.c.bf16 %v1243, %v1242
      %v1267 = vpack.c.bf16 %v1245, %v1244
      %v1268 = vpack.c.bf16 %v1247, %v1246
      %v1269 = vpack.c.bf16 %v1249, %v1248
      %v1270 = vpack.c.bf16 %v1251, %v1250
      %v1271 = vpack.c.bf16 %v1253, %v1252
      %v1272 = vpack.c.bf16 %v1255, %v1254
      %v1273 = vpack.c.bf16 %v1257, %v1256
      %vm1274 = vcmp.ne.s32.totalorder %v1130, 15
      %vm1275 = vcmp.ne.s32.totalorder %v1131, 15
      %vm1276 = vcmp.ne.s32.totalorder %v1132, 15
      %vm1277 = vcmp.ne.s32.totalorder %v1133, 15
      %vm1278 = vcmp.ne.s32.totalorder %v1134, 15
      %vm1279 = vcmp.ne.s32.totalorder %v1135, 15
      %vm1280 = vcmp.ne.s32.totalorder %v1136, 15
      %vm1281 = vcmp.ne.s32.totalorder %v1137, 15
      %vm1282 = vcmp.ne.s32.totalorder %v1138, 15
      %vm1283 = vcmp.ne.s32.totalorder %v1139, 15
      %vm1284 = vcmp.ne.s32.totalorder %v1140, 15
      %vm1285 = vcmp.ne.s32.totalorder %v1141, 15
      %vm1286 = vcmp.ne.s32.totalorder %v1142, 15
      %vm1287 = vcmp.ne.s32.totalorder %v1143, 15
      %vm1288 = vcmp.ne.s32.totalorder %v1144, 15
      %vm1289 = vcmp.ne.s32.totalorder %v1145, 15
      %vm1290 = vcmp.ne.s32.totalorder %v1146, 15
      %vm1291 = vcmp.ne.s32.totalorder %v1147, 15
      %vm1292 = vcmp.ne.s32.totalorder %v1148, 15
      %vm1293 = vcmp.ne.s32.totalorder %v1149, 15
      %vm1294 = vcmp.ne.s32.totalorder %v1150, 15
      %vm1295 = vcmp.ne.s32.totalorder %v1151, 15
      %vm1296 = vcmp.ne.s32.totalorder %v1152, 15
      %vm1297 = vcmp.ne.s32.totalorder %v1153, 15
      %vm1298 = vcmp.ne.s32.totalorder %v1154, 15
      %vm1299 = vcmp.ne.s32.totalorder %v1155, 15
      %vm1300 = vcmp.ne.s32.totalorder %v1156, 15
      %vm1301 = vcmp.ne.s32.totalorder %v1157, 15
      %vm1302 = vcmp.ne.s32.totalorder %v1158, 15
      %vm1303 = vcmp.ne.s32.totalorder %v1159, 15
      %vm1304 = vcmp.ne.s32.totalorder %v1160, 15
      %vm1305 = vcmp.ne.s32.totalorder %v1161, 15
      %v1306 = vsel %vm1274, 1, 0
      %v1307 = vsel %vm1275, 1, 0
      %v1308 = vsel %vm1276, 1, 0
      %v1309 = vsel %vm1277, 1, 0
      %v1310 = vsel %vm1278, 1, 0
      %v1311 = vsel %vm1279, 1, 0
      %v1312 = vsel %vm1280, 1, 0
      %v1313 = vsel %vm1281, 1, 0
      %v1314 = vsel %vm1282, 1, 0
      %v1315 = vsel %vm1283, 1, 0
      %v1316 = vsel %vm1284, 1, 0
      %v1317 = vsel %vm1285, 1, 0
      %v1318 = vsel %vm1286, 1, 0
      %v1319 = vsel %vm1287, 1, 0
      %v1320 = vsel %vm1288, 1, 0
      %v1321 = vsel %vm1289, 1, 0
      %v1322 = vsel %vm1290, 1, 0
      %v1323 = vsel %vm1291, 1, 0
      %v1324 = vsel %vm1292, 1, 0
      %v1325 = vsel %vm1293, 1, 0
      %v1326 = vsel %vm1294, 1, 0
      %v1327 = vsel %vm1295, 1, 0
      %v1328 = vsel %vm1296, 1, 0
      %v1329 = vsel %vm1297, 1, 0
      %v1330 = vsel %vm1298, 1, 0
      %v1331 = vsel %vm1299, 1, 0
      %v1332 = vsel %vm1300, 1, 0
      %v1333 = vsel %vm1301, 1, 0
      %v1334 = vsel %vm1302, 1, 0
      %v1335 = vsel %vm1303, 1, 0
      %v1336 = vsel %vm1304, 1, 0
      %v1337 = vsel %vm1305, 1, 0
      %v1338 = vcvt.s32.f32 %v1306
      %v1339 = vcvt.s32.f32 %v1307
      %v1340 = vcvt.s32.f32 %v1308
      %v1341 = vcvt.s32.f32 %v1309
      %v1342 = vcvt.s32.f32 %v1310
      %v1343 = vcvt.s32.f32 %v1311
      %v1344 = vcvt.s32.f32 %v1312
      %v1345 = vcvt.s32.f32 %v1313
      %v1346 = vcvt.s32.f32 %v1314
      %v1347 = vcvt.s32.f32 %v1315
      %v1348 = vcvt.s32.f32 %v1316
      %v1349 = vcvt.s32.f32 %v1317
      %v1350 = vcvt.s32.f32 %v1318
      %v1351 = vcvt.s32.f32 %v1319
      %v1352 = vcvt.s32.f32 %v1320
      %v1353 = vcvt.s32.f32 %v1321
      %v1354 = vcvt.s32.f32 %v1322
      %v1355 = vcvt.s32.f32 %v1323
      %v1356 = vcvt.s32.f32 %v1324
      %v1357 = vcvt.s32.f32 %v1325
      %v1358 = vcvt.s32.f32 %v1326
      %v1359 = vcvt.s32.f32 %v1327
      %v1360 = vcvt.s32.f32 %v1328
      %v1361 = vcvt.s32.f32 %v1329
      %v1362 = vcvt.s32.f32 %v1330
      %v1363 = vcvt.s32.f32 %v1331
      %v1364 = vcvt.s32.f32 %v1332
      %v1365 = vcvt.s32.f32 %v1333
      %v1366 = vcvt.s32.f32 %v1334
      %v1367 = vcvt.s32.f32 %v1335
      %v1368 = vcvt.s32.f32 %v1336
      %v1369 = vcvt.s32.f32 %v1337
      %v1370 = vpack.c.bf16 %v1339, %v1338
      %v1371 = vpack.c.bf16 %v1341, %v1340
      %v1372 = vpack.c.bf16 %v1343, %v1342
      %v1373 = vpack.c.bf16 %v1345, %v1344
      %v1374 = vpack.c.bf16 %v1347, %v1346
      %v1375 = vpack.c.bf16 %v1349, %v1348
      %v1376 = vpack.c.bf16 %v1351, %v1350
      %v1377 = vpack.c.bf16 %v1353, %v1352
      %v1378 = vpack.c.bf16 %v1355, %v1354
      %v1379 = vpack.c.bf16 %v1357, %v1356
      %v1380 = vpack.c.bf16 %v1359, %v1358
      %v1381 = vpack.c.bf16 %v1361, %v1360
      %v1382 = vpack.c.bf16 %v1363, %v1362
      %v1383 = vpack.c.bf16 %v1365, %v1364
      %v1384 = vpack.c.bf16 %v1367, %v1366
      %v1385 = vpack.c.bf16 %v1369, %v1368
      %v1386 = vmul.bf16 %v741, %v1258
      %v1387 = vmul.bf16 %v742, %v1259
      %v1388 = vmul.bf16 %v595, %v1260
      %v1389 = vmul.bf16 %v603, %v1261
      %v1390 = vmul.bf16 %v611, %v1262
      %v1391 = vmul.bf16 %v619, %v1263
      %v1392 = vmul.bf16 %v627, %v1264
      %v1393 = vmul.bf16 %v635, %v1265
      %v1394 = vmul.bf16 %v643, %v1266
      %v1395 = vmul.bf16 %v651, %v1267
      %v1396 = vmul.bf16 %v659, %v1268
      %v1397 = vmul.bf16 %v667, %v1269
      %v1398 = vmul.bf16 %v675, %v1270
      %v1399 = vmul.bf16 %v683, %v1271
      %v1400 = vmul.bf16 %v691, %v1272
      %v1401 = vmul.bf16 %v699, %v1273
      %v1418 = vrot.slane %v1370, 7
      %v1419 = vrot.slane %v1371, 7
      %v1420 = vsel %vm739, %v1418, %v1419
      %v1421 = vrot.slane %v1372, 7
      %v1422 = vsel %vm739, %v1419, %v1421
      %v1423 = vrot.slane %v1373, 7
      %v1424 = vsel %vm739, %v1421, %v1423
      %v1425 = vrot.slane %v1374, 7
      %v1426 = vsel %vm739, %v1423, %v1425
      %v1427 = vrot.slane %v1375, 7
      %v1428 = vsel %vm739, %v1425, %v1427
      %v1429 = vrot.slane %v1376, 7
      %v1430 = vsel %vm739, %v1427, %v1429
      %v1431 = vrot.slane %v1377, 7
      %v1432 = vsel %vm739, %v1429, %v1431
      %v1433 = vrot.slane %v1378, 7
      %v1434 = vsel %vm739, %v1431, %v1433
      %v1435 = vrot.slane %v1379, 7
      %v1436 = vsel %vm739, %v1433, %v1435
      %v1437 = vrot.slane %v1380, 7
      %v1438 = vsel %vm739, %v1435, %v1437
      %v1439 = vrot.slane %v1381, 7
      %v1440 = vsel %vm739, %v1437, %v1439
      %v1441 = vrot.slane %v1382, 7
      %v1442 = vsel %vm739, %v1439, %v1441
      %v1443 = vrot.slane %v1383, 7
      %v1444 = vsel %vm739, %v1441, %v1443
      %v1445 = vrot.slane %v1384, 7
      %v1446 = vsel %vm739, %v1443, %v1445
      %v1447 = vrot.slane %v1385, 7
      %v1448 = vsel %vm739, %v1445, %v1447
      %v1466 = vmul.bf16 %v741, %v1418
      %v1467 = vmul.bf16 %v742, %v1420
      %v1468 = vmul.bf16 %v595, %v1422
      %v1469 = vmul.bf16 %v603, %v1424
      %v1470 = vmul.bf16 %v611, %v1426
      %v1471 = vmul.bf16 %v619, %v1428
      %v1472 = vmul.bf16 %v627, %v1430
      %v1473 = vmul.bf16 %v635, %v1432
      %v1474 = vmul.bf16 %v643, %v1434
      %v1475 = vmul.bf16 %v651, %v1436
      %v1476 = vmul.bf16 %v659, %v1438
      %v1477 = vmul.bf16 %v667, %v1440
      %v1478 = vmul.bf16 %v675, %v1442
      %v1479 = vmul.bf16 %v683, %v1444
      %v1480 = vmul.bf16 %v691, %v1446
      %v1481 = vmul.bf16 %v699, %v1448
      %v1482 = vmul.bf16 %v707, %v1447
      %vm1483 = vsmask.f32 7424
      %v1485 = vshrl.u32 %v741, 16
      %v1487 = vshll.u32 %v741, 16
      %v1489 = vrot.slane %v1487, 1
      %v1490 = vor.u32 %v1485, %v1489
      %v1492 = vshll.u32 %v742, 16
      %v1494 = vrot.slane %v1492, 1
      %v1495 = vsel %vm1483, %v1490, %v1494
      %v1496 = vshrl.u32 %v742, 16
      %v1498 = vor.u32 %v1496, %v1494
      %v1500 = vshll.u32 %v595, 16
      %v1502 = vrot.slane %v1500, 1
      %v1503 = vsel %vm1483, %v1498, %v1502
      %v1504 = vshrl.u32 %v595, 16
      %v1506 = vor.u32 %v1504, %v1502
      %v1508 = vshll.u32 %v603, 16
      %v1510 = vrot.slane %v1508, 1
      %v1511 = vsel %vm1483, %v1506, %v1510
      %v1512 = vshrl.u32 %v603, 16
      %v1514 = vor.u32 %v1512, %v1510
      %v1516 = vshll.u32 %v611, 16
      %v1518 = vrot.slane %v1516, 1
      %v1519 = vsel %vm1483, %v1514, %v1518
      %v1520 = vshrl.u32 %v611, 16
      %v1522 = vor.u32 %v1520, %v1518
      %v1524 = vshll.u32 %v619, 16
      %v1526 = vrot.slane %v1524, 1
      %v1527 = vsel %vm1483, %v1522, %v1526
      %v1528 = vshrl.u32 %v619, 16
      %v1530 = vor.u32 %v1528, %v1526
      %v1532 = vshll.u32 %v627, 16
      %v1534 = vrot.slane %v1532, 1
      %v1535 = vsel %vm1483, %v1530, %v1534
      %v1536 = vshrl.u32 %v627, 16
      %v1538 = vor.u32 %v1536, %v1534
      %v1540 = vshll.u32 %v635, 16
      %v1542 = vrot.slane %v1540, 1
      %v1543 = vsel %vm1483, %v1538, %v1542
      %v1544 = vshrl.u32 %v635, 16
      %v1546 = vor.u32 %v1544, %v1542
      %v1548 = vshll.u32 %v643, 16
      %v1550 = vrot.slane %v1548, 1
      %v1551 = vsel %vm1483, %v1546, %v1550
      %v1552 = vshrl.u32 %v643, 16
      %v1554 = vor.u32 %v1552, %v1550
      %v1556 = vshll.u32 %v651, 16
      %v1558 = vrot.slane %v1556, 1
      %v1559 = vsel %vm1483, %v1554, %v1558
      %v1560 = vshrl.u32 %v651, 16
      %v1562 = vor.u32 %v1560, %v1558
      %v1564 = vshll.u32 %v659, 16
      %v1566 = vrot.slane %v1564, 1
      %v1567 = vsel %vm1483, %v1562, %v1566
      %v1568 = vshrl.u32 %v659, 16
      %v1570 = vor.u32 %v1568, %v1566
      %v1572 = vshll.u32 %v667, 16
      %v1574 = vrot.slane %v1572, 1
      %v1575 = vsel %vm1483, %v1570, %v1574
      %v1576 = vshrl.u32 %v667, 16
      %v1578 = vor.u32 %v1576, %v1574
      %v1580 = vshll.u32 %v675, 16
      %v1582 = vrot.slane %v1580, 1
      %v1583 = vsel %vm1483, %v1578, %v1582
      %v1584 = vshrl.u32 %v675, 16
      %v1586 = vor.u32 %v1584, %v1582
      %v1588 = vshll.u32 %v683, 16
      %v1590 = vrot.slane %v1588, 1
      %v1591 = vsel %vm1483, %v1586, %v1590
      %v1592 = vshrl.u32 %v683, 16
      %v1594 = vor.u32 %v1592, %v1590
      %v1596 = vshll.u32 %v691, 16
      %v1598 = vrot.slane %v1596, 1
      %v1599 = vsel %vm1483, %v1594, %v1598
      %v1600 = vshrl.u32 %v691, 16
      %v1602 = vor.u32 %v1600, %v1598
      %v1604 = vshll.u32 %v699, 16
      %v1606 = vrot.slane %v1604, 1
      %v1607 = vsel %vm1483, %v1602, %v1606
      %v1608 = vshrl.u32 %v699, 16
      %v1610 = vor.u32 %v1608, %v1606
      %v1612 = vshll.u32 %v707, 16
      %v1614 = vrot.slane %v1612, 1
      %v1615 = vsel %vm1483, %v1610, %v1614
      %1616 = vrot.lane.b32.xlu0 %v1495, 4
      %v1617 = vpop.permute.xlu0 %1616
      %1618 = vrot.lane.b32.xlu0 %v1503, 4
      %v1619 = vpop.permute.xlu0 %1618
      %1620 = vrot.lane.b32.xlu0 %v1511, 4
      %v1621 = vpop.permute.xlu0 %1620
      %1622 = vrot.lane.b32.xlu0 %v1519, 4
      %v1623 = vpop.permute.xlu0 %1622
      %1624 = vrot.lane.b32.xlu0 %v1527, 4
      %v1625 = vpop.permute.xlu0 %1624
      %1626 = vrot.lane.b32.xlu0 %v1535, 4
      %v1627 = vpop.permute.xlu0 %1626
      %1628 = vrot.lane.b32.xlu0 %v1543, 4
      %v1629 = vpop.permute.xlu0 %1628
      %1630 = vrot.lane.b32.xlu0 %v1551, 4
      %v1631 = vpop.permute.xlu0 %1630
      %1632 = vrot.lane.b32.xlu0 %v1559, 4
      %v1633 = vpop.permute.xlu0 %1632
      %1634 = vrot.lane.b32.xlu0 %v1567, 4
      %v1635 = vpop.permute.xlu0 %1634
      %1636 = vrot.lane.b32.xlu0 %v1575, 4
      %v1637 = vpop.permute.xlu0 %1636
      %1638 = vrot.lane.b32.xlu0 %v1583, 4
      %v1639 = vpop.permute.xlu0 %1638
      %1640 = vrot.lane.b32.xlu0 %v1591, 4
      %v1641 = vpop.permute.xlu0 %1640
      %1642 = vrot.lane.b32.xlu0 %v1599, 4
      %v1643 = vpop.permute.xlu0 %1642
      %1644 = vrot.lane.b32.xlu0 %v1607, 4
      %v1645 = vpop.permute.xlu0 %1644
      %1646 = vrot.lane.b32.xlu0 %v1615, 4
      %v1647 = vpop.permute.xlu0 %1646
      %vm1665 = vcmask 1046528
      %v1666 = vrot.slane %v1466, 1
      %v1667 = vrot.slane %v1467, 1
      %v1668 = vsel %vm1665, %v1666, %v1667
      %v1669 = vrot.slane %v1468, 1
      %v1670 = vsel %vm1665, %v1667, %v1669
      %v1671 = vrot.slane %v1469, 1
      %v1672 = vsel %vm1665, %v1669, %v1671
      %v1673 = vrot.slane %v1470, 1
      %v1674 = vsel %vm1665, %v1671, %v1673
      %v1675 = vrot.slane %v1471, 1
      %v1676 = vsel %vm1665, %v1673, %v1675
      %v1677 = vrot.slane %v1472, 1
      %v1678 = vsel %vm1665, %v1675, %v1677
      %v1679 = vrot.slane %v1473, 1
      %v1680 = vsel %vm1665, %v1677, %v1679
      %v1681 = vrot.slane %v1474, 1
      %v1682 = vsel %vm1665, %v1679, %v1681
      %v1683 = vrot.slane %v1475, 1
      %v1684 = vsel %vm1665, %v1681, %v1683
      %v1685 = vrot.slane %v1476, 1
      %v1686 = vsel %vm1665, %v1683, %v1685
      %v1687 = vrot.slane %v1477, 1
      %v1688 = vsel %vm1665, %v1685, %v1687
      %v1689 = vrot.slane %v1478, 1
      %v1690 = vsel %vm1665, %v1687, %v1689
      %v1691 = vrot.slane %v1479, 1
      %v1692 = vsel %vm1665, %v1689, %v1691
      %v1693 = vrot.slane %v1480, 1
      %v1694 = vsel %vm1665, %v1691, %v1693
      %v1695 = vrot.slane %v1481, 1
      %v1696 = vsel %vm1665, %v1693, %v1695
      %v1697 = vrot.slane %v1482, 1
      %v1698 = vsel %vm1665, %v1695, %v1697
      %1699 = vrot.lane.b32.xlu0 %v1668, 8
      %v1700 = vpop.permute.xlu0 %1699
      %1701 = vrot.lane.b32.xlu0 %v1670, 8
      %v1702 = vpop.permute.xlu0 %1701
      %1703 = vrot.lane.b32.xlu0 %v1672, 8
      %v1704 = vpop.permute.xlu0 %1703
      %1705 = vrot.lane.b32.xlu0 %v1674, 8
      %v1706 = vpop.permute.xlu0 %1705
      %1707 = vrot.lane.b32.xlu0 %v1676, 8
      %v1708 = vpop.permute.xlu0 %1707
      %1709 = vrot.lane.b32.xlu0 %v1678, 8
      %v1710 = vpop.permute.xlu0 %1709
      %1711 = vrot.lane.b32.xlu0 %v1680, 8
      %v1712 = vpop.permute.xlu0 %1711
      %1713 = vrot.lane.b32.xlu0 %v1682, 8
      %v1714 = vpop.permute.xlu0 %1713
      %1715 = vrot.lane.b32.xlu0 %v1684, 8
      %v1716 = vpop.permute.xlu0 %1715
      %1717 = vrot.lane.b32.xlu0 %v1686, 8
      %v1718 = vpop.permute.xlu0 %1717
      %1719 = vrot.lane.b32.xlu0 %v1688, 8
      %v1720 = vpop.permute.xlu0 %1719
      %1721 = vrot.lane.b32.xlu0 %v1690, 8
      %v1722 = vpop.permute.xlu0 %1721
      %1723 = vrot.lane.b32.xlu0 %v1692, 8
      %v1724 = vpop.permute.xlu0 %1723
      %1725 = vrot.lane.b32.xlu0 %v1694, 8
      %v1726 = vpop.permute.xlu0 %1725
      %1727 = vrot.lane.b32.xlu0 %v1696, 8
      %v1728 = vpop.permute.xlu0 %1727
      %1729 = vrot.lane.b32.xlu0 %v1698, 8
      %v1730 = vpop.permute.xlu0 %1729
      %vm1731 = vcmask 31744
      %v1734 = vsel %vm1731, %v1386, %v1617
      %v1737 = vsel %vm1731, %v1387, %v1619
      %v1740 = vsel %vm1731, %v1388, %v1621
      %v1743 = vsel %vm1731, %v1389, %v1623
      %v1746 = vsel %vm1731, %v1390, %v1625
      %v1749 = vsel %vm1731, %v1391, %v1627
      %v1752 = vsel %vm1731, %v1392, %v1629
      %v1755 = vsel %vm1731, %v1393, %v1631
      %v1758 = vsel %vm1731, %v1394, %v1633
      %v1761 = vsel %vm1731, %v1395, %v1635
      %v1764 = vsel %vm1731, %v1396, %v1637
      %v1767 = vsel %vm1731, %v1397, %v1639
      %v1770 = vsel %vm1731, %v1398, %v1641
      %v1773 = vsel %vm1731, %v1399, %v1643
      %v1776 = vsel %vm1731, %v1400, %v1645
      %v1779 = vsel %vm1731, %v1401, %v1647
      %vm1780 = vcmask 64512
      %v1782 = vsel %vm1780, %v1734, %v1700
      %v1784 = vsel %vm1780, %v1737, %v1702
      %v1786 = vsel %vm1780, %v1740, %v1704
      %v1788 = vsel %vm1780, %v1743, %v1706
      %v1790 = vsel %vm1780, %v1746, %v1708
      %v1792 = vsel %vm1780, %v1749, %v1710
      %v1794 = vsel %vm1780, %v1752, %v1712
      %v1796 = vsel %vm1780, %v1755, %v1714
      %v1798 = vsel %vm1780, %v1758, %v1716
      %v1800 = vsel %vm1780, %v1761, %v1718
      %v1802 = vsel %vm1780, %v1764, %v1720
      %v1804 = vsel %vm1780, %v1767, %v1722
      %v1806 = vsel %vm1780, %v1770, %v1724
      %v1808 = vsel %vm1780, %v1773, %v1726
      %v1810 = vsel %vm1780, %v1776, %v1728
      %v1812 = vsel %vm1780, %v1779, %v1730
      %v1813 = vld [vmem:[%s3] sm:$0xf]
      %v1814 = vld [vmem:[%s3 + $0x4] sm:$0x3]
      %v1815 = vmul.bf16 %v742, %v1258
      %v1816 = vmul.bf16 %v595, %v1259
      %v1817 = vmul.bf16 %v603, %v1260
      %v1818 = vmul.bf16 %v611, %v1261
      %v1819 = vmul.bf16 %v619, %v1262
      %v1820 = vmul.bf16 %v627, %v1263
      %v1821 = vmul.bf16 %v635, %v1264
      %v1822 = vmul.bf16 %v643, %v1265
      %v1823 = vmul.bf16 %v651, %v1266
      %v1824 = vmul.bf16 %v659, %v1267
      %v1825 = vmul.bf16 %v667, %v1268
      %v1826 = vmul.bf16 %v675, %v1269
      %v1827 = vmul.bf16 %v683, %v1270
      %v1828 = vmul.bf16 %v691, %v1271
      %v1829 = vmul.bf16 %v699, %v1272
      %v1830 = vmul.bf16 %v707, %v1273
      %v1831 = vmul.bf16 %v742, %v1418
      %v1832 = vmul.bf16 %v595, %v1420
      %v1833 = vmul.bf16 %v603, %v1422
      %v1834 = vmul.bf16 %v611, %v1424
      %v1835 = vmul.bf16 %v619, %v1426
      %v1836 = vmul.bf16 %v627, %v1428
      %v1837 = vmul.bf16 %v635, %v1430
      %v1838 = vmul.bf16 %v643, %v1432
      %v1839 = vmul.bf16 %v651, %v1434
      %v1840 = vmul.bf16 %v659, %v1436
      %v1841 = vmul.bf16 %v667, %v1438
      %v1842 = vmul.bf16 %v675, %v1440
      %v1843 = vmul.bf16 %v683, %v1442
      %v1844 = vmul.bf16 %v691, %v1444
      %v1845 = vmul.bf16 %v699, %v1446
      %v1846 = vmul.bf16 %v707, %v1448
      %v1847 = vmul.bf16 %v743, %v1447
      %v1848 = vshrl.u32 %v707, 16
      %v1850 = vor.u32 %v1848, %v1614
      %v1852 = vshll.u32 %v743, 16
      %v1854 = vrot.slane %v1852, 1
      %v1855 = vsel %vm1483, %v1850, %v1854
      %1856 = vrot.lane.b32.xlu0 %v1855, 4
      %v1857 = vpop.permute.xlu0 %1856
      %v1875 = vrot.slane %v1831, 1
      %v1876 = vrot.slane %v1832, 1
      %v1877 = vsel %vm1665, %v1875, %v1876
      %v1878 = vrot.slane %v1833, 1
      %v1879 = vsel %vm1665, %v1876, %v1878
      %v1880 = vrot.slane %v1834, 1
      %v1881 = vsel %vm1665, %v1878, %v1880
      %v1882 = vrot.slane %v1835, 1
      %v1883 = vsel %vm1665, %v1880, %v1882
      %v1884 = vrot.slane %v1836, 1
      %v1885 = vsel %vm1665, %v1882, %v1884
      %v1886 = vrot.slane %v1837, 1
      %v1887 = vsel %vm1665, %v1884, %v1886
      %v1888 = vrot.slane %v1838, 1
      %v1889 = vsel %vm1665, %v1886, %v1888
      %v1890 = vrot.slane %v1839, 1
      %v1891 = vsel %vm1665, %v1888, %v1890
      %v1892 = vrot.slane %v1840, 1
      %v1893 = vsel %vm1665, %v1890, %v1892
      %v1894 = vrot.slane %v1841, 1
      %v1895 = vsel %vm1665, %v1892, %v1894
      %v1896 = vrot.slane %v1842, 1
      %v1897 = vsel %vm1665, %v1894, %v1896
      %v1898 = vrot.slane %v1843, 1
      %v1899 = vsel %vm1665, %v1896, %v1898
      %v1900 = vrot.slane %v1844, 1
      %v1901 = vsel %vm1665, %v1898, %v1900
      %v1902 = vrot.slane %v1845, 1
      %v1903 = vsel %vm1665, %v1900, %v1902
      %v1904 = vrot.slane %v1846, 1
      %v1905 = vsel %vm1665, %v1902, %v1904
      %v1906 = vrot.slane %v1847, 1
      %v1907 = vsel %vm1665, %v1904, %v1906
      %1908 = vrot.lane.b32.xlu0 %v1877, 8
      %v1909 = vpop.permute.xlu0 %1908
      %1910 = vrot.lane.b32.xlu0 %v1879, 8
      %v1911 = vpop.permute.xlu0 %1910
      %1912 = vrot.lane.b32.xlu0 %v1881, 8
      %v1913 = vpop.permute.xlu0 %1912
      %1914 = vrot.lane.b32.xlu0 %v1883, 8
      %v1915 = vpop.permute.xlu0 %1914
      %1916 = vrot.lane.b32.xlu0 %v1885, 8
      %v1917 = vpop.permute.xlu0 %1916
      %1918 = vrot.lane.b32.xlu0 %v1887, 8
      %v1919 = vpop.permute.xlu0 %1918
      %1920 = vrot.lane.b32.xlu0 %v1889, 8
      %v1921 = vpop.permute.xlu0 %1920
      %1922 = vrot.lane.b32.xlu0 %v1891, 8
      %v1923 = vpop.permute.xlu0 %1922
      %1924 = vrot.lane.b32.xlu0 %v1893, 8
      %v1925 = vpop.permute.xlu0 %1924
      %1926 = vrot.lane.b32.xlu0 %v1895, 8
      %v1927 = vpop.permute.xlu0 %1926
      %1928 = vrot.lane.b32.xlu0 %v1897, 8
      %v1929 = vpop.permute.xlu0 %1928
      %1930 = vrot.lane.b32.xlu0 %v1899, 8
      %v1931 = vpop.permute.xlu0 %1930
      %1932 = vrot.lane.b32.xlu0 %v1901, 8
      %v1933 = vpop.permute.xlu0 %1932
      %1934 = vrot.lane.b32.xlu0 %v1903, 8
      %v1935 = vpop.permute.xlu0 %1934
      %1936 = vrot.lane.b32.xlu0 %v1905, 8
      %v1937 = vpop.permute.xlu0 %1936
      %1938 = vrot.lane.b32.xlu0 %v1907, 8
      %v1939 = vpop.permute.xlu0 %1938
      %v1941 = vsel %vm1731, %v1815, %v1619
      %v1943 = vsel %vm1731, %v1816, %v1621
      %v1945 = vsel %vm1731, %v1817, %v1623
      %v1947 = vsel %vm1731, %v1818, %v1625
      %v1949 = vsel %vm1731, %v1819, %v1627
      %v1951 = vsel %vm1731, %v1820, %v1629
      %v1953 = vsel %vm1731, %v1821, %v1631
      %v1955 = vsel %vm1731, %v1822, %v1633
      %v1957 = vsel %vm1731, %v1823, %v1635
      %v1959 = vsel %vm1731, %v1824, %v1637
      %v1961 = vsel %vm1731, %v1825, %v1639
      %v1963 = vsel %vm1731, %v1826, %v1641
      %v1965 = vsel %vm1731, %v1827, %v1643
      %v1967 = vsel %vm1731, %v1828, %v1645
      %v1969 = vsel %vm1731, %v1829, %v1647
      %v1972 = vsel %vm1731, %v1830, %v1857
      %v1974 = vsel %vm1780, %v1941, %v1909
      %v1976 = vsel %vm1780, %v1943, %v1911
      %v1978 = vsel %vm1780, %v1945, %v1913
      %v1980 = vsel %vm1780, %v1947, %v1915
      %v1982 = vsel %vm1780, %v1949, %v1917
      %v1984 = vsel %vm1780, %v1951, %v1919
      %v1986 = vsel %vm1780, %v1953, %v1921
      %v1988 = vsel %vm1780, %v1955, %v1923
      %v1990 = vsel %vm1780, %v1957, %v1925
      %v1992 = vsel %vm1780, %v1959, %v1927
      %v1994 = vsel %vm1780, %v1961, %v1929
      %v1996 = vsel %vm1780, %v1963, %v1931
      %v1998 = vsel %vm1780, %v1965, %v1933
      %v2000 = vsel %vm1780, %v1967, %v1935
      %v2002 = vsel %vm1780, %v1969, %v1937
      %v2004 = vsel %vm1780, %v1972, %v1939
      %s2005 = scalar_lea.vmem %s3, 8
      %v2006 = vld [vmem:[%s2005] sm:$0xf]
      %v2007 = vld [vmem:[%s2005 + $0x4] sm:$0x3]
      %v2010 = vunpack.c.l.b16 %v2006
      %v2011 = vunpack.c.l.b16 %v2007
      %v2012 = vpack.c.b16 %v2011, %v2010
      %vm2013 = vcmask 97280
      %v2014 = vsel %vm2013, %v1974, 0
      %v2016 = vsel %vm2013, %v1976, 0
      %v2018 = vsel %vm2013, %v1978, 0
      %v2020 = vsel %vm2013, %v1980, 0
      %v2022 = vsel %vm2013, %v1982, 0
      %v2024 = vsel %vm2013, %v1984, 0
      %v2026 = vsel %vm2013, %v1986, 0
      %v2028 = vsel %vm2013, %v1988, 0
      %v2030 = vsel %vm2013, %v1990, 0
      %v2032 = vsel %vm2013, %v1992, 0
      %v2034 = vsel %vm2013, %v1994, 0
      %v2036 = vsel %vm2013, %v1996, 0
      %v2038 = vsel %vm2013, %v1998, 0
      %v2040 = vsel %vm2013, %v2000, 0
      %v2042 = vsel %vm2013, %v2002, 0
      %v2044 = vsel %vm2013, %v2004, 0
      %vm2046 = vcmask 1045504
      %v2048 = vsel %vm2046, %v2012, 0
      %2050 = vmatprep.subr.bf16.mxu0 0
      %2051 = vmatpush1.bf16.msra.mxu0 %v2048
      %2052 = vmatprep.subr.bf16.mxu0 0
      %2053 = vmatpush1.bf16.msra.mxu0 0
      %2054 = vmatprep.subr.bf16.mxu0 0
      %2055 = vmatpush1.bf16.msra.mxu0 0
      %2056 = vmatprep.subr.bf16.mxu0 0
      %2057 = vmatpush1.bf16.msra.mxu0 0
      %2058 = vmatprep.subr.bf16.mxu0 0
      %2059 = vmatpush1.bf16.msra.mxu0 0
      %2060 = vmatprep.subr.bf16.mxu0 0
      %2061 = vmatpush1.bf16.msra.mxu0 0
      %2062 = vmatprep.subr.bf16.mxu0 0
      %2063 = vmatpush1.bf16.msra.mxu0 0
      %2064 = vmatprep.subr.bf16.mxu0 0
      %2065 = vmatpush1.bf16.msra.mxu0 0
      %2066 = vmatprep.subr.bf16.mxu0 0
      %2067 = vmatpush1.bf16.msra.mxu0 0
      %2068 = vmatprep.subr.bf16.mxu0 0
      %2069 = vmatpush1.bf16.msra.mxu0 0
      %2070 = vmatprep.subr.bf16.mxu0 0
      %2071 = vmatpush1.bf16.msra.mxu0 0
      %2072 = vmatprep.subr.bf16.mxu0 0
      %2073 = vmatpush1.bf16.msra.mxu0 0
      %2074 = vmatprep.subr.bf16.mxu0 0
      %2075 = vmatpush1.bf16.msra.mxu0 0
      %2076 = vmatprep.subr.bf16.mxu0 0
      %2077 = vmatpush1.bf16.msra.mxu0 0
      %2078 = vmatprep.subr.bf16.mxu0 0
      %2079 = vmatpush1.bf16.msra.mxu0 0
      %2080 = vmatprep.subr.bf16.mxu0 0
      %2081 = vmatpush1.bf16.msra.mxu0 0
      %2082 = vmatprep.mubr.bf16.mxu0 0
      %2083 = vmatmul.mubr.bf16.gmra.mrb[0].mxu0 %v2014
      %v2084 = vpop.f32.mrb[0].mxu0
      %v2085 = vadd.f32 0.0, %v2084
      %v2086 = vpop.f32.mrb[0].mxu0
      %v2087 = vpop.f32.mrb[0].mxu0
      %v2088 = vadd.f32 0.0, %v2087
      %v2089 = vpop.f32.mrb[0].mxu0
      %2090 = vmatprep.mubr.bf16.mxu0 0
      %2091 = vmatmul.mubr.bf16.gmra.mrb[0].mxu0 %v2016
      %v2092 = vpop.f32.mrb[0].mxu0
      %v2093 = vadd.f32 0.0, %v2092
      %v2094 = vpop.f32.mrb[0].mxu0
      %v2095 = vpop.f32.mrb[0].mxu0
      %v2096 = vadd.f32 0.0, %v2095
      %v2097 = vpop.f32.mrb[0].mxu0
      %2098 = vmatprep.mubr.bf16.mxu0 0
      %2099 = vmatmul.mubr.bf16.gmra.mrb[0].mxu0 %v2018
      %v2100 = vpop.f32.mrb[0].mxu0
      %v2101 = vadd.f32 0.0, %v2100
      %v2102 = vpop.f32.mrb[0].mxu0
      %v2103 = vpop.f32.mrb[0].mxu0
      %v2104 = vadd.f32 0.0, %v2103
      %v2105 = vpop.f32.mrb[0].mxu0
      %2106 = vmatprep.mubr.bf16.mxu0 0
      %2107 = vmatmul.mubr.bf16.gmra.mrb[0].mxu0 %v2020
      %v2108 = vpop.f32.mrb[0].mxu0
      %v2109 = vadd.f32 0.0, %v2108
      %v2110 = vpop.f32.mrb[0].mxu0
      %v2111 = vpop.f32.mrb[0].mxu0
      %v2112 = vadd.f32 0.0, %v2111
      %v2113 = vpop.f32.mrb[0].mxu0
      %2114 = vmatprep.mubr.bf16.mxu0 0
      %2115 = vmatmul.mubr.bf16.gmra.mrb[0].mxu0 %v2022
      %v2116 = vpop.f32.mrb[0].mxu0
      %v2117 = vadd.f32 0.0, %v2116
      %v2118 = vpop.f32.mrb[0].mxu0
      %v2119 = vpop.f32.mrb[0].mxu0
      %v2120 = vadd.f32 0.0, %v2119
      %v2121 = vpop.f32.mrb[0].mxu0
      %2122 = vmatprep.mubr.bf16.mxu0 0
      %2123 = vmatmul.mubr.bf16.gmra.mrb[0].mxu0 %v2024
      %v2124 = vpop.f32.mrb[0].mxu0
      %v2125 = vadd.f32 0.0, %v2124
      %v2126 = vpop.f32.mrb[0].mxu0
      %v2127 = vpop.f32.mrb[0].mxu0
      %v2128 = vadd.f32 0.0, %v2127
      %v2129 = vpop.f32.mrb[0].mxu0
      %2130 = vmatprep.mubr.bf16.mxu0 0
      %2131 = vmatmul.mubr.bf16.gmra.mrb[0].mxu0 %v2026
      %v2132 = vpop.f32.mrb[0].mxu0
      %v2133 = vadd.f32 0.0, %v2132
      %v2134 = vpop.f32.mrb[0].mxu0
      %v2135 = vpop.f32.mrb[0].mxu0
      %v2136 = vadd.f32 0.0, %v2135
      %v2137 = vpop.f32.mrb[0].mxu0
      %2138 = vmatprep.mubr.bf16.mxu0 0
      %2139 = vmatmul.mubr.bf16.gmra.mrb[0].mxu0 %v2028
      %v2140 = vpop.f32.mrb[0].mxu0
      %v2141 = vadd.f32 0.0, %v2140
      %v2142 = vpop.f32.mrb[0].mxu0
      %v2143 = vpop.f32.mrb[0].mxu0
      %v2144 = vadd.f32 0.0, %v2143
      %v2145 = vpop.f32.mrb[0].mxu0
      %2146 = vmatprep.mubr.bf16.mxu0 0
      %2147 = vmatmul.mubr.bf16.gmra.mrb[0].mxu0 %v2030
      %v2148 = vpop.f32.mrb[0].mxu0
      %v2149 = vadd.f32 0.0, %v2148
      %v2150 = vpop.f32.mrb[0].mxu0
      %v2151 = vpop.f32.mrb[0].mxu0
      %v2152 = vadd.f32 0.0, %v2151
      %v2153 = vpop.f32.mrb[0].mxu0
      %2154 = vmatprep.mubr.bf16.mxu0 0
      %2155 = vmatmul.mubr.bf16.gmra.mrb[0].mxu0 %v2032
      %v2156 = vpop.f32.mrb[0].mxu0
      %v2157 = vadd.f32 0.0, %v2156
      %v2158 = vpop.f32.mrb[0].mxu0
      %v2159 = vpop.f32.mrb[0].mxu0
      %v2160 = vadd.f32 0.0, %v2159
      %v2161 = vpop.f32.mrb[0].mxu0
      %2162 = vmatprep.mubr.bf16.mxu0 0
      %2163 = vmatmul.mubr.bf16.gmra.mrb[0].mxu0 %v2034
      %v2164 = vpop.f32.mrb[0].mxu0
      %v2165 = vadd.f32 0.0, %v2164
      %v2166 = vpop.f32.mrb[0].mxu0
      %v2167 = vpop.f32.mrb[0].mxu0
      %v2168 = vadd.f32 0.0, %v2167
      %v2169 = vpop.f32.mrb[0].mxu0
      %2170 = vmatprep.mubr.bf16.mxu0 0
      %2171 = vmatmul.mubr.bf16.gmra.mrb[0].mxu0 %v2036
      %v2172 = vpop.f32.mrb[0].mxu0
      %v2173 = vadd.f32 0.0, %v2172
      %v2174 = vpop.f32.mrb[0].mxu0
      %v2175 = vpop.f32.mrb[0].mxu0
      %v2176 = vadd.f32 0.0, %v2175
      %v2177 = vpop.f32.mrb[0].mxu0
      %2178 = vmatprep.mubr.bf16.mxu0 0
      %2179 = vmatmul.mubr.bf16.gmra.mrb[0].mxu0 %v2038
      %v2180 = vpop.f32.mrb[0].mxu0
      %v2181 = vadd.f32 0.0, %v2180
      %v2182 = vpop.f32.mrb[0].mxu0
      %v2183 = vpop.f32.mrb[0].mxu0
      %v2184 = vadd.f32 0.0, %v2183
      %v2185 = vpop.f32.mrb[0].mxu0
      %2186 = vmatprep.mubr.bf16.mxu0 0
      %2187 = vmatmul.mubr.bf16.gmra.mrb[0].mxu0 %v2040
      %v2188 = vpop.f32.mrb[0].mxu0
      %v2189 = vadd.f32 0.0, %v2188
      %v2190 = vpop.f32.mrb[0].mxu0
      %v2191 = vpop.f32.mrb[0].mxu0
      %v2192 = vadd.f32 0.0, %v2191
      %v2193 = vpop.f32.mrb[0].mxu0
      %2194 = vmatprep.mubr.bf16.mxu0 0
      %2195 = vmatmul.mubr.bf16.gmra.mrb[0].mxu0 %v2042
      %v2196 = vpop.f32.mrb[0].mxu0
      %v2197 = vadd.f32 0.0, %v2196
      %v2198 = vpop.f32.mrb[0].mxu0
      %v2199 = vpop.f32.mrb[0].mxu0
      %v2200 = vadd.f32 0.0, %v2199
      %v2201 = vpop.f32.mrb[0].mxu0
      %2202 = vmatprep.mubr.bf16.mxu0 0
      %2203 = vmatmul.mubr.bf16.gmra.mrb[0].mxu0 %v2044
      %v2204 = vpop.f32.mrb[0].mxu0
      %v2205 = vadd.f32 0.0, %v2204
      %v2206 = vpop.f32.mrb[0].mxu0
      %v2207 = vpop.f32.mrb[0].mxu0
      %v2208 = vadd.f32 0.0, %v2207
      %v2209 = vpop.f32.mrb[0].mxu0
      %2210 = vdwg.mxu0
      %v2213 = vunpack.c.l.b16 %v1813
      %v2214 = vunpack.c.l.b16 %v1814
      %v2215 = vpack.c.b16 %v2214, %v2213
      %v2216 = vsel %vm2013, %v1782, 0
      %v2218 = vsel %vm2013, %v1784, 0
      %v2220 = vsel %vm2013, %v1786, 0
      %v2222 = vsel %vm2013, %v1788, 0
      %v2224 = vsel %vm2013, %v1790, 0
      %v2226 = vsel %vm2013, %v1792, 0
      %v2228 = vsel %vm2013, %v1794, 0
      %v2230 = vsel %vm2013, %v1796, 0
      %v2232 = vsel %vm2013, %v1798, 0
      %v2234 = vsel %vm2013, %v1800, 0
      %v2236 = vsel %vm2013, %v1802, 0
      %v2238 = vsel %vm2013, %v1804, 0
      %v2240 = vsel %vm2013, %v1806, 0
      %v2242 = vsel %vm2013, %v1808, 0
      %v2244 = vsel %vm2013, %v1810, 0
      %v2246 = vsel %vm2013, %v1812, 0
      %v2249 = vsel %vm2046, %v2215, 0
      %2251 = vmatprep.subr.bf16.mxu0 0
      %2252 = vmatpush1.bf16.msra.mxu0 %v2249
      %2253 = vmatprep.subr.bf16.mxu0 0
      %2254 = vmatpush1.bf16.msra.mxu0 0
      %2255 = vmatprep.subr.bf16.mxu0 0
      %2256 = vmatpush1.bf16.msra.mxu0 0
      %2257 = vmatprep.subr.bf16.mxu0 0
      %2258 = vmatpush1.bf16.msra.mxu0 0
      %2259 = vmatprep.subr.bf16.mxu0 0
      %2260 = vmatpush1.bf16.msra.mxu0 0
      %2261 = vmatprep.subr.bf16.mxu0 0
      %2262 = vmatpush1.bf16.msra.mxu0 0
      %2263 = vmatprep.subr.bf16.mxu0 0
      %2264 = vmatpush1.bf16.msra.mxu0 0
      %2265 = vmatprep.subr.bf16.mxu0 0
      %2266 = vmatpush1.bf16.msra.mxu0 0
      %2267 = vmatprep.subr.bf16.mxu0 0
      %2268 = vmatpush1.bf16.msra.mxu0 0
      %2269 = vmatprep.subr.bf16.mxu0 0
      %2270 = vmatpush1.bf16.msra.mxu0 0
      %2271 = vmatprep.subr.bf16.mxu0 0
      %2272 = vmatpush1.bf16.msra.mxu0 0
      %2273 = vmatprep.subr.bf16.mxu0 0
      %2274 = vmatpush1.bf16.msra.mxu0 0
      %2275 = vmatprep.subr.bf16.mxu0 0
      %2276 = vmatpush1.bf16.msra.mxu0 0
      %2277 = vmatprep.subr.bf16.mxu0 0
      %2278 = vmatpush1.bf16.msra.mxu0 0
      %2279 = vmatprep.subr.bf16.mxu0 0
      %2280 = vmatpush1.bf16.msra.mxu0 0
      %2281 = vmatprep.subr.bf16.mxu0 0
      %2282 = vmatpush1.bf16.msra.mxu0 0
      %2283 = vmatprep.mubr.bf16.mxu0 0
      %2284 = vmatmul.mubr.bf16.gmra.mrb[0].mxu0 %v2216
      %v2285 = vpop.f32.mrb[0].mxu0
      %v2286 = vadd.f32 %v2085, %v2285
      %v2287 = vpop.f32.mrb[0].mxu0
      %v2288 = vpop.f32.mrb[0].mxu0
      %v2289 = vadd.f32 %v2088, %v2288
      %v2290 = vpop.f32.mrb[0].mxu0
      %2291 = vmatprep.mubr.bf16.mxu0 0
      %2292 = vmatmul.mubr.bf16.gmra.mrb[0].mxu0 %v2218
      %v2293 = vpop.f32.mrb[0].mxu0
      %v2294 = vadd.f32 %v2093, %v2293
      %v2295 = vpop.f32.mrb[0].mxu0
      %v2296 = vpop.f32.mrb[0].mxu0
      %v2297 = vadd.f32 %v2096, %v2296
      %v2298 = vpop.f32.mrb[0].mxu0
      %2299 = vmatprep.mubr.bf16.mxu0 0
      %2300 = vmatmul.mubr.bf16.gmra.mrb[0].mxu0 %v2220
      %v2301 = vpop.f32.mrb[0].mxu0
      %v2302 = vadd.f32 %v2101, %v2301
      %v2303 = vpop.f32.mrb[0].mxu0
      %v2304 = vpop.f32.mrb[0].mxu0
      %v2305 = vadd.f32 %v2104, %v2304
      %v2306 = vpop.f32.mrb[0].mxu0
      %2307 = vmatprep.mubr.bf16.mxu0 0
      %2308 = vmatmul.mubr.bf16.gmra.mrb[0].mxu0 %v2222
      %v2309 = vpop.f32.mrb[0].mxu0
      %v2310 = vadd.f32 %v2109, %v2309
      %v2311 = vpop.f32.mrb[0].mxu0
      %v2312 = vpop.f32.mrb[0].mxu0
      %v2313 = vadd.f32 %v2112, %v2312
      %v2314 = vpop.f32.mrb[0].mxu0
      %2315 = vmatprep.mubr.bf16.mxu0 0
      %2316 = vmatmul.mubr.bf16.gmra.mrb[0].mxu0 %v2224
      %v2317 = vpop.f32.mrb[0].mxu0
      %v2318 = vadd.f32 %v2117, %v2317
      %v2319 = vpop.f32.mrb[0].mxu0
      %v2320 = vpop.f32.mrb[0].mxu0
      %v2321 = vadd.f32 %v2120, %v2320
      %v2322 = vpop.f32.mrb[0].mxu0
      %2323 = vmatprep.mubr.bf16.mxu0 0
      %2324 = vmatmul.mubr.bf16.gmra.mrb[0].mxu0 %v2226
      %v2325 = vpop.f32.mrb[0].mxu0
      %v2326 = vadd.f32 %v2125, %v2325
      %v2327 = vpop.f32.mrb[0].mxu0
      %v2328 = vpop.f32.mrb[0].mxu0
      %v2329 = vadd.f32 %v2128, %v2328
      %v2330 = vpop.f32.mrb[0].mxu0
      %2331 = vmatprep.mubr.bf16.mxu0 0
      %2332 = vmatmul.mubr.bf16.gmra.mrb[0].mxu0 %v2228
      %v2333 = vpop.f32.mrb[0].mxu0
      %v2334 = vadd.f32 %v2133, %v2333
      %v2335 = vpop.f32.mrb[0].mxu0
      %v2336 = vpop.f32.mrb[0].mxu0
      %v2337 = vadd.f32 %v2136, %v2336
      %v2338 = vpop.f32.mrb[0].mxu0
      %2339 = vmatprep.mubr.bf16.mxu0 0
      %2340 = vmatmul.mubr.bf16.gmra.mrb[0].mxu0 %v2230
      %v2341 = vpop.f32.mrb[0].mxu0
      %v2342 = vadd.f32 %v2141, %v2341
      %v2343 = vpop.f32.mrb[0].mxu0
      %v2344 = vpop.f32.mrb[0].mxu0
      %v2345 = vadd.f32 %v2144, %v2344
      %v2346 = vpop.f32.mrb[0].mxu0
      %2347 = vmatprep.mubr.bf16.mxu0 0
      %2348 = vmatmul.mubr.bf16.gmra.mrb[0].mxu0 %v2232
      %v2349 = vpop.f32.mrb[0].mxu0
      %v2350 = vadd.f32 %v2149, %v2349
      %v2351 = vpop.f32.mrb[0].mxu0
      %v2352 = vpop.f32.mrb[0].mxu0
      %v2353 = vadd.f32 %v2152, %v2352
      %v2354 = vpop.f32.mrb[0].mxu0
      %2355 = vmatprep.mubr.bf16.mxu0 0
      %2356 = vmatmul.mubr.bf16.gmra.mrb[0].mxu0 %v2234
      %v2357 = vpop.f32.mrb[0].mxu0
      %v2358 = vadd.f32 %v2157, %v2357
      %v2359 = vpop.f32.mrb[0].mxu0
      %v2360 = vpop.f32.mrb[0].mxu0
      %v2361 = vadd.f32 %v2160, %v2360
      %v2362 = vpop.f32.mrb[0].mxu0
      %2363 = vmatprep.mubr.bf16.mxu0 0
      %2364 = vmatmul.mubr.bf16.gmra.mrb[0].mxu0 %v2236
      %v2365 = vpop.f32.mrb[0].mxu0
      %v2366 = vadd.f32 %v2165, %v2365
      %v2367 = vpop.f32.mrb[0].mxu0
      %v2368 = vpop.f32.mrb[0].mxu0
      %v2369 = vadd.f32 %v2168, %v2368
      %v2370 = vpop.f32.mrb[0].mxu0
      %2371 = vmatprep.mubr.bf16.mxu0 0
      %2372 = vmatmul.mubr.bf16.gmra.mrb[0].mxu0 %v2238
      %v2373 = vpop.f32.mrb[0].mxu0
      %v2374 = vadd.f32 %v2173, %v2373
      %v2375 = vpop.f32.mrb[0].mxu0
      %v2376 = vpop.f32.mrb[0].mxu0
      %v2377 = vadd.f32 %v2176, %v2376
      %v2378 = vpop.f32.mrb[0].mxu0
      %2379 = vmatprep.mubr.bf16.mxu0 0
      %2380 = vmatmul.mubr.bf16.gmra.mrb[0].mxu0 %v2240
      %v2381 = vpop.f32.mrb[0].mxu0
      %v2382 = vadd.f32 %v2181, %v2381
      %v2383 = vpop.f32.mrb[0].mxu0
      %v2384 = vpop.f32.mrb[0].mxu0
      %v2385 = vadd.f32 %v2184, %v2384
      %v2386 = vpop.f32.mrb[0].mxu0
      %2387 = vmatprep.mubr.bf16.mxu0 0
      %2388 = vmatmul.mubr.bf16.gmra.mrb[0].mxu0 %v2242
      %v2389 = vpop.f32.mrb[0].mxu0
      %v2390 = vadd.f32 %v2189, %v2389
      %v2391 = vpop.f32.mrb[0].mxu0
      %v2392 = vpop.f32.mrb[0].mxu0
      %v2393 = vadd.f32 %v2192, %v2392
      %v2394 = vpop.f32.mrb[0].mxu0
      %2395 = vmatprep.mubr.bf16.mxu0 0
      %2396 = vmatmul.mubr.bf16.gmra.mrb[0].mxu0 %v2244
      %v2397 = vpop.f32.mrb[0].mxu0
      %v2398 = vadd.f32 %v2197, %v2397
      %v2399 = vpop.f32.mrb[0].mxu0
      %v2400 = vpop.f32.mrb[0].mxu0
      %v2401 = vadd.f32 %v2200, %v2400
      %v2402 = vpop.f32.mrb[0].mxu0
      %2403 = vmatprep.mubr.bf16.mxu0 0
      %2404 = vmatmul.mubr.bf16.gmra.mrb[0].mxu0 %v2246
      %v2405 = vpop.f32.mrb[0].mxu0
      %v2406 = vadd.f32 %v2205, %v2405
      %v2407 = vpop.f32.mrb[0].mxu0
      %v2408 = vpop.f32.mrb[0].mxu0
      %v2409 = vadd.f32 %v2208, %v2408
      %v2410 = vpop.f32.mrb[0].mxu0
      %2411 = vdwg.mxu0
      %v2412 = vmul.bf16 %v595, %v1258
      %v2413 = vmul.bf16 %v603, %v1259
      %v2414 = vmul.bf16 %v611, %v1260
      %v2415 = vmul.bf16 %v619, %v1261
      %v2416 = vmul.bf16 %v627, %v1262
      %v2417 = vmul.bf16 %v635, %v1263
      %v2418 = vmul.bf16 %v643, %v1264
      %v2419 = vmul.bf16 %v651, %v1265
      %v2420 = vmul.bf16 %v659, %v1266
      %v2421 = vmul.bf16 %v667, %v1267
      %v2422 = vmul.bf16 %v675, %v1268
      %v2423 = vmul.bf16 %v683, %v1269
      %v2424 = vmul.bf16 %v691, %v1270
      %v2425 = vmul.bf16 %v699, %v1271
      %v2426 = vmul.bf16 %v707, %v1272
      %v2427 = vmul.bf16 %v743, %v1273
      %v2428 = vmul.bf16 %v595, %v1418
      %v2429 = vmul.bf16 %v603, %v1420
      %v2430 = vmul.bf16 %v611, %v1422
      %v2431 = vmul.bf16 %v619, %v1424
      %v2432 = vmul.bf16 %v627, %v1426
      %v2433 = vmul.bf16 %v635, %v1428
      %v2434 = vmul.bf16 %v643, %v1430
      %v2435 = vmul.bf16 %v651, %v1432
      %v2436 = vmul.bf16 %v659, %v1434
      %v2437 = vmul.bf16 %v667, %v1436
      %v2438 = vmul.bf16 %v675, %v1438
      %v2439 = vmul.bf16 %v683, %v1440
      %v2440 = vmul.bf16 %v691, %v1442
      %v2441 = vmul.bf16 %v699, %v1444
      %v2442 = vmul.bf16 %v707, %v1446
      %v2443 = vmul.bf16 %v743, %v1448
      %v2444 = vmul.bf16 %v744, %v1447
      %v2445 = vshrl.u32 %v743, 16
      %v2447 = vor.u32 %v2445, %v1854
      %v2449 = vshll.u32 %v744, 16
      %v2451 = vrot.slane %v2449, 1
      %v2452 = vsel %vm1483, %v2447, %v2451
      %2453 = vrot.lane.b32.xlu0 %v2452, 4
      %v2454 = vpop.permute.xlu0 %2453
      %v2472 = vrot.slane %v2428, 1
      %v2473 = vrot.slane %v2429, 1
      %v2474 = vsel %vm1665, %v2472, %v2473
      %v2475 = vrot.slane %v2430, 1
      %v2476 = vsel %vm1665, %v2473, %v2475
      %v2477 = vrot.slane %v2431, 1
      %v2478 = vsel %vm1665, %v2475, %v2477
      %v2479 = vrot.slane %v2432, 1
      %v2480 = vsel %vm1665, %v2477, %v2479
      %v2481 = vrot.slane %v2433, 1
      %v2482 = vsel %vm1665, %v2479, %v2481
      %v2483 = vrot.slane %v2434, 1
      %v2484 = vsel %vm1665, %v2481, %v2483
      %v2485 = vrot.slane %v2435, 1
      %v2486 = vsel %vm1665, %v2483, %v2485
      %v2487 = vrot.slane %v2436, 1
      %v2488 = vsel %vm1665, %v2485, %v2487
      %v2489 = vrot.slane %v2437, 1
      %v2490 = vsel %vm1665, %v2487, %v2489
      %v2491 = vrot.slane %v2438, 1
      %v2492 = vsel %vm1665, %v2489, %v2491
      %v2493 = vrot.slane %v2439, 1
      %v2494 = vsel %vm1665, %v2491, %v2493
      %v2495 = vrot.slane %v2440, 1
      %v2496 = vsel %vm1665, %v2493, %v2495
      %v2497 = vrot.slane %v2441, 1
      %v2498 = vsel %vm1665, %v2495, %v2497
      %v2499 = vrot.slane %v2442, 1
      %v2500 = vsel %vm1665, %v2497, %v2499
      %v2501 = vrot.slane %v2443, 1
      %v2502 = vsel %vm1665, %v2499, %v2501
      %v2503 = vrot.slane %v2444, 1
      %v2504 = vsel %vm1665, %v2501, %v2503
      %2505 = vrot.lane.b32.xlu0 %v2474, 8
      %v2506 = vpop.permute.xlu0 %2505
      %2507 = vrot.lane.b32.xlu0 %v2476, 8
      %v2508 = vpop.permute.xlu0 %2507
      %2509 = vrot.lane.b32.xlu0 %v2478, 8
      %v2510 = vpop.permute.xlu0 %2509
      %2511 = vrot.lane.b32.xlu0 %v2480, 8
      %v2512 = vpop.permute.xlu0 %2511
      %2513 = vrot.lane.b32.xlu0 %v2482, 8
      %v2514 = vpop.permute.xlu0 %2513
      %2515 = vrot.lane.b32.xlu0 %v2484, 8
      %v2516 = vpop.permute.xlu0 %2515
      %2517 = vrot.lane.b32.xlu0 %v2486, 8
      %v2518 = vpop.permute.xlu0 %2517
      %2519 = vrot.lane.b32.xlu0 %v2488, 8
      %v2520 = vpop.permute.xlu0 %2519
      %2521 = vrot.lane.b32.xlu0 %v2490, 8
      %v2522 = vpop.permute.xlu0 %2521
      %2523 = vrot.lane.b32.xlu0 %v2492, 8
      %v2524 = vpop.permute.xlu0 %2523
      %2525 = vrot.lane.b32.xlu0 %v2494, 8
      %v2526 = vpop.permute.xlu0 %2525
      %2527 = vrot.lane.b32.xlu0 %v2496, 8
      %v2528 = vpop.permute.xlu0 %2527
      %2529 = vrot.lane.b32.xlu0 %v2498, 8
      %v2530 = vpop.permute.xlu0 %2529
      %2531 = vrot.lane.b32.xlu0 %v2500, 8
      %v2532 = vpop.permute.xlu0 %2531
      %2533 = vrot.lane.b32.xlu0 %v2502, 8
      %v2534 = vpop.permute.xlu0 %2533
      %2535 = vrot.lane.b32.xlu0 %v2504, 8
      %v2536 = vpop.permute.xlu0 %2535
      %v2538 = vsel %vm1731, %v2412, %v1621
      %v2540 = vsel %vm1731, %v2413, %v1623
      %v2542 = vsel %vm1731, %v2414, %v1625
      %v2544 = vsel %vm1731, %v2415, %v1627
      %v2546 = vsel %vm1731, %v2416, %v1629
      %v2548 = vsel %vm1731, %v2417, %v1631
      %v2550 = vsel %vm1731, %v2418, %v1633
      %v2552 = vsel %vm1731, %v2419, %v1635
      %v2554 = vsel %vm1731, %v2420, %v1637
      %v2556 = vsel %vm1731, %v2421, %v1639
      %v2558 = vsel %vm1731, %v2422, %v1641
      %v2560 = vsel %vm1731, %v2423, %v1643
      %v2562 = vsel %vm1731, %v2424, %v1645
      %v2564 = vsel %vm1731, %v2425, %v1647
      %v2566 = vsel %vm1731, %v2426, %v1857
      %v2569 = vsel %vm1731, %v2427, %v2454
      %v2571 = vsel %vm1780, %v2538, %v2506
      %v2573 = vsel %vm1780, %v2540, %v2508
      %v2575 = vsel %vm1780, %v2542, %v2510
      %v2577 = vsel %vm1780, %v2544, %v2512
      %v2579 = vsel %vm1780, %v2546, %v2514
      %v2581 = vsel %vm1780, %v2548, %v2516
      %v2583 = vsel %vm1780, %v2550, %v2518
      %v2585 = vsel %vm1780, %v2552, %v2520
      %v2587 = vsel %vm1780, %v2554, %v2522
      %v2589 = vsel %vm1780, %v2556, %v2524
      %v2591 = vsel %vm1780, %v2558, %v2526
      %v2593 = vsel %vm1780, %v2560, %v2528
      %v2595 = vsel %vm1780, %v2562, %v2530
      %v2597 = vsel %vm1780, %v2564, %v2532
      %v2599 = vsel %vm1780, %v2566, %v2534
      %v2601 = vsel %vm1780, %v2569, %v2536
      %s2602 = scalar_lea.vmem %s3, 16
      %v2603 = vld [vmem:[%s2602] sm:$0xf]
      %v2604 = vld [vmem:[%s2602 + $0x4] sm:$0x3]
      %v2607 = vunpack.c.l.b16 %v2603
      %v2608 = vunpack.c.l.b16 %v2604
      %v2609 = vpack.c.b16 %v2608, %v2607
      %v2610 = vsel %vm2013, %v2571, 0
      %v2612 = vsel %vm2013, %v2573, 0
      %v2614 = vsel %vm2013, %v2575, 0
      %v2616 = vsel %vm2013, %v2577, 0
      %v2618 = vsel %vm2013, %v2579, 0
      %v2620 = vsel %vm2013, %v2581, 0
      %v2622 = vsel %vm2013, %v2583, 0
      %v2624 = vsel %vm2013, %v2585, 0
      %v2626 = vsel %vm2013, %v2587, 0
      %v2628 = vsel %vm2013, %v2589, 0
      %v2630 = vsel %vm2013, %v2591, 0
      %v2632 = vsel %vm2013, %v2593, 0
      %v2634 = vsel %vm2013, %v2595, 0
      %v2636 = vsel %vm2013, %v2597, 0
      %v2638 = vsel %vm2013, %v2599, 0
      %v2640 = vsel %vm2013, %v2601, 0
      %v2643 = vsel %vm2046, %v2609, 0
      %2645 = vmatprep.subr.bf16.mxu0 0
      %2646 = vmatpush1.bf16.msra.mxu0 %v2643
      %2647 = vmatprep.subr.bf16.mxu0 0
      %2648 = vmatpush1.bf16.msra.mxu0 0
      %2649 = vmatprep.subr.bf16.mxu0 0
      %2650 = vmatpush1.bf16.msra.mxu0 0
      %2651 = vmatprep.subr.bf16.mxu0 0
      %2652 = vmatpush1.bf16.msra.mxu0 0
      %2653 = vmatprep.subr.bf16.mxu0 0
      %2654 = vmatpush1.bf16.msra.mxu0 0
      %2655 = vmatprep.subr.bf16.mxu0 0
      %2656 = vmatpush1.bf16.msra.mxu0 0
      %2657 = vmatprep.subr.bf16.mxu0 0
      %2658 = vmatpush1.bf16.msra.mxu0 0
      %2659 = vmatprep.subr.bf16.mxu0 0
      %2660 = vmatpush1.bf16.msra.mxu0 0
      %2661 = vmatprep.subr.bf16.mxu0 0
      %2662 = vmatpush1.bf16.msra.mxu0 0
      %2663 = vmatprep.subr.bf16.mxu0 0
      %2664 = vmatpush1.bf16.msra.mxu0 0
      %2665 = vmatprep.subr.bf16.mxu0 0
      %2666 = vmatpush1.bf16.msra.mxu0 0
      %2667 = vmatprep.subr.bf16.mxu0 0
      %2668 = vmatpush1.bf16.msra.mxu0 0
      %2669 = vmatprep.subr.bf16.mxu0 0
      %2670 = vmatpush1.bf16.msra.mxu0 0
      %2671 = vmatprep.subr.bf16.mxu0 0
      %2672 = vmatpush1.bf16.msra.mxu0 0
      %2673 = vmatprep.subr.bf16.mxu0 0
      %2674 = vmatpush1.bf16.msra.mxu0 0
      %2675 = vmatprep.subr.bf16.mxu0 0
      %2676 = vmatpush1.bf16.msra.mxu0 0
      %2677 = vmatprep.mubr.bf16.mxu0 0
      %2678 = vmatmul.mubr.bf16.gmra.mrb[0].mxu0 %v2610
      %v2679 = vpop.f32.mrb[0].mxu0
      %v2680 = vadd.f32 0.0, %v2679
      %v2681 = vpop.f32.mrb[0].mxu0
      %v2682 = vpop.f32.mrb[0].mxu0
      %v2683 = vadd.f32 0.0, %v2682
      %v2684 = vpop.f32.mrb[0].mxu0
      %2685 = vmatprep.mubr.bf16.mxu0 0
      %2686 = vmatmul.mubr.bf16.gmra.mrb[0].mxu0 %v2612
      %v2687 = vpop.f32.mrb[0].mxu0
      %v2688 = vadd.f32 0.0, %v2687
      %v2689 = vpop.f32.mrb[0].mxu0
      %v2690 = vpop.f32.mrb[0].mxu0
      %v2691 = vadd.f32 0.0, %v2690
      %v2692 = vpop.f32.mrb[0].mxu0
      %2693 = vmatprep.mubr.bf16.mxu0 0
      %2694 = vmatmul.mubr.bf16.gmra.mrb[0].mxu0 %v2614
      %v2695 = vpop.f32.mrb[0].mxu0
      %v2696 = vadd.f32 0.0, %v2695
      %v2697 = vpop.f32.mrb[0].mxu0
      %v2698 = vpop.f32.mrb[0].mxu0
      %v2699 = vadd.f32 0.0, %v2698
      %v2700 = vpop.f32.mrb[0].mxu0
      %2701 = vmatprep.mubr.bf16.mxu0 0
      %2702 = vmatmul.mubr.bf16.gmra.mrb[0].mxu0 %v2616
      %v2703 = vpop.f32.mrb[0].mxu0
      %v2704 = vadd.f32 0.0, %v2703
      %v2705 = vpop.f32.mrb[0].mxu0
      %v2706 = vpop.f32.mrb[0].mxu0
      %v2707 = vadd.f32 0.0, %v2706
      %v2708 = vpop.f32.mrb[0].mxu0
      %2709 = vmatprep.mubr.bf16.mxu0 0
      %2710 = vmatmul.mubr.bf16.gmra.mrb[0].mxu0 %v2618
      %v2711 = vpop.f32.mrb[0].mxu0
      %v2712 = vadd.f32 0.0, %v2711
      %v2713 = vpop.f32.mrb[0].mxu0
      %v2714 = vpop.f32.mrb[0].mxu0
      %v2715 = vadd.f32 0.0, %v2714
      %v2716 = vpop.f32.mrb[0].mxu0
      %2717 = vmatprep.mubr.bf16.mxu0 0
      %2718 = vmatmul.mubr.bf16.gmra.mrb[0].mxu0 %v2620
      %v2719 = vpop.f32.mrb[0].mxu0
      %v2720 = vadd.f32 0.0, %v2719
      %v2721 = vpop.f32.mrb[0].mxu0
      %v2722 = vpop.f32.mrb[0].mxu0
      %v2723 = vadd.f32 0.0, %v2722
      %v2724 = vpop.f32.mrb[0].mxu0
      %2725 = vmatprep.mubr.bf16.mxu0 0
      %2726 = vmatmul.mubr.bf16.gmra.mrb[0].mxu0 %v2622
      %v2727 = vpop.f32.mrb[0].mxu0
      %v2728 = vadd.f32 0.0, %v2727
      %v2729 = vpop.f32.mrb[0].mxu0
      %v2730 = vpop.f32.mrb[0].mxu0
      %v2731 = vadd.f32 0.0, %v2730
      %v2732 = vpop.f32.mrb[0].mxu0
      %2733 = vmatprep.mubr.bf16.mxu0 0
      %2734 = vmatmul.mubr.bf16.gmra.mrb[0].mxu0 %v2624
      %v2735 = vpop.f32.mrb[0].mxu0
      %v2736 = vadd.f32 0.0, %v2735
      %v2737 = vpop.f32.mrb[0].mxu0
      %v2738 = vpop.f32.mrb[0].mxu0
      %v2739 = vadd.f32 0.0, %v2738
      %v2740 = vpop.f32.mrb[0].mxu0
      %2741 = vmatprep.mubr.bf16.mxu0 0
      %2742 = vmatmul.mubr.bf16.gmra.mrb[0].mxu0 %v2626
      %v2743 = vpop.f32.mrb[0].mxu0
      %v2744 = vadd.f32 0.0, %v2743
      %v2745 = vpop.f32.mrb[0].mxu0
      %v2746 = vpop.f32.mrb[0].mxu0
      %v2747 = vadd.f32 0.0, %v2746
      %v2748 = vpop.f32.mrb[0].mxu0
      %2749 = vmatprep.mubr.bf16.mxu0 0
      %2750 = vmatmul.mubr.bf16.gmra.mrb[0].mxu0 %v2628
      %v2751 = vpop.f32.mrb[0].mxu0
      %v2752 = vadd.f32 0.0, %v2751
      %v2753 = vpop.f32.mrb[0].mxu0
      %v2754 = vpop.f32.mrb[0].mxu0
      %v2755 = vadd.f32 0.0, %v2754
      %v2756 = vpop.f32.mrb[0].mxu0
      %2757 = vmatprep.mubr.bf16.mxu0 0
      %2758 = vmatmul.mubr.bf16.gmra.mrb[0].mxu0 %v2630
      %v2759 = vpop.f32.mrb[0].mxu0
      %v2760 = vadd.f32 0.0, %v2759
      %v2761 = vpop.f32.mrb[0].mxu0
      %v2762 = vpop.f32.mrb[0].mxu0
      %v2763 = vadd.f32 0.0, %v2762
      %v2764 = vpop.f32.mrb[0].mxu0
      %2765 = vmatprep.mubr.bf16.mxu0 0
      %2766 = vmatmul.mubr.bf16.gmra.mrb[0].mxu0 %v2632
      %v2767 = vpop.f32.mrb[0].mxu0
      %v2768 = vadd.f32 0.0, %v2767
      %v2769 = vpop.f32.mrb[0].mxu0
      %v2770 = vpop.f32.mrb[0].mxu0
      %v2771 = vadd.f32 0.0, %v2770
      %v2772 = vpop.f32.mrb[0].mxu0
      %2773 = vmatprep.mubr.bf16.mxu0 0
      %2774 = vmatmul.mubr.bf16.gmra.mrb[0].mxu0 %v2634
      %v2775 = vpop.f32.mrb[0].mxu0
      %v2776 = vadd.f32 0.0, %v2775
      %v2777 = vpop.f32.mrb[0].mxu0
      %v2778 = vpop.f32.mrb[0].mxu0
      %v2779 = vadd.f32 0.0, %v2778
      %v2780 = vpop.f32.mrb[0].mxu0
      %2781 = vmatprep.mubr.bf16.mxu0 0
      %2782 = vmatmul.mubr.bf16.gmra.mrb[0].mxu0 %v2636
      %v2783 = vpop.f32.mrb[0].mxu0
      %v2784 = vadd.f32 0.0, %v2783
      %v2785 = vpop.f32.mrb[0].mxu0
      %v2786 = vpop.f32.mrb[0].mxu0
      %v2787 = vadd.f32 0.0, %v2786
      %v2788 = vpop.f32.mrb[0].mxu0
      %2789 = vmatprep.mubr.bf16.mxu0 0
      %2790 = vmatmul.mubr.bf16.gmra.mrb[0].mxu0 %v2638
      %v2791 = vpop.f32.mrb[0].mxu0
      %v2792 = vadd.f32 0.0, %v2791
      %v2793 = vpop.f32.mrb[0].mxu0
      %v2794 = vpop.f32.mrb[0].mxu0
      %v2795 = vadd.f32 0.0, %v2794
      %v2796 = vpop.f32.mrb[0].mxu0
      %2797 = vmatprep.mubr.bf16.mxu0 0
      %2798 = vmatmul.mubr.bf16.gmra.mrb[0].mxu0 %v2640
      %v2799 = vpop.f32.mrb[0].mxu0
      %v2800 = vadd.f32 0.0, %v2799
      %v2801 = vpop.f32.mrb[0].mxu0
      %v2802 = vpop.f32.mrb[0].mxu0
      %v2803 = vadd.f32 0.0, %v2802
      %v2804 = vpop.f32.mrb[0].mxu0
      %2805 = vdwg.mxu0
      %v2806 = vadd.f32 %v2286, %v2680
      %v2807 = vadd.f32 %v2289, %v2683
      %v2808 = vadd.f32 %v2294, %v2688
      %v2809 = vadd.f32 %v2297, %v2691
      %v2810 = vadd.f32 %v2302, %v2696
      %v2811 = vadd.f32 %v2305, %v2699
      %v2812 = vadd.f32 %v2310, %v2704
      %v2813 = vadd.f32 %v2313, %v2707
      %v2814 = vadd.f32 %v2318, %v2712
      %v2815 = vadd.f32 %v2321, %v2715
      %v2816 = vadd.f32 %v2326, %v2720
      %v2817 = vadd.f32 %v2329, %v2723
      %v2818 = vadd.f32 %v2334, %v2728
      %v2819 = vadd.f32 %v2337, %v2731
      %v2820 = vadd.f32 %v2342, %v2736
      %v2821 = vadd.f32 %v2345, %v2739
      %v2822 = vadd.f32 %v2350, %v2744
      %v2823 = vadd.f32 %v2353, %v2747
      %v2824 = vadd.f32 %v2358, %v2752
      %v2825 = vadd.f32 %v2361, %v2755
      %v2826 = vadd.f32 %v2366, %v2760
      %v2827 = vadd.f32 %v2369, %v2763
      %v2828 = vadd.f32 %v2374, %v2768
      %v2829 = vadd.f32 %v2377, %v2771
      %v2830 = vadd.f32 %v2382, %v2776
      %v2831 = vadd.f32 %v2385, %v2779
      %v2832 = vadd.f32 %v2390, %v2784
      %v2833 = vadd.f32 %v2393, %v2787
      %v2834 = vadd.f32 %v2398, %v2792
      %v2835 = vadd.f32 %v2401, %v2795
      %v2836 = vadd.f32 %v2406, %v2800
      %v2837 = vadd.f32 %v2409, %v2803
      %v2838 = vpack.c.bf16 %v2807, %v2806
      %v2839 = vpack.c.bf16 %v2809, %v2808
      %v2840 = vpack.c.bf16 %v2811, %v2810
      %v2841 = vpack.c.bf16 %v2813, %v2812
      %v2842 = vpack.c.bf16 %v2815, %v2814
      %v2843 = vpack.c.bf16 %v2817, %v2816
      %v2844 = vpack.c.bf16 %v2819, %v2818
      %v2845 = vpack.c.bf16 %v2821, %v2820
      %v2846 = vpack.c.bf16 %v2823, %v2822
      %v2847 = vpack.c.bf16 %v2825, %v2824
      %v2848 = vpack.c.bf16 %v2827, %v2826
      %v2849 = vpack.c.bf16 %v2829, %v2828
      %v2850 = vpack.c.bf16 %v2831, %v2830
      %v2851 = vpack.c.bf16 %v2833, %v2832
      %v2852 = vpack.c.bf16 %v2835, %v2834
      %v2853 = vpack.c.bf16 %v2837, %v2836
      %v2870 = vunpack.c.l.b16 %v2838
      %v2871 = vunpack.c.h.b16 %v2838
      %v2872 = vunpack.c.l.b16 %v2839
      %v2873 = vunpack.c.h.b16 %v2839
      %v2874 = vunpack.c.l.b16 %v2840
      %v2875 = vunpack.c.h.b16 %v2840
      %v2876 = vunpack.c.l.b16 %v2841
      %v2877 = vunpack.c.h.b16 %v2841
      %v2878 = vunpack.c.l.b16 %v2842
      %v2879 = vunpack.c.h.b16 %v2842
      %v2880 = vunpack.c.l.b16 %v2843
      %v2881 = vunpack.c.h.b16 %v2843
      %v2882 = vunpack.c.l.b16 %v2844
      %v2883 = vunpack.c.h.b16 %v2844
      %v2884 = vunpack.c.l.b16 %v2845
      %v2885 = vunpack.c.h.b16 %v2845
      %v2886 = vunpack.c.l.b16 %v2846
      %v2887 = vunpack.c.h.b16 %v2846
      %v2888 = vunpack.c.l.b16 %v2847
      %v2889 = vunpack.c.h.b16 %v2847
      %v2890 = vunpack.c.l.b16 %v2848
      %v2891 = vunpack.c.h.b16 %v2848
      %v2892 = vunpack.c.l.b16 %v2849
      %v2893 = vunpack.c.h.b16 %v2849
      %v2894 = vunpack.c.l.b16 %v2850
      %v2895 = vunpack.c.h.b16 %v2850
      %v2896 = vunpack.c.l.b16 %v2851
      %v2897 = vunpack.c.h.b16 %v2851
      %v2898 = vunpack.c.l.b16 %v2852
      %v2899 = vunpack.c.h.b16 %v2852
      %v2900 = vunpack.c.l.b16 %v2853
      %v2901 = vunpack.c.h.b16 %v2853
      %v2902 = vpack.c.b16 %v2870, %v2870
      %v2903 = vpack.c.b16 %v2871, %v2871
      %v2904 = vpack.c.b16 %v2872, %v2872
      %v2905 = vpack.c.b16 %v2873, %v2873
      %v2906 = vpack.c.b16 %v2874, %v2874
      %v2907 = vpack.c.b16 %v2875, %v2875
      %v2908 = vpack.c.b16 %v2876, %v2876
      %v2909 = vpack.c.b16 %v2877, %v2877
      %v2910 = vpack.c.b16 %v2878, %v2878
      %v2911 = vpack.c.b16 %v2879, %v2879
      %v2912 = vpack.c.b16 %v2880, %v2880
      %v2913 = vpack.c.b16 %v2881, %v2881
      %v2914 = vpack.c.b16 %v2882, %v2882
      %v2915 = vpack.c.b16 %v2883, %v2883
      %v2916 = vpack.c.b16 %v2884, %v2884
      %v2917 = vpack.c.b16 %v2885, %v2885
      %v2918 = vpack.c.b16 %v2886, %v2886
      %v2919 = vpack.c.b16 %v2887, %v2887
      %v2920 = vpack.c.b16 %v2888, %v2888
      %v2921 = vpack.c.b16 %v2889, %v2889
      %v2922 = vpack.c.b16 %v2890, %v2890
      %v2923 = vpack.c.b16 %v2891, %v2891
      %v2924 = vpack.c.b16 %v2892, %v2892
      %v2925 = vpack.c.b16 %v2893, %v2893
      %v2926 = vpack.c.b16 %v2894, %v2894
      %v2927 = vpack.c.b16 %v2895, %v2895
      %v2928 = vpack.c.b16 %v2896, %v2896
      %v2929 = vpack.c.b16 %v2897, %v2897
      %v2930 = vpack.c.b16 %v2898, %v2898
      %v2931 = vpack.c.b16 %v2899, %v2899
      %v2932 = vpack.c.b16 %v2900, %v2900
      %v2933 = vpack.c.b16 %v2901, %v2901
      %vm2966 = vcmask 60416
      %2967 = vst.msk [vmem:[%s402] sm:$0xf] %vm2966, %v2902
      %2968 = vst.msk [vmem:[%s402 + $0x4] sm:$0xf] %vm2966, %v2903
      %2969 = vst.msk [vmem:[%s402 + $0x8] sm:$0xf] %vm2966, %v2904
      %2970 = vst.msk [vmem:[%s402 + $0xc] sm:$0xf] %vm2966, %v2905
      %2971 = vst.msk [vmem:[%s402 + $0x10] sm:$0xf] %vm2966, %v2906
      %2972 = vst.msk [vmem:[%s402 + $0x14] sm:$0xf] %vm2966, %v2907
      %2973 = vst.msk [vmem:[%s402 + $0x18] sm:$0xf] %vm2966, %v2908
      %2974 = vst.msk [vmem:[%s402 + $0x1c] sm:$0xf] %vm2966, %v2909
      %2975 = vst.msk [vmem:[%s402 + $0x20] sm:$0xf] %vm2966, %v2910
      %2976 = vst.msk [vmem:[%s402 + $0x24] sm:$0xf] %vm2966, %v2911
      %2977 = vst.msk [vmem:[%s402 + $0x28] sm:$0xf] %vm2966, %v2912
      %2978 = vst.msk [vmem:[%s402 + $0x2c] sm:$0xf] %vm2966, %v2913
      %2979 = vst.msk [vmem:[%s402 + $0x30] sm:$0xf] %vm2966, %v2914
      %2980 = vst.msk [vmem:[%s402 + $0x34] sm:$0xf] %vm2966, %v2915
      %2981 = vst.msk [vmem:[%s402 + $0x38] sm:$0xf] %vm2966, %v2916
      %2982 = vst.msk [vmem:[%s402 + $0x3c] sm:$0xf] %vm2966, %v2917
      %2983 = vst.msk [vmem:[%s402 + $0x40] sm:$0xf] %vm2966, %v2918
      %2984 = vst.msk [vmem:[%s402 + $0x44] sm:$0xf] %vm2966, %v2919
      %2985 = vst.msk [vmem:[%s402 + $0x48] sm:$0xf] %vm2966, %v2920
      %2986 = vst.msk [vmem:[%s402 + $0x4c] sm:$0xf] %vm2966, %v2921
      %2987 = vst.msk [vmem:[%s402 + $0x50] sm:$0xf] %vm2966, %v2922
      %2988 = vst.msk [vmem:[%s402 + $0x54] sm:$0xf] %vm2966, %v2923
      %2989 = vst.msk [vmem:[%s402 + $0x58] sm:$0xf] %vm2966, %v2924
      %2990 = vst.msk [vmem:[%s402 + $0x5c] sm:$0xf] %vm2966, %v2925
      %2991 = vst.msk [vmem:[%s402 + $0x60] sm:$0xf] %vm2966, %v2926
      %2992 = vst.msk [vmem:[%s402 + $0x64] sm:$0xf] %vm2966, %v2927
      %2993 = vst.msk [vmem:[%s402 + $0x68] sm:$0xf] %vm2966, %v2928
      %2994 = vst.msk [vmem:[%s402 + $0x6c] sm:$0xf] %vm2966, %v2929
      %2995 = vst.msk [vmem:[%s402 + $0x70] sm:$0xf] %vm2966, %v2930
      %2996 = vst.msk [vmem:[%s402 + $0x74] sm:$0xf] %vm2966, %v2931
      %2997 = vst.msk [vmem:[%s402 + $0x78] sm:$0xf] %vm2966, %v2932
      %2998 = vst.msk [vmem:[%s402 + $0x7c] sm:$0xf] %vm2966, %v2933
      %v2999 = vsel %vm1780, %v2806, 0.0
      %v3000 = vsel %vm1780, %v2807, 0.0
      %v3001 = vadd.f32 %v2999, %v3000
      %v3002 = vsel %vm1780, %v2808, 0.0
      %v3003 = vadd.f32 %v3001, %v3002
      %v3004 = vsel %vm1780, %v2809, 0.0
      %v3005 = vadd.f32 %v3003, %v3004
      %v3006 = vsel %vm1780, %v2810, 0.0
      %v3007 = vadd.f32 %v3005, %v3006
      %v3008 = vsel %vm1780, %v2811, 0.0
      %v3009 = vadd.f32 %v3007, %v3008
      %v3010 = vsel %vm1780, %v2812, 0.0
      %v3011 = vadd.f32 %v3009, %v3010
      %v3012 = vsel %vm1780, %v2813, 0.0
      %v3013 = vadd.f32 %v3011, %v3012
      %v3014 = vsel %vm1780, %v2814, 0.0
      %v3015 = vadd.f32 %v3013, %v3014
      %v3016 = vsel %vm1780, %v2815, 0.0
      %v3017 = vadd.f32 %v3015, %v3016
      %v3018 = vsel %vm1780, %v2816, 0.0
      %v3019 = vadd.f32 %v3017, %v3018
      %v3020 = vsel %vm1780, %v2817, 0.0
      %v3021 = vadd.f32 %v3019, %v3020
      %v3022 = vsel %vm1780, %v2818, 0.0
      %v3023 = vadd.f32 %v3021, %v3022
      %v3024 = vsel %vm1780, %v2819, 0.0
      %v3025 = vadd.f32 %v3023, %v3024
      %v3026 = vsel %vm1780, %v2820, 0.0
      %v3027 = vadd.f32 %v3025, %v3026
      %v3028 = vsel %vm1780, %v2821, 0.0
      %v3029 = vadd.f32 %v3027, %v3028
      %v3030 = vsel %vm1780, %v2822, 0.0
      %v3031 = vadd.f32 %v3029, %v3030
      %v3032 = vsel %vm1780, %v2823, 0.0
      %v3033 = vadd.f32 %v3031, %v3032
      %v3034 = vsel %vm1780, %v2824, 0.0
      %v3035 = vadd.f32 %v3033, %v3034
      %v3036 = vsel %vm1780, %v2825, 0.0
      %v3037 = vadd.f32 %v3035, %v3036
      %v3038 = vsel %vm1780, %v2826, 0.0
      %v3039 = vadd.f32 %v3037, %v3038
      %v3040 = vsel %vm1780, %v2827, 0.0
      %v3041 = vadd.f32 %v3039, %v3040
      %v3042 = vsel %vm1780, %v2828, 0.0
      %v3043 = vadd.f32 %v3041, %v3042
      %v3044 = vsel %vm1780, %v2829, 0.0
      %v3045 = vadd.f32 %v3043, %v3044
      %v3046 = vsel %vm1780, %v2830, 0.0
      %v3047 = vadd.f32 %v3045, %v3046
      %v3048 = vsel %vm1780, %v2831, 0.0
      %v3049 = vadd.f32 %v3047, %v3048
      %v3050 = vsel %vm1780, %v2832, 0.0
      %v3051 = vadd.f32 %v3049, %v3050
      %v3052 = vsel %vm1780, %v2833, 0.0
      %v3053 = vadd.f32 %v3051, %v3052
      %v3054 = vsel %vm1780, %v2834, 0.0
      %v3055 = vadd.f32 %v3053, %v3054
      %v3056 = vsel %vm1780, %v2835, 0.0
      %v3057 = vadd.f32 %v3055, %v3056
      %v3058 = vsel %vm1780, %v2836, 0.0
      %v3059 = vadd.f32 %v3057, %v3058
      %v3060 = vsel %vm1780, %v2837, 0.0
      %v3061 = vadd.f32 %v3059, %v3060
      %v3062 = vrot.slane %v3061, 4
      %v3063 = vadd.f32 %v3061, %v3062
      %v3064 = vrot.slane %v3063, 2
      %v3065 = vadd.f32 %v3063, %v3064
      %v3066 = vrot.slane %v3065, 1
      %v3067 = vadd.f32 %v3065, %v3066
      %vm3068 = vcmask 57344
      %3069 = vst.msk [vmem:[%s410] sm:$0x1] %vm3068, %v3067
      %v3070 = vmul.f32 %v2806, %v2806
      %v3071 = vmul.f32 %v2807, %v2807
      %v3072 = vmul.f32 %v2808, %v2808
      %v3073 = vmul.f32 %v2809, %v2809
      %v3074 = vmul.f32 %v2810, %v2810
      %v3075 = vmul.f32 %v2811, %v2811
      %v3076 = vmul.f32 %v2812, %v2812
      %v3077 = vmul.f32 %v2813, %v2813
      %v3078 = vmul.f32 %v2814, %v2814
      %v3079 = vmul.f32 %v2815, %v2815
      %v3080 = vmul.f32 %v2816, %v2816
      %v3081 = vmul.f32 %v2817, %v2817
      %v3082 = vmul.f32 %v2818, %v2818
      %v3083 = vmul.f32 %v2819, %v2819
      %v3084 = vmul.f32 %v2820, %v2820
      %v3085 = vmul.f32 %v2821, %v2821
      %v3086 = vmul.f32 %v2822, %v2822
      %v3087 = vmul.f32 %v2823, %v2823
      %v3088 = vmul.f32 %v2824, %v2824
      %v3089 = vmul.f32 %v2825, %v2825
      %v3090 = vmul.f32 %v2826, %v2826
      %v3091 = vmul.f32 %v2827, %v2827
      %v3092 = vmul.f32 %v2828, %v2828
      %v3093 = vmul.f32 %v2829, %v2829
      %v3094 = vmul.f32 %v2830, %v2830
      %v3095 = vmul.f32 %v2831, %v2831
      %v3096 = vmul.f32 %v2832, %v2832
      %v3097 = vmul.f32 %v2833, %v2833
      %v3098 = vmul.f32 %v2834, %v2834
      %v3099 = vmul.f32 %v2835, %v2835
      %v3100 = vmul.f32 %v2836, %v2836
      %v3101 = vmul.f32 %v2837, %v2837
      %v3102 = vsel %vm1780, %v3070, 0.0
      %v3103 = vsel %vm1780, %v3071, 0.0
      %v3104 = vadd.f32 %v3102, %v3103
      %v3105 = vsel %vm1780, %v3072, 0.0
      %v3106 = vadd.f32 %v3104, %v3105
      %v3107 = vsel %vm1780, %v3073, 0.0
      %v3108 = vadd.f32 %v3106, %v3107
      %v3109 = vsel %vm1780, %v3074, 0.0
      %v3110 = vadd.f32 %v3108, %v3109
      %v3111 = vsel %vm1780, %v3075, 0.0
      %v3112 = vadd.f32 %v3110, %v3111
      %v3113 = vsel %vm1780, %v3076, 0.0
      %v3114 = vadd.f32 %v3112, %v3113
      %v3115 = vsel %vm1780, %v3077, 0.0
      %v3116 = vadd.f32 %v3114, %v3115
      %v3117 = vsel %vm1780, %v3078, 0.0
      %v3118 = vadd.f32 %v3116, %v3117
      %v3119 = vsel %vm1780, %v3079, 0.0
      %v3120 = vadd.f32 %v3118, %v3119
      %v3121 = vsel %vm1780, %v3080, 0.0
      %v3122 = vadd.f32 %v3120, %v3121
      %v3123 = vsel %vm1780, %v3081, 0.0
      %v3124 = vadd.f32 %v3122, %v3123
      %v3125 = vsel %vm1780, %v3082, 0.0
      %v3126 = vadd.f32 %v3124, %v3125
      %v3127 = vsel %vm1780, %v3083, 0.0
      %v3128 = vadd.f32 %v3126, %v3127
      %v3129 = vsel %vm1780, %v3084, 0.0
      %v3130 = vadd.f32 %v3128, %v3129
      %v3131 = vsel %vm1780, %v3085, 0.0
      %v3132 = vadd.f32 %v3130, %v3131
      %v3133 = vsel %vm1780, %v3086, 0.0
      %v3134 = vadd.f32 %v3132, %v3133
      %v3135 = vsel %vm1780, %v3087, 0.0
      %v3136 = vadd.f32 %v3134, %v3135
      %v3137 = vsel %vm1780, %v3088, 0.0
      %v3138 = vadd.f32 %v3136, %v3137
      %v3139 = vsel %vm1780, %v3089, 0.0
      %v3140 = vadd.f32 %v3138, %v3139
      %v3141 = vsel %vm1780, %v3090, 0.0
      %v3142 = vadd.f32 %v3140, %v3141
      %v3143 = vsel %vm1780, %v3091, 0.0
      %v3144 = vadd.f32 %v3142, %v3143
      %v3145 = vsel %vm1780, %v3092, 0.0
      %v3146 = vadd.f32 %v3144, %v3145
      %v3147 = vsel %vm1780, %v3093, 0.0
      %v3148 = vadd.f32 %v3146, %v3147
      %v3149 = vsel %vm1780, %v3094, 0.0
      %v3150 = vadd.f32 %v3148, %v3149
      %v3151 = vsel %vm1780, %v3095, 0.0
      %v3152 = vadd.f32 %v3150, %v3151
      %v3153 = vsel %vm1780, %v3096, 0.0
      %v3154 = vadd.f32 %v3152, %v3153
      %v3155 = vsel %vm1780, %v3097, 0.0
      %v3156 = vadd.f32 %v3154, %v3155
      %v3157 = vsel %vm1780, %v3098, 0.0
      %v3158 = vadd.f32 %v3156, %v3157
      %v3159 = vsel %vm1780, %v3099, 0.0
      %v3160 = vadd.f32 %v3158, %v3159
      %v3161 = vsel %vm1780, %v3100, 0.0
      %v3162 = vadd.f32 %v3160, %v3161
      %v3163 = vsel %vm1780, %v3101, 0.0
      %v3164 = vadd.f32 %v3162, %v3163
      %v3165 = vrot.slane %v3164, 4
      %v3166 = vadd.f32 %v3164, %v3165
      %v3167 = vrot.slane %v3166, 2
      %v3168 = vadd.f32 %v3166, %v3167
      %v3169 = vrot.slane %v3168, 1
      %v3170 = vadd.f32 %v3168, %v3169
      %3171 = vst.msk [vmem:[%s410 + $0x1] sm:$0x1] %vm3068, %v3170
      %s3172 = smul.u32 32, %s22
      %p3173 = scmp.lt.s32.totalorder %s21, 1
      %s3174 = scalar_select %p3173, %s21, 1
      %p3175 = scmp.lt.s32.totalorder %s3172, 31
      %s3176 = scalar_select %p3175, %s3172, 31
      %s3177 = smul.addr %s3174, 32
      %s3178 = sadd.s32 %s3176, %s3177
      %s3179 = smul.addr %s3178, 4
      %s3180 = scalar_lea.vmem %s4, %s3179
      %p3181 = scmp.lt.s32.totalorder %s21, 1
      %s3182 = scalar_select %p3181, %s21, 1
      %p3183 = scmp.lt.s32.totalorder %s22, 0
      %s3184 = scalar_select %p3183, %s22, 0
      %s3185 = sadd.s32 %s3184, %s3182
      %s3186 = smul.addr %s3185, 2
      %s3187 = scalar_lea.vmem %s5, %s3186
      // Predicated region
      $region37: #{double_conv.3} parent=35 // pred_check
        %p3188 = pneg %p170
      $region38: #{double_conv.3} parent=35 // pred_check_branch
        %3190 = sbr.rel (%p3188) target = $region40
      $region39: #{double_conv.3} parent=35 // pred_region
        %s3191 = smul.u32 32, %s22
      $region40: #{double_conv.3} parent=35 // pred_fallthru
        _
      // Predicated region
      $region41: #{double_conv.3} parent=35 // pred_check
        %p3192 = pneg %p198
      $region42: #{double_conv.3} parent=35 // pred_check_branch
        %3194 = sbr.rel (%p3192) target = $region44
      $region43: #{double_conv.3} parent=35 // pred_region
        _
      $region44: #{double_conv.3} parent=35 // pred_fallthru
        _
    $region36: #{double_conv.3} parent=5 // pred_fallthru
      _
    %p3195 = scmp.le.s32.totalorder 2, %s12
    // Predicated region
    $region45: #{double_conv.3} parent=5 // pred_check
      %p3196 = pneg %p3195
    $region46: #{double_conv.3} parent=5 // pred_check_branch
      %3198 = sbr.rel (%p3196) target = $region48
    $region47: #{double_conv.3} parent=5 // pred_region
      %s3199 = ssub.s32 %s12, 2
      // Predicated region
      $region49: #{double_conv.3} parent=47 // pred_check
        %p3200 = pneg %p176
      $region50: #{double_conv.3} parent=47 // pred_check_branch
        %3202 = sbr.rel (%p3200) target = $region52
      $region51: #{double_conv.3} parent=47 // pred_region
        %s3203 = smul.u32 32, %s24
        %p3204 = scmp.lt.s32.totalorder %s23, 1
        %s3205 = scalar_select %p3204, %s23, 1
        %p3206 = scmp.lt.s32.totalorder %s3203, 31
        %s3207 = scalar_select %p3206, %s3203, 31
        %s3208 = smul.addr %s3205, 32
        %s3209 = sadd.s32 %s3207, %s3208
        %s3210 = smul.addr %s3209, 4
        %s3211 = scalar_lea.vmem %s4, %s3210
      $region52: #{double_conv.3} parent=47 // pred_fallthru
        _
      // Predicated region
      $region53: #{double_conv.3} parent=47 // pred_check
        %p3212 = pneg %p204
      $region54: #{double_conv.3} parent=47 // pred_check_branch
        %3214 = sbr.rel (%p3212) target = $region56
      $region55: #{double_conv.3} parent=47 // pred_region
        %p3215 = scmp.lt.s32.totalorder %s23, 1
        %s3216 = scalar_select %p3215, %s23, 1
        %p3217 = scmp.lt.s32.totalorder %s24, 0
        %s3218 = scalar_select %p3217, %s24, 0
        %s3219 = sadd.s32 %s3218, %s3216
        %s3220 = smul.addr %s3219, 2
        %s3221 = scalar_lea.vmem %s5, %s3220
      $region56: #{double_conv.3} parent=47 // pred_fallthru
        _
    $region48: #{double_conv.3} parent=5 // pred_fallthru
      _
  $region6: #{double_conv.3} parent=0 // loop_footer
    %s16 = sadd.s32 1, %s12
  $region7: #{double_conv.3} parent=0 // loop_footer_branch
    %11 = sbr.rel target = $region3
  $region8: #{double_conv.3} parent=0 // loop_exit
    _

</llo_original>
